<compile_context>
chip_gen: v7x
topology: tpu7x:2x2x1
jax: 0.10.0
libtpu: 0.0.40
codegen_flags: <defaults>
</compile_context>

<pallas_src>
import jax
import jax.numpy as jnp
from jax.experimental import pallas as pl
from jax.experimental.pallas import tpu as pltpu

EPS = 1e-5


def expansion_kernel(x_ref, w_ref, b_ref, g_ref, bt_ref, o_ref, pad_ref, pat_ref):
    # x_ref:   (N, Hp, 2, Wp, 2*Cin)  pool pairs: dim 2 = H parity,
    #                                 lane halves (0:Cin / Cin:2Cin) = W parity
    # w_ref:   (K, Cout)              K = KH*KW*Cin, tap order (kh, kw, cin)
    # b/g/bt:  (Cout, 1)              conv bias, BN gamma, BN beta
    # o_ref:   (Cout, ROWS)           ROWS = N*Hp*Wp  (lane-dense output)
    # pad_ref: (N, Hp+2P, Wp+2P, Cin) VMEM scratch, halo-zeroed
    # pat_ref: (ROWS, K)              VMEM scratch, im2col slab
    N, Hp, _, Wp, two_cin = x_ref.shape
    Cin = two_cin // 2
    K, Cout = w_ref.shape
    HPAD, WPAD = pad_ref.shape[1], pad_ref.shape[2]
    KH = HPAD - Hp + 1
    KW = WPAD - Wp + 1
    PAD = (KH - 1) // 2
    ROWS = N * Hp * Wp

    # ---- 2x2 max pool (pure VPU: leading-dim index + lane-half max) ----
    h = jnp.maximum(x_ref[:, :, 0], x_ref[:, :, 1])          # (N, Hp, Wp, 2*Cin)
    pooled = jnp.maximum(h[..., :Cin], h[..., Cin:])          # (N, Hp, Wp, Cin)

    # ---- padded buffer: zero only the halo strips, then write the interior ----
    zrow = jnp.zeros((N, PAD, WPAD, Cin), jnp.float32)
    zcol = jnp.zeros((N, HPAD, PAD, Cin), jnp.float32)
    pad_ref[:, :PAD, :, :] = zrow
    pad_ref[:, Hp + PAD:, :, :] = zrow
    pad_ref[:, :, :PAD, :] = zcol
    pad_ref[:, :, Wp + PAD:, :] = zcol
    pad_ref[:, PAD:PAD + Hp, PAD:PAD + Wp, :] = pooled

    # ---- im2col slab (ROWS, K), then ONE MXU matmul at default precision ----
    for kh in range(KH):
        for kw in range(KW):
            k0 = (kh * KW + kw) * Cin
            patch = pad_ref[:, kh:kh + Hp, kw:kw + Wp, :]     # (N, Hp, Wp, Cin)
            pat_ref[:, k0:k0 + Cin] = patch.reshape(ROWS, Cin)

    acc = jnp.dot(pat_ref[...], w_ref[...],
                  preferred_element_type=jnp.float32)         # (ROWS, Cout)

    # ---- lane-dense epilogue on (Cout, ROWS): bias + BN(batch stats) + ReLU ----
    z = jnp.transpose(acc) + b_ref[...]                       # (Cout, ROWS)
    inv_n = 1.0 / ROWS
    mean = jnp.sum(z, axis=1, keepdims=True) * inv_n          # (Cout, 1)
    var = jnp.sum(z * z, axis=1, keepdims=True) * inv_n - mean * mean
    scale = g_ref[...] * jax.lax.rsqrt(var + EPS)             # (Cout, 1)
    shift = bt_ref[...] - mean * scale
    o_ref[...] = jnp.maximum(z * scale + shift, 0.0)


def expansion_forward(x_nchw, w_oihw, b, gamma, beta):
    N, Cin, H, W = x_nchw.shape
    Cout, _, KH, KW = w_oihw.shape
    Hp, Wp = H // 2, W // 2
    PAD = (KH - 1) // 2
    K = KH * KW * Cin
    ROWS = N * Hp * Wp

    # One HBM relayout (NCHW -> NHWC); the 5-D pool view is a free reshape.
    x_nhwc = jnp.transpose(x_nchw, (0, 2, 3, 1))
    x_pool = x_nhwc.reshape(N, Hp, 2, Wp, 2 * Cin)

    # Conv weight as a single (K, Cout) matrix, tap order (kh, kw, cin).
    w2 = jnp.transpose(w_oihw, (2, 3, 1, 0)).reshape(K, Cout)
    b2 = b.reshape(Cout, 1)
    g2 = gamma.reshape(Cout, 1)
    bt2 = beta.reshape(Cout, 1)

    cost = pl.CostEstimate(
        flops=2 * ROWS * K * Cout + 8 * ROWS * Cout + 4 * N * H * W * Cin,
        transcendentals=Cout,
        bytes_accessed=4 * (N * H * W * Cin + K * Cout + 3 * Cout + Cout * ROWS),
    )

    out_cr = pl.pallas_call(
        expansion_kernel,
        out_shape=jax.ShapeDtypeStruct((Cout, ROWS), jnp.float32),
        grid_spec=pltpu.PrefetchScalarGridSpec(
            num_scalar_prefetch=0,
            grid=(1,),
            in_specs=[
                pl.BlockSpec((N, Hp, 2, Wp, 2 * Cin), lambda i: (0,) * 5),
                pl.BlockSpec((K, Cout), lambda i: (0, 0)),
                pl.BlockSpec((Cout, 1), lambda i: (0, 0)),
                pl.BlockSpec((Cout, 1), lambda i: (0, 0)),
                pl.BlockSpec((Cout, 1), lambda i: (0, 0)),
            ],
            out_specs=pl.BlockSpec((Cout, ROWS), lambda i: (0, 0)),
            scratch_shapes=[
                pltpu.VMEM((N, Hp + 2 * PAD, Wp + 2 * PAD, Cin), jnp.float32),
                pltpu.VMEM((ROWS, K), jnp.float32),
            ],
        ),
        compiler_params=pltpu.CompilerParams(
            dimension_semantics=("arbitrary",)),
        cost_estimate=cost,
    )(x_pool, w2, b2, g2, bt2)                                 # (Cout, ROWS)

    # Lane-dense kernel output -> NCHW.
    return out_cr.reshape(Cout, N, Hp, Wp).transpose(1, 0, 2, 3)


def reference_forward(x_nchw, w_oihw, b, gamma, beta):
    """Pure-JAX reference mirroring the PyTorch module (training-mode BN)."""
    xp = jax.lax.reduce_window(x_nchw, -jnp.inf, jax.lax.max,
                               (1, 1, 2, 2), (1, 1, 2, 2), "VALID")
    y = jax.lax.conv_general_dilated(
        xp, w_oihw, window_strides=(1, 1), padding=((2, 2), (2, 2)),
        dimension_numbers=("NCHW", "OIHW", "NCHW"),
        precision=jax.lax.Precision.HIGHEST)
    y = y + b[None, :, None, None]
    mean = jnp.mean(y, axis=(0, 2, 3), keepdims=True)
    var = jnp.mean((y - mean) ** 2, axis=(0, 2, 3), keepdims=True)
    yn = (y - mean) * jax.lax.rsqrt(var + EPS)
    out = gamma[None, :, None, None] * yn + beta[None, :, None, None]
    return jnp.maximum(out, 0.0)


if __name__ == "__main__":
    key = jax.random.PRNGKey(0)
    k_x, k_w, k_b, k_g, k_beta = jax.random.split(key, 5)

    N, Cin, H, W = 2, 4, 16, 16
    Cout, KH = 8, 5

    x = jax.random.normal(k_x, (N, Cin, H, W), jnp.float32)
    w = jax.random.normal(k_w, (Cout, Cin, KH, KH), jnp.float32) * 0.1
    b = jax.random.normal(k_b, (Cout,), jnp.float32) * 0.1
    gamma = 1.0 + 0.1 * jax.random.normal(k_g, (Cout,), jnp.float32)
    beta = 0.1 * jax.random.normal(k_beta, (Cout,), jnp.float32)

    out = expansion_forward(x, w, b, gamma, beta)
    out = jax.block_until_ready(out)

    ref = reference_forward(x, w, b, gamma, beta)
    assert out.shape == (N, Cout, H // 2, W // 2), out.shape
    # Kernel uses default MXU precision (vs. HIGHEST f32 reference) per the
    # perf review -> slightly relaxed tolerance.
    assert jnp.allclose(out, ref, atol=3e-2, rtol=3e-2), float(
        jnp.max(jnp.abs(out - ref)))

    print("KERNEL_OK")
</pallas_src>

<mosaic_0001>
module attributes {stable_mosaic.version = 11 : i64} {
  func.func @expansion_kernel(%arg0: i32, %arg1: memref<2x8x2x8x8xf32, #tpu.memory_space<vmem>>, %arg2: memref<100x8xf32, #tpu.memory_space<vmem>>, %arg3: memref<8x1xf32, #tpu.memory_space<vmem>>, %arg4: memref<8x1xf32, #tpu.memory_space<vmem>>, %arg5: memref<8x1xf32, #tpu.memory_space<vmem>>, %arg6: memref<8x128xf32, #tpu.memory_space<vmem>>, %arg7: memref<2x12x12x4xf32, #tpu.memory_space<vmem>>, %arg8: memref<128x100xf32, #tpu.memory_space<vmem>>) attributes {dimension_semantics = [#tpu.dimension_semantics<arbitrary>], iteration_bounds = array<i64: 1>, scalar_prefetch = 0 : i64, scratch_operands = 2 : i64, tpu.core_type = #tpu.core_type<tc>, window_params = [{pipeline_mode = #tpu.pipeline_mode<synchronous>, transform_indices = @transform_0, window_bounds = array<i64: 2, 8, 2, 8, 8>}, {pipeline_mode = #tpu.pipeline_mode<synchronous>, transform_indices = @transform_1, window_bounds = array<i64: 100, 8>}, {pipeline_mode = #tpu.pipeline_mode<synchronous>, transform_indices = @transform_2, window_bounds = array<i64: 8, 1>}, {pipeline_mode = #tpu.pipeline_mode<synchronous>, transform_indices = @transform_3, window_bounds = array<i64: 8, 1>}, {pipeline_mode = #tpu.pipeline_mode<synchronous>, transform_indices = @transform_4, window_bounds = array<i64: 8, 1>}, {pipeline_mode = #tpu.pipeline_mode<synchronous>, transform_indices = @transform_5, window_bounds = array<i64: 8, 128>}]} {
    %c0 = arith.constant 0 : index
    %c0_0 = arith.constant 0 : index
    %c0_1 = arith.constant 0 : index
    %c0_2 = arith.constant 0 : index
    %c0_3 = arith.constant 0 : index
    %0 = vector.load %arg1[%c0, %c0_0, %c0_1, %c0_2, %c0_3] : memref<2x8x2x8x8xf32, #tpu.memory_space<vmem>>, vector<2x8x1x8x8xf32>
    %1 = vector.shape_cast %0 : vector<2x8x1x8x8xf32> to vector<2x8x8x8xf32>
    %c0_4 = arith.constant 0 : index
    %c0_5 = arith.constant 0 : index
    %c1 = arith.constant 1 : index
    %c0_6 = arith.constant 0 : index
    %c0_7 = arith.constant 0 : index
    %2 = vector.load %arg1[%c0_4, %c0_5, %c1, %c0_6, %c0_7] : memref<2x8x2x8x8xf32, #tpu.memory_space<vmem>>, vector<2x8x1x8x8xf32>
    %3 = vector.shape_cast %2 : vector<2x8x1x8x8xf32> to vector<2x8x8x8xf32>
    %4 = arith.maximumf %1, %3 : vector<2x8x8x8xf32>
    %5 = vector.extract_strided_slice %4 {offsets = [0, 0, 0, 0], sizes = [2, 8, 8, 4], strides = [1, 1, 1, 1]} : vector<2x8x8x8xf32> to vector<2x8x8x4xf32>
    %6 = vector.extract_strided_slice %4 {offsets = [0, 0, 0, 4], sizes = [2, 8, 8, 4], strides = [1, 1, 1, 1]} : vector<2x8x8x8xf32> to vector<2x8x8x4xf32>
    %7 = arith.maximumf %5, %6 : vector<2x8x8x4xf32>
    %cst = arith.constant 0.000000e+00 : f32
    %8 = vector.broadcast %cst : f32 to vector<2x2x12x4xf32>
    %cst_8 = arith.constant 0.000000e+00 : f32
    %9 = vector.broadcast %cst_8 : f32 to vector<2x12x2x4xf32>
    %c0_9 = arith.constant 0 : index
    %c0_10 = arith.constant 0 : index
    %c0_11 = arith.constant 0 : index
    %c0_12 = arith.constant 0 : index
    %10 = vector.load %arg7[%c0_9, %c0_10, %c0_11, %c0_12] : memref<2x12x12x4xf32, #tpu.memory_space<vmem>>, vector<2x2x12x4xf32>
    tpu.vector_store %arg7[%c0_9, %c0_10, %c0_11, %c0_12], %8 {strides = array<i32>} : memref<2x12x12x4xf32, #tpu.memory_space<vmem>>, vector<2x2x12x4xf32>,
    %c0_13 = arith.constant 0 : index
    %c10 = arith.constant 10 : index
    %c0_14 = arith.constant 0 : index
    %c0_15 = arith.constant 0 : index
    %11 = vector.load %arg7[%c0_13, %c10, %c0_14, %c0_15] : memref<2x12x12x4xf32, #tpu.memory_space<vmem>>, vector<2x2x12x4xf32>
    tpu.vector_store %arg7[%c0_13, %c10, %c0_14, %c0_15], %8 {strides = array<i32>} : memref<2x12x12x4xf32, #tpu.memory_space<vmem>>, vector<2x2x12x4xf32>,
    %c0_16 = arith.constant 0 : index
    %c0_17 = arith.constant 0 : index
    %c0_18 = arith.constant 0 : index
    %c0_19 = arith.constant 0 : index
    %12 = vector.load %arg7[%c0_16, %c0_17, %c0_18, %c0_19] : memref<2x12x12x4xf32, #tpu.memory_space<vmem>>, vector<2x12x2x4xf32>
    tpu.vector_store %arg7[%c0_16, %c0_17, %c0_18, %c0_19], %9 {strides = array<i32>} : memref<2x12x12x4xf32, #tpu.memory_space<vmem>>, vector<2x12x2x4xf32>,
    %c0_20 = arith.constant 0 : index
    %c0_21 = arith.constant 0 : index
    %c10_22 = arith.constant 10 : index
    %c0_23 = arith.constant 0 : index
    %13 = vector.load %arg7[%c0_20, %c0_21, %c10_22, %c0_23] : memref<2x12x12x4xf32, #tpu.memory_space<vmem>>, vector<2x12x2x4xf32>
    tpu.vector_store %arg7[%c0_20, %c0_21, %c10_22, %c0_23], %9 {strides = array<i32>} : memref<2x12x12x4xf32, #tpu.memory_space<vmem>>, vector<2x12x2x4xf32>,
    %c0_24 = arith.constant 0 : index
    %c2 = arith.constant 2 : index
    %c2_25 = arith.constant 2 : index
    %c0_26 = arith.constant 0 : index
    %14 = vector.load %arg7[%c0_24, %c2, %c2_25, %c0_26] : memref<2x12x12x4xf32, #tpu.memory_space<vmem>>, vector<2x8x8x4xf32>
    tpu.vector_store %arg7[%c0_24, %c2, %c2_25, %c0_26], %7 {strides = array<i32>} : memref<2x12x12x4xf32, #tpu.memory_space<vmem>>, vector<2x8x8x4xf32>,
    %c0_27 = arith.constant 0 : index
    %c0_28 = arith.constant 0 : index
    %c0_29 = arith.constant 0 : index
    %c0_30 = arith.constant 0 : index
    %15 = vector.load %arg7[%c0_27, %c0_28, %c0_29, %c0_30] : memref<2x12x12x4xf32, #tpu.memory_space<vmem>>, vector<2x8x8x4xf32>
    %16 = vector.shape_cast %15 : vector<2x8x8x4xf32> to vector<128x4xf32>
    %c0_31 = arith.constant 0 : index
    %c0_32 = arith.constant 0 : index
    %17 = vector.load %arg8[%c0_31, %c0_32] : memref<128x100xf32, #tpu.memory_space<vmem>>, vector<128x4xf32>
    tpu.vector_store %arg8[%c0_31, %c0_32], %16 {strides = array<i32>} : memref<128x100xf32, #tpu.memory_space<vmem>>, vector<128x4xf32>,
    %c0_33 = arith.constant 0 : index
    %c0_34 = arith.constant 0 : index
    %c1_35 = arith.constant 1 : index
    %c0_36 = arith.constant 0 : index
    %18 = vector.load %arg7[%c0_33, %c0_34, %c1_35, %c0_36] : memref<2x12x12x4xf32, #tpu.memory_space<vmem>>, vector<2x8x8x4xf32>
    %19 = vector.shape_cast %18 : vector<2x8x8x4xf32> to vector<128x4xf32>
    %c0_37 = arith.constant 0 : index
    %c4 = arith.constant 4 : index
    %20 = vector.load %arg8[%c0_37, %c4] : memref<128x100xf32, #tpu.memory_space<vmem>>, vector<128x4xf32>
    tpu.vector_store %arg8[%c0_37, %c4], %19 {strides = array<i32>} : memref<128x100xf32, #tpu.memory_space<vmem>>, vector<128x4xf32>,
    %c0_38 = arith.constant 0 : index
    %c0_39 = arith.constant 0 : index
    %c2_40 = arith.constant 2 : index
    %c0_41 = arith.constant 0 : index
    %21 = vector.load %arg7[%c0_38, %c0_39, %c2_40, %c0_41] : memref<2x12x12x4xf32, #tpu.memory_space<vmem>>, vector<2x8x8x4xf32>
    %22 = vector.shape_cast %21 : vector<2x8x8x4xf32> to vector<128x4xf32>
    %c0_42 = arith.constant 0 : index
    %c8 = arith.constant 8 : index
    %23 = vector.load %arg8[%c0_42, %c8] : memref<128x100xf32, #tpu.memory_space<vmem>>, vector<128x4xf32>
    tpu.vector_store %arg8[%c0_42, %c8], %22 {strides = array<i32>} : memref<128x100xf32, #tpu.memory_space<vmem>>, vector<128x4xf32>,
    %c0_43 = arith.constant 0 : index
    %c0_44 = arith.constant 0 : index
    %c3 = arith.constant 3 : index
    %c0_45 = arith.constant 0 : index
    %24 = vector.load %arg7[%c0_43, %c0_44, %c3, %c0_45] : memref<2x12x12x4xf32, #tpu.memory_space<vmem>>, vector<2x8x8x4xf32>
    %25 = vector.shape_cast %24 : vector<2x8x8x4xf32> to vector<128x4xf32>
    %c0_46 = arith.constant 0 : index
    %c12 = arith.constant 12 : index
    %26 = vector.load %arg8[%c0_46, %c12] : memref<128x100xf32, #tpu.memory_space<vmem>>, vector<128x4xf32>
    tpu.vector_store %arg8[%c0_46, %c12], %25 {strides = array<i32>} : memref<128x100xf32, #tpu.memory_space<vmem>>, vector<128x4xf32>,
    %c0_47 = arith.constant 0 : index
    %c0_48 = arith.constant 0 : index
    %c4_49 = arith.constant 4 : index
    %c0_50 = arith.constant 0 : index
    %27 = vector.load %arg7[%c0_47, %c0_48, %c4_49, %c0_50] : memref<2x12x12x4xf32, #tpu.memory_space<vmem>>, vector<2x8x8x4xf32>
    %28 = vector.shape_cast %27 : vector<2x8x8x4xf32> to vector<128x4xf32>
    %c0_51 = arith.constant 0 : index
    %c16 = arith.constant 16 : index
    %29 = vector.load %arg8[%c0_51, %c16] : memref<128x100xf32, #tpu.memory_space<vmem>>, vector<128x4xf32>
    tpu.vector_store %arg8[%c0_51, %c16], %28 {strides = array<i32>} : memref<128x100xf32, #tpu.memory_space<vmem>>, vector<128x4xf32>,
    %c0_52 = arith.constant 0 : index
    %c1_53 = arith.constant 1 : index
    %c0_54 = arith.constant 0 : index
    %c0_55 = arith.constant 0 : index
    %30 = vector.load %arg7[%c0_52, %c1_53, %c0_54, %c0_55] : memref<2x12x12x4xf32, #tpu.memory_space<vmem>>, vector<2x8x8x4xf32>
    %31 = vector.shape_cast %30 : vector<2x8x8x4xf32> to vector<128x4xf32>
    %c0_56 = arith.constant 0 : index
    %c20 = arith.constant 20 : index
    %32 = vector.load %arg8[%c0_56, %c20] : memref<128x100xf32, #tpu.memory_space<vmem>>, vector<128x4xf32>
    tpu.vector_store %arg8[%c0_56, %c20], %31 {strides = array<i32>} : memref<128x100xf32, #tpu.memory_space<vmem>>, vector<128x4xf32>,
    %c0_57 = arith.constant 0 : index
    %c1_58 = arith.constant 1 : index
    %c1_59 = arith.constant 1 : index
    %c0_60 = arith.constant 0 : index
    %33 = vector.load %arg7[%c0_57, %c1_58, %c1_59, %c0_60] : memref<2x12x12x4xf32, #tpu.memory_space<vmem>>, vector<2x8x8x4xf32>
    %34 = vector.shape_cast %33 : vector<2x8x8x4xf32> to vector<128x4xf32>
    %c0_61 = arith.constant 0 : index
    %c24 = arith.constant 24 : index
    %35 = vector.load %arg8[%c0_61, %c24] : memref<128x100xf32, #tpu.memory_space<vmem>>, vector<128x4xf32>
    tpu.vector_store %arg8[%c0_61, %c24], %34 {strides = array<i32>} : memref<128x100xf32, #tpu.memory_space<vmem>>, vector<128x4xf32>,
    %c0_62 = arith.constant 0 : index
    %c1_63 = arith.constant 1 : index
    %c2_64 = arith.constant 2 : index
    %c0_65 = arith.constant 0 : index
    %36 = vector.load %arg7[%c0_62, %c1_63, %c2_64, %c0_65] : memref<2x12x12x4xf32, #tpu.memory_space<vmem>>, vector<2x8x8x4xf32>
    %37 = vector.shape_cast %36 : vector<2x8x8x4xf32> to vector<128x4xf32>
    %c0_66 = arith.constant 0 : index
    %c28 = arith.constant 28 : index
    %38 = vector.load %arg8[%c0_66, %c28] : memref<128x100xf32, #tpu.memory_space<vmem>>, vector<128x4xf32>
    tpu.vector_store %arg8[%c0_66, %c28], %37 {strides = array<i32>} : memref<128x100xf32, #tpu.memory_space<vmem>>, vector<128x4xf32>,
    %c0_67 = arith.constant 0 : index
    %c1_68 = arith.constant 1 : index
    %c3_69 = arith.constant 3 : index
    %c0_70 = arith.constant 0 : index
    %39 = vector.load %arg7[%c0_67, %c1_68, %c3_69, %c0_70] : memref<2x12x12x4xf32, #tpu.memory_space<vmem>>, vector<2x8x8x4xf32>
    %40 = vector.shape_cast %39 : vector<2x8x8x4xf32> to vector<128x4xf32>
    %c0_71 = arith.constant 0 : index
    %c32 = arith.constant 32 : index
    %41 = vector.load %arg8[%c0_71, %c32] : memref<128x100xf32, #tpu.memory_space<vmem>>, vector<128x4xf32>
    tpu.vector_store %arg8[%c0_71, %c32], %40 {strides = array<i32>} : memref<128x100xf32, #tpu.memory_space<vmem>>, vector<128x4xf32>,
    %c0_72 = arith.constant 0 : index
    %c1_73 = arith.constant 1 : index
    %c4_74 = arith.constant 4 : index
    %c0_75 = arith.constant 0 : index
    %42 = vector.load %arg7[%c0_72, %c1_73, %c4_74, %c0_75] : memref<2x12x12x4xf32, #tpu.memory_space<vmem>>, vector<2x8x8x4xf32>
    %43 = vector.shape_cast %42 : vector<2x8x8x4xf32> to vector<128x4xf32>
    %c0_76 = arith.constant 0 : index
    %c36 = arith.constant 36 : index
    %44 = vector.load %arg8[%c0_76, %c36] : memref<128x100xf32, #tpu.memory_space<vmem>>, vector<128x4xf32>
    tpu.vector_store %arg8[%c0_76, %c36], %43 {strides = array<i32>} : memref<128x100xf32, #tpu.memory_space<vmem>>, vector<128x4xf32>,
    %c0_77 = arith.constant 0 : index
    %c2_78 = arith.constant 2 : index
    %c0_79 = arith.constant 0 : index
    %c0_80 = arith.constant 0 : index
    %45 = vector.load %arg7[%c0_77, %c2_78, %c0_79, %c0_80] : memref<2x12x12x4xf32, #tpu.memory_space<vmem>>, vector<2x8x8x4xf32>
    %46 = vector.shape_cast %45 : vector<2x8x8x4xf32> to vector<128x4xf32>
    %c0_81 = arith.constant 0 : index
    %c40 = arith.constant 40 : index
    %47 = vector.load %arg8[%c0_81, %c40] : memref<128x100xf32, #tpu.memory_space<vmem>>, vector<128x4xf32>
    tpu.vector_store %arg8[%c0_81, %c40], %46 {strides = array<i32>} : memref<128x100xf32, #tpu.memory_space<vmem>>, vector<128x4xf32>,
    %c0_82 = arith.constant 0 : index
    %c2_83 = arith.constant 2 : index
    %c1_84 = arith.constant 1 : index
    %c0_85 = arith.constant 0 : index
    %48 = vector.load %arg7[%c0_82, %c2_83, %c1_84, %c0_85] : memref<2x12x12x4xf32, #tpu.memory_space<vmem>>, vector<2x8x8x4xf32>
    %49 = vector.shape_cast %48 : vector<2x8x8x4xf32> to vector<128x4xf32>
    %c0_86 = arith.constant 0 : index
    %c44 = arith.constant 44 : index
    %50 = vector.load %arg8[%c0_86, %c44] : memref<128x100xf32, #tpu.memory_space<vmem>>, vector<128x4xf32>
    tpu.vector_store %arg8[%c0_86, %c44], %49 {strides = array<i32>} : memref<128x100xf32, #tpu.memory_space<vmem>>, vector<128x4xf32>,
    %c0_87 = arith.constant 0 : index
    %c2_88 = arith.constant 2 : index
    %c2_89 = arith.constant 2 : index
    %c0_90 = arith.constant 0 : index
    %51 = vector.load %arg7[%c0_87, %c2_88, %c2_89, %c0_90] : memref<2x12x12x4xf32, #tpu.memory_space<vmem>>, vector<2x8x8x4xf32>
    %52 = vector.shape_cast %51 : vector<2x8x8x4xf32> to vector<128x4xf32>
    %c0_91 = arith.constant 0 : index
    %c48 = arith.constant 48 : index
    %53 = vector.load %arg8[%c0_91, %c48] : memref<128x100xf32, #tpu.memory_space<vmem>>, vector<128x4xf32>
    tpu.vector_store %arg8[%c0_91, %c48], %52 {strides = array<i32>} : memref<128x100xf32, #tpu.memory_space<vmem>>, vector<128x4xf32>,
    %c0_92 = arith.constant 0 : index
    %c2_93 = arith.constant 2 : index
    %c3_94 = arith.constant 3 : index
    %c0_95 = arith.constant 0 : index
    %54 = vector.load %arg7[%c0_92, %c2_93, %c3_94, %c0_95] : memref<2x12x12x4xf32, #tpu.memory_space<vmem>>, vector<2x8x8x4xf32>
    %55 = vector.shape_cast %54 : vector<2x8x8x4xf32> to vector<128x4xf32>
    %c0_96 = arith.constant 0 : index
    %c52 = arith.constant 52 : index
    %56 = vector.load %arg8[%c0_96, %c52] : memref<128x100xf32, #tpu.memory_space<vmem>>, vector<128x4xf32>
    tpu.vector_store %arg8[%c0_96, %c52], %55 {strides = array<i32>} : memref<128x100xf32, #tpu.memory_space<vmem>>, vector<128x4xf32>,
    %c0_97 = arith.constant 0 : index
    %c2_98 = arith.constant 2 : index
    %c4_99 = arith.constant 4 : index
    %c0_100 = arith.constant 0 : index
    %57 = vector.load %arg7[%c0_97, %c2_98, %c4_99, %c0_100] : memref<2x12x12x4xf32, #tpu.memory_space<vmem>>, vector<2x8x8x4xf32>
    %58 = vector.shape_cast %57 : vector<2x8x8x4xf32> to vector<128x4xf32>
    %c0_101 = arith.constant 0 : index
    %c56 = arith.constant 56 : index
    %59 = vector.load %arg8[%c0_101, %c56] : memref<128x100xf32, #tpu.memory_space<vmem>>, vector<128x4xf32>
    tpu.vector_store %arg8[%c0_101, %c56], %58 {strides = array<i32>} : memref<128x100xf32, #tpu.memory_space<vmem>>, vector<128x4xf32>,
    %c0_102 = arith.constant 0 : index
    %c3_103 = arith.constant 3 : index
    %c0_104 = arith.constant 0 : index
    %c0_105 = arith.constant 0 : index
    %60 = vector.load %arg7[%c0_102, %c3_103, %c0_104, %c0_105] : memref<2x12x12x4xf32, #tpu.memory_space<vmem>>, vector<2x8x8x4xf32>
    %61 = vector.shape_cast %60 : vector<2x8x8x4xf32> to vector<128x4xf32>
    %c0_106 = arith.constant 0 : index
    %c60 = arith.constant 60 : index
    %62 = vector.load %arg8[%c0_106, %c60] : memref<128x100xf32, #tpu.memory_space<vmem>>, vector<128x4xf32>
    tpu.vector_store %arg8[%c0_106, %c60], %61 {strides = array<i32>} : memref<128x100xf32, #tpu.memory_space<vmem>>, vector<128x4xf32>,
    %c0_107 = arith.constant 0 : index
    %c3_108 = arith.constant 3 : index
    %c1_109 = arith.constant 1 : index
    %c0_110 = arith.constant 0 : index
    %63 = vector.load %arg7[%c0_107, %c3_108, %c1_109, %c0_110] : memref<2x12x12x4xf32, #tpu.memory_space<vmem>>, vector<2x8x8x4xf32>
    %64 = vector.shape_cast %63 : vector<2x8x8x4xf32> to vector<128x4xf32>
    %c0_111 = arith.constant 0 : index
    %c64 = arith.constant 64 : index
    %65 = vector.load %arg8[%c0_111, %c64] : memref<128x100xf32, #tpu.memory_space<vmem>>, vector<128x4xf32>
    tpu.vector_store %arg8[%c0_111, %c64], %64 {strides = array<i32>} : memref<128x100xf32, #tpu.memory_space<vmem>>, vector<128x4xf32>,
    %c0_112 = arith.constant 0 : index
    %c3_113 = arith.constant 3 : index
    %c2_114 = arith.constant 2 : index
    %c0_115 = arith.constant 0 : index
    %66 = vector.load %arg7[%c0_112, %c3_113, %c2_114, %c0_115] : memref<2x12x12x4xf32, #tpu.memory_space<vmem>>, vector<2x8x8x4xf32>
    %67 = vector.shape_cast %66 : vector<2x8x8x4xf32> to vector<128x4xf32>
    %c0_116 = arith.constant 0 : index
    %c68 = arith.constant 68 : index
    %68 = vector.load %arg8[%c0_116, %c68] : memref<128x100xf32, #tpu.memory_space<vmem>>, vector<128x4xf32>
    tpu.vector_store %arg8[%c0_116, %c68], %67 {strides = array<i32>} : memref<128x100xf32, #tpu.memory_space<vmem>>, vector<128x4xf32>,
    %c0_117 = arith.constant 0 : index
    %c3_118 = arith.constant 3 : index
    %c3_119 = arith.constant 3 : index
    %c0_120 = arith.constant 0 : index
    %69 = vector.load %arg7[%c0_117, %c3_118, %c3_119, %c0_120] : memref<2x12x12x4xf32, #tpu.memory_space<vmem>>, vector<2x8x8x4xf32>
    %70 = vector.shape_cast %69 : vector<2x8x8x4xf32> to vector<128x4xf32>
    %c0_121 = arith.constant 0 : index
    %c72 = arith.constant 72 : index
    %71 = vector.load %arg8[%c0_121, %c72] : memref<128x100xf32, #tpu.memory_space<vmem>>, vector<128x4xf32>
    tpu.vector_store %arg8[%c0_121, %c72], %70 {strides = array<i32>} : memref<128x100xf32, #tpu.memory_space<vmem>>, vector<128x4xf32>,
    %c0_122 = arith.constant 0 : index
    %c3_123 = arith.constant 3 : index
    %c4_124 = arith.constant 4 : index
    %c0_125 = arith.constant 0 : index
    %72 = vector.load %arg7[%c0_122, %c3_123, %c4_124, %c0_125] : memref<2x12x12x4xf32, #tpu.memory_space<vmem>>, vector<2x8x8x4xf32>
    %73 = vector.shape_cast %72 : vector<2x8x8x4xf32> to vector<128x4xf32>
    %c0_126 = arith.constant 0 : index
    %c76 = arith.constant 76 : index
    %74 = vector.load %arg8[%c0_126, %c76] : memref<128x100xf32, #tpu.memory_space<vmem>>, vector<128x4xf32>
    tpu.vector_store %arg8[%c0_126, %c76], %73 {strides = array<i32>} : memref<128x100xf32, #tpu.memory_space<vmem>>, vector<128x4xf32>,
    %c0_127 = arith.constant 0 : index
    %c4_128 = arith.constant 4 : index
    %c0_129 = arith.constant 0 : index
    %c0_130 = arith.constant 0 : index
    %75 = vector.load %arg7[%c0_127, %c4_128, %c0_129, %c0_130] : memref<2x12x12x4xf32, #tpu.memory_space<vmem>>, vector<2x8x8x4xf32>
    %76 = vector.shape_cast %75 : vector<2x8x8x4xf32> to vector<128x4xf32>
    %c0_131 = arith.constant 0 : index
    %c80 = arith.constant 80 : index
    %77 = vector.load %arg8[%c0_131, %c80] : memref<128x100xf32, #tpu.memory_space<vmem>>, vector<128x4xf32>
    tpu.vector_store %arg8[%c0_131, %c80], %76 {strides = array<i32>} : memref<128x100xf32, #tpu.memory_space<vmem>>, vector<128x4xf32>,
    %c0_132 = arith.constant 0 : index
    %c4_133 = arith.constant 4 : index
    %c1_134 = arith.constant 1 : index
    %c0_135 = arith.constant 0 : index
    %78 = vector.load %arg7[%c0_132, %c4_133, %c1_134, %c0_135] : memref<2x12x12x4xf32, #tpu.memory_space<vmem>>, vector<2x8x8x4xf32>
    %79 = vector.shape_cast %78 : vector<2x8x8x4xf32> to vector<128x4xf32>
    %c0_136 = arith.constant 0 : index
    %c84 = arith.constant 84 : index
    %80 = vector.load %arg8[%c0_136, %c84] : memref<128x100xf32, #tpu.memory_space<vmem>>, vector<128x4xf32>
    tpu.vector_store %arg8[%c0_136, %c84], %79 {strides = array<i32>} : memref<128x100xf32, #tpu.memory_space<vmem>>, vector<128x4xf32>,
    %c0_137 = arith.constant 0 : index
    %c4_138 = arith.constant 4 : index
    %c2_139 = arith.constant 2 : index
    %c0_140 = arith.constant 0 : index
    %81 = vector.load %arg7[%c0_137, %c4_138, %c2_139, %c0_140] : memref<2x12x12x4xf32, #tpu.memory_space<vmem>>, vector<2x8x8x4xf32>
    %82 = vector.shape_cast %81 : vector<2x8x8x4xf32> to vector<128x4xf32>
    %c0_141 = arith.constant 0 : index
    %c88 = arith.constant 88 : index
    %83 = vector.load %arg8[%c0_141, %c88] : memref<128x100xf32, #tpu.memory_space<vmem>>, vector<128x4xf32>
    tpu.vector_store %arg8[%c0_141, %c88], %82 {strides = array<i32>} : memref<128x100xf32, #tpu.memory_space<vmem>>, vector<128x4xf32>,
    %c0_142 = arith.constant 0 : index
    %c4_143 = arith.constant 4 : index
    %c3_144 = arith.constant 3 : index
    %c0_145 = arith.constant 0 : index
    %84 = vector.load %arg7[%c0_142, %c4_143, %c3_144, %c0_145] : memref<2x12x12x4xf32, #tpu.memory_space<vmem>>, vector<2x8x8x4xf32>
    %85 = vector.shape_cast %84 : vector<2x8x8x4xf32> to vector<128x4xf32>
    %c0_146 = arith.constant 0 : index
    %c92 = arith.constant 92 : index
    %86 = vector.load %arg8[%c0_146, %c92] : memref<128x100xf32, #tpu.memory_space<vmem>>, vector<128x4xf32>
    tpu.vector_store %arg8[%c0_146, %c92], %85 {strides = array<i32>} : memref<128x100xf32, #tpu.memory_space<vmem>>, vector<128x4xf32>,
    %c0_147 = arith.constant 0 : index
    %c4_148 = arith.constant 4 : index
    %c4_149 = arith.constant 4 : index
    %c0_150 = arith.constant 0 : index
    %87 = vector.load %arg7[%c0_147, %c4_148, %c4_149, %c0_150] : memref<2x12x12x4xf32, #tpu.memory_space<vmem>>, vector<2x8x8x4xf32>
    %88 = vector.shape_cast %87 : vector<2x8x8x4xf32> to vector<128x4xf32>
    %c0_151 = arith.constant 0 : index
    %c96 = arith.constant 96 : index
    %89 = vector.load %arg8[%c0_151, %c96] : memref<128x100xf32, #tpu.memory_space<vmem>>, vector<128x4xf32>
    tpu.vector_store %arg8[%c0_151, %c96], %88 {strides = array<i32>} : memref<128x100xf32, #tpu.memory_space<vmem>>, vector<128x4xf32>,
    %c0_152 = arith.constant 0 : index
    %c0_153 = arith.constant 0 : index
    %90 = vector.load %arg8[%c0_152, %c0_153] : memref<128x100xf32, #tpu.memory_space<vmem>>, vector<128x100xf32>
    %c0_154 = arith.constant 0 : index
    %c0_155 = arith.constant 0 : index
    %91 = vector.load %arg2[%c0_154, %c0_155] : memref<100x8xf32, #tpu.memory_space<vmem>>, vector<100x8xf32>
    %cst_156 = arith.constant dense<0.000000e+00> : vector<128x8xf32>
    %92 = tpu.matmul %90, %91, %cst_156 {dimension_numbers = #tpu.dot_dimension_numbers<[1], [0], [0], [1], [0, 0, 1, 1], [], []>} : vector<128x100xf32>, vector<100x8xf32>, vector<128x8xf32> -> vector<128x8xf32>
    %93 = tpu.transpose %92, [1, 0] : vector<128x8xf32> -> vector<8x128xf32>
    %c0_157 = arith.constant 0 : index
    %c0_158 = arith.constant 0 : index
    %94 = vector.load %arg3[%c0_157, %c0_158] : memref<8x1xf32, #tpu.memory_space<vmem>>, vector<8x1xf32>
    %95 = vector.broadcast %94 : vector<8x1xf32> to vector<8x128xf32>
    %96 = arith.addf %93, %95 : vector<8x128xf32>
    %cst_159 = arith.constant dense<0.000000e+00> : vector<8xf32>
    %97 = vector.multi_reduction <add>, %96, %cst_159 [1] : vector<8x128xf32> to vector<8xf32>
    %98 = vector.shape_cast %97 : vector<8xf32> to vector<8x1xf32>
    %cst_160 = arith.constant 7.812500e-03 : f32
    %99 = vector.broadcast %cst_160 : f32 to vector<8x1xf32>
    %100 = arith.mulf %98, %99 : vector<8x1xf32>
    %101 = arith.mulf %96, %96 : vector<8x128xf32>
    %cst_161 = arith.constant dense<0.000000e+00> : vector<8xf32>
    %102 = vector.multi_reduction <add>, %101, %cst_161 [1] : vector<8x128xf32> to vector<8xf32>
    %103 = vector.shape_cast %102 : vector<8xf32> to vector<8x1xf32>
    %cst_162 = arith.constant 7.812500e-03 : f32
    %104 = vector.broadcast %cst_162 : f32 to vector<8x1xf32>
    %105 = arith.mulf %103, %104 : vector<8x1xf32>
    %106 = arith.mulf %100, %100 : vector<8x1xf32>
    %107 = arith.subf %105, %106 : vector<8x1xf32>
    %c0_163 = arith.constant 0 : index
    %c0_164 = arith.constant 0 : index
    %108 = vector.load %arg4[%c0_163, %c0_164] : memref<8x1xf32, #tpu.memory_space<vmem>>, vector<8x1xf32>
    %cst_165 = arith.constant 9.99999974E-6 : f32
    %109 = vector.broadcast %cst_165 : f32 to vector<8x1xf32>
    %110 = arith.addf %107, %109 : vector<8x1xf32>
    %111 = math.rsqrt %110 : vector<8x1xf32>
    %112 = arith.mulf %108, %111 : vector<8x1xf32>
    %c0_166 = arith.constant 0 : index
    %c0_167 = arith.constant 0 : index
    %113 = vector.load %arg5[%c0_166, %c0_167] : memref<8x1xf32, #tpu.memory_space<vmem>>, vector<8x1xf32>
    %114 = arith.mulf %100, %112 : vector<8x1xf32>
    %115 = arith.subf %113, %114 : vector<8x1xf32>
    %116 = vector.broadcast %112 : vector<8x1xf32> to vector<8x128xf32>
    %117 = arith.mulf %96, %116 : vector<8x128xf32>
    %118 = vector.broadcast %115 : vector<8x1xf32> to vector<8x128xf32>
    %119 = arith.addf %117, %118 : vector<8x128xf32>
    %cst_168 = arith.constant 0.000000e+00 : f32
    %120 = vector.broadcast %cst_168 : f32 to vector<8x128xf32>
    %121 = arith.maximumf %119, %120 : vector<8x128xf32>
    %c0_169 = arith.constant 0 : index
    %c0_170 = arith.constant 0 : index
    %122 = vector.load %arg6[%c0_169, %c0_170] : memref<8x128xf32, #tpu.memory_space<vmem>>, vector<8x128xf32>
    tpu.vector_store %arg6[%c0_169, %c0_170], %121 {strides = array<i32>} : memref<8x128xf32, #tpu.memory_space<vmem>>, vector<8x128xf32>,
    return
  }
  func.func @transform_0(%arg0: i32) -> (i32, i32, i32, i32, i32) {
    %c0_i32 = arith.constant 0 : i32
    %c0_i32_0 = arith.constant 0 : i32
    %c0_i32_1 = arith.constant 0 : i32
    %c0_i32_2 = arith.constant 0 : i32
    %c0_i32_3 = arith.constant 0 : i32
    %c0_i32_4 = arith.constant 0 : i32
    return %c0_i32, %c0_i32_0, %c0_i32_1, %c0_i32_2, %c0_i32_3 : i32, i32, i32, i32, i32
  }
  func.func @transform_1(%arg0: i32) -> (i32, i32) {
    %c0_i32 = arith.constant 0 : i32
    %c0_i32_0 = arith.constant 0 : i32
    %c0_i32_1 = arith.constant 0 : i32
    return %c0_i32, %c0_i32_0 : i32, i32
  }
  func.func @transform_2(%arg0: i32) -> (i32, i32) {
    %c0_i32 = arith.constant 0 : i32
    %c0_i32_0 = arith.constant 0 : i32
    %c0_i32_1 = arith.constant 0 : i32
    return %c0_i32, %c0_i32_0 : i32, i32
  }
  func.func @transform_3(%arg0: i32) -> (i32, i32) {
    %c0_i32 = arith.constant 0 : i32
    %c0_i32_0 = arith.constant 0 : i32
    %c0_i32_1 = arith.constant 0 : i32
    return %c0_i32, %c0_i32_0 : i32, i32
  }
  func.func @transform_4(%arg0: i32) -> (i32, i32) {
    %c0_i32 = arith.constant 0 : i32
    %c0_i32_0 = arith.constant 0 : i32
    %c0_i32_1 = arith.constant 0 : i32
    return %c0_i32, %c0_i32_0 : i32, i32
  }
  func.func @transform_5(%arg0: i32) -> (i32, i32) {
    %c0_i32 = arith.constant 0 : i32
    %c0_i32_0 = arith.constant 0 : i32
    %c0_i32_1 = arith.constant 0 : i32
    return %c0_i32, %c0_i32_0 : i32, i32
  }
}

</mosaic_0001>

<llo_original>
// kernel: tpu_custom_call.1
$region0: #{tpu_custom_call.1}
  #allocation0 [shape = 'u32[]', space=smem, size = 0x4, offset = 0x4, fixed_abs, tag = 'smem constant byte address 0x4 - core index']
  #allocation1 [shape = 'u32[144,128]{1,0:T(1,128)}', space=vmem, size = 0x12000, scoped, tag = 'internal scratch']
  #allocation2 [shape = 'f32[2,12,12,4]{3,2,1,0:T(8,128)}', space=vmem, size = 0x30000, scoped, tag = 'scratch operand']
  #allocation3 [shape = 'f32[128,100]{1,0:T(8,128)}', space=vmem, size = 0x10000, scoped, tag = 'scratch operand']
  %s0 = inlined_call_operand.hbm [shape: f32[2,8,2,8,8], index: 0, kind: input, shape index: {}]
  %s1 = inlined_call_operand.vmem [shape: f32[100,8], index: 1, kind: input, shape index: {}]
  %s2 = inlined_call_operand.vmem [shape: f32[8,1], index: 2, kind: input, shape index: {}]
  %s3 = inlined_call_operand.vmem [shape: f32[8,1], index: 3, kind: input, shape index: {}]
  %s4 = inlined_call_operand.vmem [shape: f32[8,1], index: 4, kind: input, shape index: {}]
  %s5 = inlined_call_operand.hbm [shape: f32[8,128], index: 5, kind: output, shape index: {}]
  %s6 = sld [smem:[#allocation0]]
  $region34: #{tpu_custom_call.1} parent=0
    _
  %s8 = ssub.s32 1, %s6
  %s9 = scalar_select 0, %s8, %s6
  $region1: #{tpu_custom_call.1} parent=0
    #allocation4 [shape = 'u8[131072]{0}', space=vmem, size = 0x20000, scoped, tag = 'input window, operand 0, single buffered']
    #allocation5 [shape = 's32[1]{0}', space=sflag, size = 0x4, scoped, tag = 'scoped memory for tpu_custom_call.1']
    #allocation6 [shape = 's32[1]{0}', space=sflag, size = 0x4, scoped, tag = 'scoped memory for tpu_custom_call.1']
    #allocation7 [shape = 'u8[4096]{0}', space=vmem, size = 0x1000, scoped, tag = 'output window, operand 0, single buffered']
    %10 = vsyncpa [#allocation5], 0
    %11 = vsyncpa [#allocation6], 0
    // Predicated region
    $region2: #{tpu_custom_call.1} parent=1 // pred_check
      _
    $region3: #{tpu_custom_call.1} parent=1 // pred_check_branch
      %13 = sbr.rel (0) target = $region5
    $region4: #{tpu_custom_call.1} parent=1 // pred_region
      %s15 = ssub.s32 4096, 4096
      %16 = vsyncadd [#allocation5], %s15
      %s17 = sshll.u32 [#allocation4], 4
      %s18 = int_to_ptr.vmem [resolvable:$true] %s17
      %23 = dma.hbm_to_vmem [thread:$0]  %s0, 4096, %s18, [#allocation5], 128, 128, 8
    $region5: #{tpu_custom_call.1} parent=1 // pred_fallthru
      _
    // Predicated region
    $region6: #{tpu_custom_call.1} parent=1 // pred_check
      _
    $region7: #{tpu_custom_call.1} parent=1 // pred_check_branch
      %25 = sbr.rel (0) target = $region9
    $region8: #{tpu_custom_call.1} parent=1 // pred_region
      _
    $region9: #{tpu_custom_call.1} parent=1 // pred_fallthru
      _
    // Predicated region
    $region10: #{tpu_custom_call.1} parent=1 // pred_check
      _
    $region11: #{tpu_custom_call.1} parent=1 // pred_check_branch
      %27 = sbr.rel (0) target = $region13
    $region12: #{tpu_custom_call.1} parent=1 // pred_region
      _
    $region13: #{tpu_custom_call.1} parent=1 // pred_fallthru
      _
    // Predicated region
    $region14: #{tpu_custom_call.1} parent=1 // pred_check
      _
    $region15: #{tpu_custom_call.1} parent=1 // pred_check_branch
      %29 = sbr.rel (0) target = $region17
    $region16: #{tpu_custom_call.1} parent=1 // pred_region
      _
    $region17: #{tpu_custom_call.1} parent=1 // pred_fallthru
      _
    // Predicated region
    $region18: #{tpu_custom_call.1} parent=1 // pred_check
      _
    $region19: #{tpu_custom_call.1} parent=1 // pred_check_branch
      %31 = sbr.rel (0) target = $region21
    $region20: #{tpu_custom_call.1} parent=1 // pred_region
      _
    $region21: #{tpu_custom_call.1} parent=1 // pred_fallthru
      _
    // Predicated region
    $region22: #{tpu_custom_call.1} parent=1 // pred_check
      _
    $region23: #{tpu_custom_call.1} parent=1 // pred_check_branch
      %33 = sbr.rel (0) target = $region25
    $region24: #{tpu_custom_call.1} parent=1 // pred_region
      %34 = dma.done [#allocation5], 4096
    $region25: #{tpu_custom_call.1} parent=1 // pred_fallthru
      _
    %v35 = vld [vmem:[#allocation4] sm:$0xff]
    %v36 = vld [vmem:[#allocation4 + $0x10] sm:$0xff]
    %v37 = vld [vmem:[#allocation4 + $0x20] sm:$0xff]
    %v38 = vld [vmem:[#allocation4 + $0x30] sm:$0xff]
    %v39 = vld [vmem:[#allocation4 + $0x40] sm:$0xff]
    %v40 = vld [vmem:[#allocation4 + $0x50] sm:$0xff]
    %v41 = vld [vmem:[#allocation4 + $0x60] sm:$0xff]
    %v42 = vld [vmem:[#allocation4 + $0x70] sm:$0xff]
    %v43 = vld [vmem:[#allocation4 + $0x80] sm:$0xff]
    %v44 = vld [vmem:[#allocation4 + $0x90] sm:$0xff]
    %v45 = vld [vmem:[#allocation4 + $0xa0] sm:$0xff]
    %v46 = vld [vmem:[#allocation4 + $0xb0] sm:$0xff]
    %v47 = vld [vmem:[#allocation4 + $0xc0] sm:$0xff]
    %v48 = vld [vmem:[#allocation4 + $0xd0] sm:$0xff]
    %v49 = vld [vmem:[#allocation4 + $0xe0] sm:$0xff]
    %v50 = vld [vmem:[#allocation4 + $0xf0] sm:$0xff]
    %s51 = scalar_lea.vmem [#allocation4], 8
    %v52 = vld [vmem:[%s51] sm:$0xff]
    %v53 = vld [vmem:[%s51 + $0x10] sm:$0xff]
    %v54 = vld [vmem:[%s51 + $0x20] sm:$0xff]
    %v55 = vld [vmem:[%s51 + $0x30] sm:$0xff]
    %v56 = vld [vmem:[%s51 + $0x40] sm:$0xff]
    %v57 = vld [vmem:[%s51 + $0x50] sm:$0xff]
    %v58 = vld [vmem:[%s51 + $0x60] sm:$0xff]
    %v59 = vld [vmem:[%s51 + $0x70] sm:$0xff]
    %v60 = vld [vmem:[%s51 + $0x80] sm:$0xff]
    %v61 = vld [vmem:[%s51 + $0x90] sm:$0xff]
    %v62 = vld [vmem:[%s51 + $0xa0] sm:$0xff]
    %v63 = vld [vmem:[%s51 + $0xb0] sm:$0xff]
    %v64 = vld [vmem:[%s51 + $0xc0] sm:$0xff]
    %v65 = vld [vmem:[%s51 + $0xd0] sm:$0xff]
    %v66 = vld [vmem:[%s51 + $0xe0] sm:$0xff]
    %v67 = vld [vmem:[%s51 + $0xf0] sm:$0xff]
    %v68 = vmax.f32 %v35, %v52
    %v69 = vmax.f32 %v36, %v53
    %v70 = vmax.f32 %v37, %v54
    %v71 = vmax.f32 %v38, %v55
    %v72 = vmax.f32 %v39, %v56
    %v73 = vmax.f32 %v40, %v57
    %v74 = vmax.f32 %v41, %v58
    %v75 = vmax.f32 %v42, %v59
    %v76 = vmax.f32 %v43, %v60
    %v77 = vmax.f32 %v44, %v61
    %v78 = vmax.f32 %v45, %v62
    %v79 = vmax.f32 %v46, %v63
    %v80 = vmax.f32 %v47, %v64
    %v81 = vmax.f32 %v48, %v65
    %v82 = vmax.f32 %v49, %v66
    %v83 = vmax.f32 %v50, %v67
    %100 = vrot.lane.b32.xlu0 %v68, 124
    %v101 = vpop.permute.xlu0 %100
    %102 = vrot.lane.b32.xlu0 %v69, 124
    %v103 = vpop.permute.xlu0 %102
    %104 = vrot.lane.b32.xlu0 %v70, 124
    %v105 = vpop.permute.xlu0 %104
    %106 = vrot.lane.b32.xlu0 %v71, 124
    %v107 = vpop.permute.xlu0 %106
    %108 = vrot.lane.b32.xlu0 %v72, 124
    %v109 = vpop.permute.xlu0 %108
    %110 = vrot.lane.b32.xlu0 %v73, 124
    %v111 = vpop.permute.xlu0 %110
    %112 = vrot.lane.b32.xlu0 %v74, 124
    %v113 = vpop.permute.xlu0 %112
    %114 = vrot.lane.b32.xlu0 %v75, 124
    %v115 = vpop.permute.xlu0 %114
    %116 = vrot.lane.b32.xlu0 %v76, 124
    %v117 = vpop.permute.xlu0 %116
    %118 = vrot.lane.b32.xlu0 %v77, 124
    %v119 = vpop.permute.xlu0 %118
    %120 = vrot.lane.b32.xlu0 %v78, 124
    %v121 = vpop.permute.xlu0 %120
    %122 = vrot.lane.b32.xlu0 %v79, 124
    %v123 = vpop.permute.xlu0 %122
    %124 = vrot.lane.b32.xlu0 %v80, 124
    %v125 = vpop.permute.xlu0 %124
    %126 = vrot.lane.b32.xlu0 %v81, 124
    %v127 = vpop.permute.xlu0 %126
    %128 = vrot.lane.b32.xlu0 %v82, 124
    %v129 = vpop.permute.xlu0 %128
    %130 = vrot.lane.b32.xlu0 %v83, 124
    %v131 = vpop.permute.xlu0 %130
    %v148 = vmax.f32 %v68, %v101
    %v149 = vmax.f32 %v69, %v103
    %v150 = vmax.f32 %v70, %v105
    %v151 = vmax.f32 %v71, %v107
    %v152 = vmax.f32 %v72, %v109
    %v153 = vmax.f32 %v73, %v111
    %v154 = vmax.f32 %v74, %v113
    %v155 = vmax.f32 %v75, %v115
    %v156 = vmax.f32 %v76, %v117
    %v157 = vmax.f32 %v77, %v119
    %v158 = vmax.f32 %v78, %v121
    %v159 = vmax.f32 %v79, %v123
    %v160 = vmax.f32 %v80, %v125
    %v161 = vmax.f32 %v81, %v127
    %v162 = vmax.f32 %v82, %v129
    %v163 = vmax.f32 %v83, %v131
    %vm164 = vcmask 31744
    %165 = vst.msk [vmem:[#allocation2] sm:$0xff] %vm164, 0.0
    %vm166 = vcmask 27648
    %167 = vst.msk [vmem:[#allocation2 + $0x8] sm:$0xf] %vm166, 0.0
    %168 = vst.msk [vmem:[#allocation2 + $0x10] sm:$0xff] %vm164, 0.0
    %169 = vst.msk [vmem:[#allocation2 + $0x18] sm:$0xf] %vm166, 0.0
    %170 = vst.msk [vmem:[#allocation2 + $0xc0] sm:$0xff] %vm164, 0.0
    %171 = vst.msk [vmem:[#allocation2 + $0xc8] sm:$0xf] %vm166, 0.0
    %172 = vst.msk [vmem:[#allocation2 + $0xd0] sm:$0xff] %vm164, 0.0
    %173 = vst.msk [vmem:[#allocation2 + $0xd8] sm:$0xf] %vm166, 0.0
    %s174 = scalar_lea.vmem [#allocation2], 160
    %175 = vst.msk [vmem:[%s174] sm:$0xff] %vm164, 0.0
    %176 = vst.msk [vmem:[%s174 + $0x8] sm:$0xf] %vm166, 0.0
    %177 = vst.msk [vmem:[%s174 + $0x10] sm:$0xff] %vm164, 0.0
    %178 = vst.msk [vmem:[%s174 + $0x18] sm:$0xf] %vm166, 0.0
    %179 = vst.msk [vmem:[%s174 + $0xc0] sm:$0xff] %vm164, 0.0
    %180 = vst.msk [vmem:[%s174 + $0xc8] sm:$0xf] %vm166, 0.0
    %181 = vst.msk [vmem:[%s174 + $0xd0] sm:$0xff] %vm164, 0.0
    %182 = vst.msk [vmem:[%s174 + $0xd8] sm:$0xf] %vm166, 0.0
    %vm183 = vcmask 25600
    %184 = vst.msk [vmem:[#allocation2] sm:$0x3] %vm183, 0.0
    %185 = vst.msk [vmem:[#allocation2 + $0x10] sm:$0x3] %vm183, 0.0
    %186 = vst.msk [vmem:[#allocation2 + $0x20] sm:$0x3] %vm183, 0.0
    %187 = vst.msk [vmem:[#allocation2 + $0x30] sm:$0x3] %vm183, 0.0
    %188 = vst.msk [vmem:[#allocation2 + $0x40] sm:$0x3] %vm183, 0.0
    %189 = vst.msk [vmem:[#allocation2 + $0x50] sm:$0x3] %vm183, 0.0
    %190 = vst.msk [vmem:[#allocation2 + $0x60] sm:$0x3] %vm183, 0.0
    %191 = vst.msk [vmem:[#allocation2 + $0x70] sm:$0x3] %vm183, 0.0
    %192 = vst.msk [vmem:[#allocation2 + $0x80] sm:$0x3] %vm183, 0.0
    %193 = vst.msk [vmem:[#allocation2 + $0x90] sm:$0x3] %vm183, 0.0
    %194 = vst.msk [vmem:[#allocation2 + $0xa0] sm:$0x3] %vm183, 0.0
    %195 = vst.msk [vmem:[#allocation2 + $0xb0] sm:$0x3] %vm183, 0.0
    %196 = vst.msk [vmem:[#allocation2 + $0xc0] sm:$0x3] %vm183, 0.0
    %197 = vst.msk [vmem:[#allocation2 + $0xd0] sm:$0x3] %vm183, 0.0
    %198 = vst.msk [vmem:[#allocation2 + $0xe0] sm:$0x3] %vm183, 0.0
    %199 = vst.msk [vmem:[#allocation2 + $0xf0] sm:$0x3] %vm183, 0.0
    %200 = vst.msk [vmem:[#allocation2 + $0x100] sm:$0x3] %vm183, 0.0
    %201 = vst.msk [vmem:[#allocation2 + $0x110] sm:$0x3] %vm183, 0.0
    %202 = vst.msk [vmem:[#allocation2 + $0x120] sm:$0x3] %vm183, 0.0
    %203 = vst.msk [vmem:[#allocation2 + $0x130] sm:$0x3] %vm183, 0.0
    %204 = vst.msk [vmem:[#allocation2 + $0x140] sm:$0x3] %vm183, 0.0
    %205 = vst.msk [vmem:[#allocation2 + $0x150] sm:$0x3] %vm183, 0.0
    %206 = vst.msk [vmem:[#allocation2 + $0x160] sm:$0x3] %vm183, 0.0
    %207 = vst.msk [vmem:[#allocation2 + $0x170] sm:$0x3] %vm183, 0.0
    %208 = vst.msk [vmem:[#allocation2 + $0xa] sm:$0x3] %vm183, 0.0
    %209 = vst.msk [vmem:[#allocation2 + $0x1a] sm:$0x3] %vm183, 0.0
    %210 = vst.msk [vmem:[#allocation2 + $0x2a] sm:$0x3] %vm183, 0.0
    %211 = vst.msk [vmem:[#allocation2 + $0x3a] sm:$0x3] %vm183, 0.0
    %212 = vst.msk [vmem:[#allocation2 + $0x4a] sm:$0x3] %vm183, 0.0
    %213 = vst.msk [vmem:[#allocation2 + $0x5a] sm:$0x3] %vm183, 0.0
    %214 = vst.msk [vmem:[#allocation2 + $0x6a] sm:$0x3] %vm183, 0.0
    %215 = vst.msk [vmem:[#allocation2 + $0x7a] sm:$0x3] %vm183, 0.0
    %216 = vst.msk [vmem:[#allocation2 + $0x8a] sm:$0x3] %vm183, 0.0
    %217 = vst.msk [vmem:[#allocation2 + $0x9a] sm:$0x3] %vm183, 0.0
    %218 = vst.msk [vmem:[#allocation2 + $0xaa] sm:$0x3] %vm183, 0.0
    %219 = vst.msk [vmem:[#allocation2 + $0xba] sm:$0x3] %vm183, 0.0
    %220 = vst.msk [vmem:[#allocation2 + $0xca] sm:$0x3] %vm183, 0.0
    %221 = vst.msk [vmem:[#allocation2 + $0xda] sm:$0x3] %vm183, 0.0
    %222 = vst.msk [vmem:[#allocation2 + $0xea] sm:$0x3] %vm183, 0.0
    %223 = vst.msk [vmem:[#allocation2 + $0xfa] sm:$0x3] %vm183, 0.0
    %224 = vst.msk [vmem:[#allocation2 + $0x10a] sm:$0x3] %vm183, 0.0
    %225 = vst.msk [vmem:[#allocation2 + $0x11a] sm:$0x3] %vm183, 0.0
    %226 = vst.msk [vmem:[#allocation2 + $0x12a] sm:$0x3] %vm183, 0.0
    %227 = vst.msk [vmem:[#allocation2 + $0x13a] sm:$0x3] %vm183, 0.0
    %228 = vst.msk [vmem:[#allocation2 + $0x14a] sm:$0x3] %vm183, 0.0
    %229 = vst.msk [vmem:[#allocation2 + $0x15a] sm:$0x3] %vm183, 0.0
    %230 = vst.msk [vmem:[#allocation2 + $0x16a] sm:$0x3] %vm183, 0.0
    %231 = vst.msk [vmem:[#allocation2 + $0x17a] sm:$0x3] %vm183, 0.0
    %s232 = scalar_lea.vmem [#allocation2], 32
    %233 = vst.msk [vmem:[%s232 + $0x2] sm:$0xff] %vm164, %v148
    %234 = vst.msk [vmem:[%s232 + $0x12] sm:$0xff] %vm164, %v149
    %235 = vst.msk [vmem:[%s232 + $0x22] sm:$0xff] %vm164, %v150
    %236 = vst.msk [vmem:[%s232 + $0x32] sm:$0xff] %vm164, %v151
    %237 = vst.msk [vmem:[%s232 + $0x42] sm:$0xff] %vm164, %v152
    %238 = vst.msk [vmem:[%s232 + $0x52] sm:$0xff] %vm164, %v153
    %239 = vst.msk [vmem:[%s232 + $0x62] sm:$0xff] %vm164, %v154
    %240 = vst.msk [vmem:[%s232 + $0x72] sm:$0xff] %vm164, %v155
    %241 = vst.msk [vmem:[%s232 + $0xc2] sm:$0xff] %vm164, %v156
    %242 = vst.msk [vmem:[%s232 + $0xd2] sm:$0xff] %vm164, %v157
    %243 = vst.msk [vmem:[%s232 + $0xe2] sm:$0xff] %vm164, %v158
    %244 = vst.msk [vmem:[%s232 + $0xf2] sm:$0xff] %vm164, %v159
    %245 = vst.msk [vmem:[%s232 + $0x102] sm:$0xff] %vm164, %v160
    %246 = vst.msk [vmem:[%s232 + $0x112] sm:$0xff] %vm164, %v161
    %247 = vst.msk [vmem:[%s232 + $0x122] sm:$0xff] %vm164, %v162
    %248 = vst.msk [vmem:[%s232 + $0x132] sm:$0xff] %vm164, %v163
    %v249 = vld [vmem:[#allocation2] sm:$0xff]
    %v250 = vld [vmem:[#allocation2 + $0x10] sm:$0xff]
    %v251 = vld [vmem:[#allocation2 + $0x20] sm:$0xff]
    %v252 = vld [vmem:[#allocation2 + $0x30] sm:$0xff]
    %v253 = vld [vmem:[#allocation2 + $0x40] sm:$0xff]
    %v254 = vld [vmem:[#allocation2 + $0x50] sm:$0xff]
    %v255 = vld [vmem:[#allocation2 + $0x60] sm:$0xff]
    %v256 = vld [vmem:[#allocation2 + $0x70] sm:$0xff]
    %v257 = vld [vmem:[#allocation2 + $0xc0] sm:$0xff]
    %v258 = vld [vmem:[#allocation2 + $0xd0] sm:$0xff]
    %v259 = vld [vmem:[#allocation2 + $0xe0] sm:$0xff]
    %v260 = vld [vmem:[#allocation2 + $0xf0] sm:$0xff]
    %v261 = vld [vmem:[#allocation2 + $0x100] sm:$0xff]
    %v262 = vld [vmem:[#allocation2 + $0x110] sm:$0xff]
    %v263 = vld [vmem:[#allocation2 + $0x120] sm:$0xff]
    %v264 = vld [vmem:[#allocation2 + $0x130] sm:$0xff]
    %265 = vst.msk [vmem:[#allocation3] sm:$0xff] %vm164, %v249
    %266 = vst.msk [vmem:[#allocation3 + $0x8] sm:$0xff] %vm164, %v250
    %267 = vst.msk [vmem:[#allocation3 + $0x10] sm:$0xff] %vm164, %v251
    %268 = vst.msk [vmem:[#allocation3 + $0x18] sm:$0xff] %vm164, %v252
    %269 = vst.msk [vmem:[#allocation3 + $0x20] sm:$0xff] %vm164, %v253
    %270 = vst.msk [vmem:[#allocation3 + $0x28] sm:$0xff] %vm164, %v254
    %271 = vst.msk [vmem:[#allocation3 + $0x30] sm:$0xff] %vm164, %v255
    %272 = vst.msk [vmem:[#allocation3 + $0x38] sm:$0xff] %vm164, %v256
    %273 = vst.msk [vmem:[#allocation3 + $0x40] sm:$0xff] %vm164, %v257
    %274 = vst.msk [vmem:[#allocation3 + $0x48] sm:$0xff] %vm164, %v258
    %275 = vst.msk [vmem:[#allocation3 + $0x50] sm:$0xff] %vm164, %v259
    %276 = vst.msk [vmem:[#allocation3 + $0x58] sm:$0xff] %vm164, %v260
    %277 = vst.msk [vmem:[#allocation3 + $0x60] sm:$0xff] %vm164, %v261
    %278 = vst.msk [vmem:[#allocation3 + $0x68] sm:$0xff] %vm164, %v262
    %279 = vst.msk [vmem:[#allocation3 + $0x70] sm:$0xff] %vm164, %v263
    %280 = vst.msk [vmem:[#allocation3 + $0x78] sm:$0xff] %vm164, %v264
    %v281 = vld [vmem:[#allocation2 + $0x1] sm:$0xff]
    %v282 = vld [vmem:[#allocation2 + $0x11] sm:$0xff]
    %v283 = vld [vmem:[#allocation2 + $0x21] sm:$0xff]
    %v284 = vld [vmem:[#allocation2 + $0x31] sm:$0xff]
    %v285 = vld [vmem:[#allocation2 + $0x41] sm:$0xff]
    %v286 = vld [vmem:[#allocation2 + $0x51] sm:$0xff]
    %v287 = vld [vmem:[#allocation2 + $0x61] sm:$0xff]
    %v288 = vld [vmem:[#allocation2 + $0x71] sm:$0xff]
    %v289 = vld [vmem:[#allocation2 + $0xc1] sm:$0xff]
    %v290 = vld [vmem:[#allocation2 + $0xd1] sm:$0xff]
    %v291 = vld [vmem:[#allocation2 + $0xe1] sm:$0xff]
    %v292 = vld [vmem:[#allocation2 + $0xf1] sm:$0xff]
    %v293 = vld [vmem:[#allocation2 + $0x101] sm:$0xff]
    %v294 = vld [vmem:[#allocation2 + $0x111] sm:$0xff]
    %v295 = vld [vmem:[#allocation2 + $0x121] sm:$0xff]
    %v296 = vld [vmem:[#allocation2 + $0x131] sm:$0xff]
    %313 = vrot.lane.b32.xlu0 %v281, 4
    %v314 = vpop.permute.xlu0 %313
    %315 = vrot.lane.b32.xlu0 %v282, 4
    %v316 = vpop.permute.xlu0 %315
    %317 = vrot.lane.b32.xlu0 %v283, 4
    %v318 = vpop.permute.xlu0 %317
    %319 = vrot.lane.b32.xlu0 %v284, 4
    %v320 = vpop.permute.xlu0 %319
    %321 = vrot.lane.b32.xlu0 %v285, 4
    %v322 = vpop.permute.xlu0 %321
    %323 = vrot.lane.b32.xlu0 %v286, 4
    %v324 = vpop.permute.xlu0 %323
    %325 = vrot.lane.b32.xlu0 %v287, 4
    %v326 = vpop.permute.xlu0 %325
    %327 = vrot.lane.b32.xlu0 %v288, 4
    %v328 = vpop.permute.xlu0 %327
    %329 = vrot.lane.b32.xlu0 %v289, 4
    %v330 = vpop.permute.xlu0 %329
    %331 = vrot.lane.b32.xlu0 %v290, 4
    %v332 = vpop.permute.xlu0 %331
    %333 = vrot.lane.b32.xlu0 %v291, 4
    %v334 = vpop.permute.xlu0 %333
    %335 = vrot.lane.b32.xlu0 %v292, 4
    %v336 = vpop.permute.xlu0 %335
    %337 = vrot.lane.b32.xlu0 %v293, 4
    %v338 = vpop.permute.xlu0 %337
    %339 = vrot.lane.b32.xlu0 %v294, 4
    %v340 = vpop.permute.xlu0 %339
    %341 = vrot.lane.b32.xlu0 %v295, 4
    %v342 = vpop.permute.xlu0 %341
    %343 = vrot.lane.b32.xlu0 %v296, 4
    %v344 = vpop.permute.xlu0 %343
    %vm361 = vcmask 64544
    %362 = vst.msk [vmem:[#allocation3] sm:$0xff] %vm361, %v314
    %363 = vst.msk [vmem:[#allocation3 + $0x8] sm:$0xff] %vm361, %v316
    %364 = vst.msk [vmem:[#allocation3 + $0x10] sm:$0xff] %vm361, %v318
    %365 = vst.msk [vmem:[#allocation3 + $0x18] sm:$0xff] %vm361, %v320
    %366 = vst.msk [vmem:[#allocation3 + $0x20] sm:$0xff] %vm361, %v322
    %367 = vst.msk [vmem:[#allocation3 + $0x28] sm:$0xff] %vm361, %v324
    %368 = vst.msk [vmem:[#allocation3 + $0x30] sm:$0xff] %vm361, %v326
    %369 = vst.msk [vmem:[#allocation3 + $0x38] sm:$0xff] %vm361, %v328
    %370 = vst.msk [vmem:[#allocation3 + $0x40] sm:$0xff] %vm361, %v330
    %371 = vst.msk [vmem:[#allocation3 + $0x48] sm:$0xff] %vm361, %v332
    %372 = vst.msk [vmem:[#allocation3 + $0x50] sm:$0xff] %vm361, %v334
    %373 = vst.msk [vmem:[#allocation3 + $0x58] sm:$0xff] %vm361, %v336
    %374 = vst.msk [vmem:[#allocation3 + $0x60] sm:$0xff] %vm361, %v338
    %375 = vst.msk [vmem:[#allocation3 + $0x68] sm:$0xff] %vm361, %v340
    %376 = vst.msk [vmem:[#allocation3 + $0x70] sm:$0xff] %vm361, %v342
    %377 = vst.msk [vmem:[#allocation3 + $0x78] sm:$0xff] %vm361, %v344
    %v378 = vld [vmem:[#allocation2 + $0x2] sm:$0xff]
    %v379 = vld [vmem:[#allocation2 + $0x12] sm:$0xff]
    %v380 = vld [vmem:[#allocation2 + $0x22] sm:$0xff]
    %v381 = vld [vmem:[#allocation2 + $0x32] sm:$0xff]
    %v382 = vld [vmem:[#allocation2 + $0x42] sm:$0xff]
    %v383 = vld [vmem:[#allocation2 + $0x52] sm:$0xff]
    %v384 = vld [vmem:[#allocation2 + $0x62] sm:$0xff]
    %v385 = vld [vmem:[#allocation2 + $0x72] sm:$0xff]
    %v386 = vld [vmem:[#allocation2 + $0xc2] sm:$0xff]
    %v387 = vld [vmem:[#allocation2 + $0xd2] sm:$0xff]
    %v388 = vld [vmem:[#allocation2 + $0xe2] sm:$0xff]
    %v389 = vld [vmem:[#allocation2 + $0xf2] sm:$0xff]
    %v390 = vld [vmem:[#allocation2 + $0x102] sm:$0xff]
    %v391 = vld [vmem:[#allocation2 + $0x112] sm:$0xff]
    %v392 = vld [vmem:[#allocation2 + $0x122] sm:$0xff]
    %v393 = vld [vmem:[#allocation2 + $0x132] sm:$0xff]
    %410 = vrot.lane.b32.xlu0 %v378, 8
    %v411 = vpop.permute.xlu0 %410
    %412 = vrot.lane.b32.xlu0 %v379, 8
    %v413 = vpop.permute.xlu0 %412
    %414 = vrot.lane.b32.xlu0 %v380, 8
    %v415 = vpop.permute.xlu0 %414
    %416 = vrot.lane.b32.xlu0 %v381, 8
    %v417 = vpop.permute.xlu0 %416
    %418 = vrot.lane.b32.xlu0 %v382, 8
    %v419 = vpop.permute.xlu0 %418
    %420 = vrot.lane.b32.xlu0 %v383, 8
    %v421 = vpop.permute.xlu0 %420
    %422 = vrot.lane.b32.xlu0 %v384, 8
    %v423 = vpop.permute.xlu0 %422
    %424 = vrot.lane.b32.xlu0 %v385, 8
    %v425 = vpop.permute.xlu0 %424
    %426 = vrot.lane.b32.xlu0 %v386, 8
    %v427 = vpop.permute.xlu0 %426
    %428 = vrot.lane.b32.xlu0 %v387, 8
    %v429 = vpop.permute.xlu0 %428
    %430 = vrot.lane.b32.xlu0 %v388, 8
    %v431 = vpop.permute.xlu0 %430
    %432 = vrot.lane.b32.xlu0 %v389, 8
    %v433 = vpop.permute.xlu0 %432
    %434 = vrot.lane.b32.xlu0 %v390, 8
    %v435 = vpop.permute.xlu0 %434
    %436 = vrot.lane.b32.xlu0 %v391, 8
    %v437 = vpop.permute.xlu0 %436
    %438 = vrot.lane.b32.xlu0 %v392, 8
    %v439 = vpop.permute.xlu0 %438
    %440 = vrot.lane.b32.xlu0 %v393, 8
    %v441 = vpop.permute.xlu0 %440
    %vm458 = vcmask 97344
    %459 = vst.msk [vmem:[#allocation3] sm:$0xff] %vm458, %v411
    %460 = vst.msk [vmem:[#allocation3 + $0x8] sm:$0xff] %vm458, %v413
    %461 = vst.msk [vmem:[#allocation3 + $0x10] sm:$0xff] %vm458, %v415
    %462 = vst.msk [vmem:[#allocation3 + $0x18] sm:$0xff] %vm458, %v417
    %463 = vst.msk [vmem:[#allocation3 + $0x20] sm:$0xff] %vm458, %v419
    %464 = vst.msk [vmem:[#allocation3 + $0x28] sm:$0xff] %vm458, %v421
    %465 = vst.msk [vmem:[#allocation3 + $0x30] sm:$0xff] %vm458, %v423
    %466 = vst.msk [vmem:[#allocation3 + $0x38] sm:$0xff] %vm458, %v425
    %467 = vst.msk [vmem:[#allocation3 + $0x40] sm:$0xff] %vm458, %v427
    %468 = vst.msk [vmem:[#allocation3 + $0x48] sm:$0xff] %vm458, %v429
    %469 = vst.msk [vmem:[#allocation3 + $0x50] sm:$0xff] %vm458, %v431
    %470 = vst.msk [vmem:[#allocation3 + $0x58] sm:$0xff] %vm458, %v433
    %471 = vst.msk [vmem:[#allocation3 + $0x60] sm:$0xff] %vm458, %v435
    %472 = vst.msk [vmem:[#allocation3 + $0x68] sm:$0xff] %vm458, %v437
    %473 = vst.msk [vmem:[#allocation3 + $0x70] sm:$0xff] %vm458, %v439
    %474 = vst.msk [vmem:[#allocation3 + $0x78] sm:$0xff] %vm458, %v441
    %v475 = vld [vmem:[#allocation2 + $0x3] sm:$0xff]
    %v476 = vld [vmem:[#allocation2 + $0x13] sm:$0xff]
    %v477 = vld [vmem:[#allocation2 + $0x23] sm:$0xff]
    %v478 = vld [vmem:[#allocation2 + $0x33] sm:$0xff]
    %v479 = vld [vmem:[#allocation2 + $0x43] sm:$0xff]
    %v480 = vld [vmem:[#allocation2 + $0x53] sm:$0xff]
    %v481 = vld [vmem:[#allocation2 + $0x63] sm:$0xff]
    %v482 = vld [vmem:[#allocation2 + $0x73] sm:$0xff]
    %v483 = vld [vmem:[#allocation2 + $0xc3] sm:$0xff]
    %v484 = vld [vmem:[#allocation2 + $0xd3] sm:$0xff]
    %v485 = vld [vmem:[#allocation2 + $0xe3] sm:$0xff]
    %v486 = vld [vmem:[#allocation2 + $0xf3] sm:$0xff]
    %v487 = vld [vmem:[#allocation2 + $0x103] sm:$0xff]
    %v488 = vld [vmem:[#allocation2 + $0x113] sm:$0xff]
    %v489 = vld [vmem:[#allocation2 + $0x123] sm:$0xff]
    %v490 = vld [vmem:[#allocation2 + $0x133] sm:$0xff]
    %507 = vrot.lane.b32.xlu0 %v475, 12
    %v508 = vpop.permute.xlu0 %507
    %509 = vrot.lane.b32.xlu0 %v476, 12
    %v510 = vpop.permute.xlu0 %509
    %511 = vrot.lane.b32.xlu0 %v477, 12
    %v512 = vpop.permute.xlu0 %511
    %513 = vrot.lane.b32.xlu0 %v478, 12
    %v514 = vpop.permute.xlu0 %513
    %515 = vrot.lane.b32.xlu0 %v479, 12
    %v516 = vpop.permute.xlu0 %515
    %517 = vrot.lane.b32.xlu0 %v480, 12
    %v518 = vpop.permute.xlu0 %517
    %519 = vrot.lane.b32.xlu0 %v481, 12
    %v520 = vpop.permute.xlu0 %519
    %521 = vrot.lane.b32.xlu0 %v482, 12
    %v522 = vpop.permute.xlu0 %521
    %523 = vrot.lane.b32.xlu0 %v483, 12
    %v524 = vpop.permute.xlu0 %523
    %525 = vrot.lane.b32.xlu0 %v484, 12
    %v526 = vpop.permute.xlu0 %525
    %527 = vrot.lane.b32.xlu0 %v485, 12
    %v528 = vpop.permute.xlu0 %527
    %529 = vrot.lane.b32.xlu0 %v486, 12
    %v530 = vpop.permute.xlu0 %529
    %531 = vrot.lane.b32.xlu0 %v487, 12
    %v532 = vpop.permute.xlu0 %531
    %533 = vrot.lane.b32.xlu0 %v488, 12
    %v534 = vpop.permute.xlu0 %533
    %535 = vrot.lane.b32.xlu0 %v489, 12
    %v536 = vpop.permute.xlu0 %535
    %537 = vrot.lane.b32.xlu0 %v490, 12
    %v538 = vpop.permute.xlu0 %537
    %vm555 = vcmask 130144
    %556 = vst.msk [vmem:[#allocation3] sm:$0xff] %vm555, %v508
    %557 = vst.msk [vmem:[#allocation3 + $0x8] sm:$0xff] %vm555, %v510
    %558 = vst.msk [vmem:[#allocation3 + $0x10] sm:$0xff] %vm555, %v512
    %559 = vst.msk [vmem:[#allocation3 + $0x18] sm:$0xff] %vm555, %v514
    %560 = vst.msk [vmem:[#allocation3 + $0x20] sm:$0xff] %vm555, %v516
    %561 = vst.msk [vmem:[#allocation3 + $0x28] sm:$0xff] %vm555, %v518
    %562 = vst.msk [vmem:[#allocation3 + $0x30] sm:$0xff] %vm555, %v520
    %563 = vst.msk [vmem:[#allocation3 + $0x38] sm:$0xff] %vm555, %v522
    %564 = vst.msk [vmem:[#allocation3 + $0x40] sm:$0xff] %vm555, %v524
    %565 = vst.msk [vmem:[#allocation3 + $0x48] sm:$0xff] %vm555, %v526
    %566 = vst.msk [vmem:[#allocation3 + $0x50] sm:$0xff] %vm555, %v528
    %567 = vst.msk [vmem:[#allocation3 + $0x58] sm:$0xff] %vm555, %v530
    %568 = vst.msk [vmem:[#allocation3 + $0x60] sm:$0xff] %vm555, %v532
    %569 = vst.msk [vmem:[#allocation3 + $0x68] sm:$0xff] %vm555, %v534
    %570 = vst.msk [vmem:[#allocation3 + $0x70] sm:$0xff] %vm555, %v536
    %571 = vst.msk [vmem:[#allocation3 + $0x78] sm:$0xff] %vm555, %v538
    %v572 = vld [vmem:[#allocation2 + $0x4] sm:$0xff]
    %v573 = vld [vmem:[#allocation2 + $0x14] sm:$0xff]
    %v574 = vld [vmem:[#allocation2 + $0x24] sm:$0xff]
    %v575 = vld [vmem:[#allocation2 + $0x34] sm:$0xff]
    %v576 = vld [vmem:[#allocation2 + $0x44] sm:$0xff]
    %v577 = vld [vmem:[#allocation2 + $0x54] sm:$0xff]
    %v578 = vld [vmem:[#allocation2 + $0x64] sm:$0xff]
    %v579 = vld [vmem:[#allocation2 + $0x74] sm:$0xff]
    %v580 = vld [vmem:[#allocation2 + $0xc4] sm:$0xff]
    %v581 = vld [vmem:[#allocation2 + $0xd4] sm:$0xff]
    %v582 = vld [vmem:[#allocation2 + $0xe4] sm:$0xff]
    %v583 = vld [vmem:[#allocation2 + $0xf4] sm:$0xff]
    %v584 = vld [vmem:[#allocation2 + $0x104] sm:$0xff]
    %v585 = vld [vmem:[#allocation2 + $0x114] sm:$0xff]
    %v586 = vld [vmem:[#allocation2 + $0x124] sm:$0xff]
    %v587 = vld [vmem:[#allocation2 + $0x134] sm:$0xff]
    %604 = vrot.lane.b32.xlu0 %v572, 16
    %v605 = vpop.permute.xlu0 %604
    %606 = vrot.lane.b32.xlu0 %v573, 16
    %v607 = vpop.permute.xlu0 %606
    %608 = vrot.lane.b32.xlu0 %v574, 16
    %v609 = vpop.permute.xlu0 %608
    %610 = vrot.lane.b32.xlu0 %v575, 16
    %v611 = vpop.permute.xlu0 %610
    %612 = vrot.lane.b32.xlu0 %v576, 16
    %v613 = vpop.permute.xlu0 %612
    %614 = vrot.lane.b32.xlu0 %v577, 16
    %v615 = vpop.permute.xlu0 %614
    %616 = vrot.lane.b32.xlu0 %v578, 16
    %v617 = vpop.permute.xlu0 %616
    %618 = vrot.lane.b32.xlu0 %v579, 16
    %v619 = vpop.permute.xlu0 %618
    %620 = vrot.lane.b32.xlu0 %v580, 16
    %v621 = vpop.permute.xlu0 %620
    %622 = vrot.lane.b32.xlu0 %v581, 16
    %v623 = vpop.permute.xlu0 %622
    %624 = vrot.lane.b32.xlu0 %v582, 16
    %v625 = vpop.permute.xlu0 %624
    %626 = vrot.lane.b32.xlu0 %v583, 16
    %v627 = vpop.permute.xlu0 %626
    %628 = vrot.lane.b32.xlu0 %v584, 16
    %v629 = vpop.permute.xlu0 %628
    %630 = vrot.lane.b32.xlu0 %v585, 16
    %v631 = vpop.permute.xlu0 %630
    %632 = vrot.lane.b32.xlu0 %v586, 16
    %v633 = vpop.permute.xlu0 %632
    %634 = vrot.lane.b32.xlu0 %v587, 16
    %v635 = vpop.permute.xlu0 %634
    %vm652 = vcmask 162944
    %653 = vst.msk [vmem:[#allocation3] sm:$0xff] %vm652, %v605
    %654 = vst.msk [vmem:[#allocation3 + $0x8] sm:$0xff] %vm652, %v607
    %655 = vst.msk [vmem:[#allocation3 + $0x10] sm:$0xff] %vm652, %v609
    %656 = vst.msk [vmem:[#allocation3 + $0x18] sm:$0xff] %vm652, %v611
    %657 = vst.msk [vmem:[#allocation3 + $0x20] sm:$0xff] %vm652, %v613
    %658 = vst.msk [vmem:[#allocation3 + $0x28] sm:$0xff] %vm652, %v615
    %659 = vst.msk [vmem:[#allocation3 + $0x30] sm:$0xff] %vm652, %v617
    %660 = vst.msk [vmem:[#allocation3 + $0x38] sm:$0xff] %vm652, %v619
    %661 = vst.msk [vmem:[#allocation3 + $0x40] sm:$0xff] %vm652, %v621
    %662 = vst.msk [vmem:[#allocation3 + $0x48] sm:$0xff] %vm652, %v623
    %663 = vst.msk [vmem:[#allocation3 + $0x50] sm:$0xff] %vm652, %v625
    %664 = vst.msk [vmem:[#allocation3 + $0x58] sm:$0xff] %vm652, %v627
    %665 = vst.msk [vmem:[#allocation3 + $0x60] sm:$0xff] %vm652, %v629
    %666 = vst.msk [vmem:[#allocation3 + $0x68] sm:$0xff] %vm652, %v631
    %667 = vst.msk [vmem:[#allocation3 + $0x70] sm:$0xff] %vm652, %v633
    %668 = vst.msk [vmem:[#allocation3 + $0x78] sm:$0xff] %vm652, %v635
    %s669 = scalar_lea.vmem [#allocation2], 16
    %v670 = vld [vmem:[%s669] sm:$0xff]
    %v671 = vld [vmem:[%s669 + $0x10] sm:$0xff]
    %v672 = vld [vmem:[%s669 + $0x20] sm:$0xff]
    %v673 = vld [vmem:[%s669 + $0x30] sm:$0xff]
    %v674 = vld [vmem:[%s669 + $0x40] sm:$0xff]
    %v675 = vld [vmem:[%s669 + $0x50] sm:$0xff]
    %v676 = vld [vmem:[%s669 + $0x60] sm:$0xff]
    %v677 = vld [vmem:[%s669 + $0x70] sm:$0xff]
    %v678 = vld [vmem:[%s669 + $0xc0] sm:$0xff]
    %v679 = vld [vmem:[%s669 + $0xd0] sm:$0xff]
    %v680 = vld [vmem:[%s669 + $0xe0] sm:$0xff]
    %v681 = vld [vmem:[%s669 + $0xf0] sm:$0xff]
    %v682 = vld [vmem:[%s669 + $0x100] sm:$0xff]
    %v683 = vld [vmem:[%s669 + $0x110] sm:$0xff]
    %v684 = vld [vmem:[%s669 + $0x120] sm:$0xff]
    %v685 = vld [vmem:[%s669 + $0x130] sm:$0xff]
    %702 = vrot.lane.b32.xlu0 %v670, 20
    %v703 = vpop.permute.xlu0 %702
    %704 = vrot.lane.b32.xlu0 %v671, 20
    %v705 = vpop.permute.xlu0 %704
    %706 = vrot.lane.b32.xlu0 %v672, 20
    %v707 = vpop.permute.xlu0 %706
    %708 = vrot.lane.b32.xlu0 %v673, 20
    %v709 = vpop.permute.xlu0 %708
    %710 = vrot.lane.b32.xlu0 %v674, 20
    %v711 = vpop.permute.xlu0 %710
    %712 = vrot.lane.b32.xlu0 %v675, 20
    %v713 = vpop.permute.xlu0 %712
    %714 = vrot.lane.b32.xlu0 %v676, 20
    %v715 = vpop.permute.xlu0 %714
    %716 = vrot.lane.b32.xlu0 %v677, 20
    %v717 = vpop.permute.xlu0 %716
    %718 = vrot.lane.b32.xlu0 %v678, 20
    %v719 = vpop.permute.xlu0 %718
    %720 = vrot.lane.b32.xlu0 %v679, 20
    %v721 = vpop.permute.xlu0 %720
    %722 = vrot.lane.b32.xlu0 %v680, 20
    %v723 = vpop.permute.xlu0 %722
    %724 = vrot.lane.b32.xlu0 %v681, 20
    %v725 = vpop.permute.xlu0 %724
    %726 = vrot.lane.b32.xlu0 %v682, 20
    %v727 = vpop.permute.xlu0 %726
    %728 = vrot.lane.b32.xlu0 %v683, 20
    %v729 = vpop.permute.xlu0 %728
    %730 = vrot.lane.b32.xlu0 %v684, 20
    %v731 = vpop.permute.xlu0 %730
    %732 = vrot.lane.b32.xlu0 %v685, 20
    %v733 = vpop.permute.xlu0 %732
    %vm750 = vcmask 195744
    %751 = vst.msk [vmem:[#allocation3] sm:$0xff] %vm750, %v703
    %752 = vst.msk [vmem:[#allocation3 + $0x8] sm:$0xff] %vm750, %v705
    %753 = vst.msk [vmem:[#allocation3 + $0x10] sm:$0xff] %vm750, %v707
    %754 = vst.msk [vmem:[#allocation3 + $0x18] sm:$0xff] %vm750, %v709
    %755 = vst.msk [vmem:[#allocation3 + $0x20] sm:$0xff] %vm750, %v711
    %756 = vst.msk [vmem:[#allocation3 + $0x28] sm:$0xff] %vm750, %v713
    %757 = vst.msk [vmem:[#allocation3 + $0x30] sm:$0xff] %vm750, %v715
    %758 = vst.msk [vmem:[#allocation3 + $0x38] sm:$0xff] %vm750, %v717
    %759 = vst.msk [vmem:[#allocation3 + $0x40] sm:$0xff] %vm750, %v719
    %760 = vst.msk [vmem:[#allocation3 + $0x48] sm:$0xff] %vm750, %v721
    %761 = vst.msk [vmem:[#allocation3 + $0x50] sm:$0xff] %vm750, %v723
    %762 = vst.msk [vmem:[#allocation3 + $0x58] sm:$0xff] %vm750, %v725
    %763 = vst.msk [vmem:[#allocation3 + $0x60] sm:$0xff] %vm750, %v727
    %764 = vst.msk [vmem:[#allocation3 + $0x68] sm:$0xff] %vm750, %v729
    %765 = vst.msk [vmem:[#allocation3 + $0x70] sm:$0xff] %vm750, %v731
    %766 = vst.msk [vmem:[#allocation3 + $0x78] sm:$0xff] %vm750, %v733
    %v767 = vld [vmem:[%s669 + $0x1] sm:$0xff]
    %v768 = vld [vmem:[%s669 + $0x11] sm:$0xff]
    %v769 = vld [vmem:[%s669 + $0x21] sm:$0xff]
    %v770 = vld [vmem:[%s669 + $0x31] sm:$0xff]
    %v771 = vld [vmem:[%s669 + $0x41] sm:$0xff]
    %v772 = vld [vmem:[%s669 + $0x51] sm:$0xff]
    %v773 = vld [vmem:[%s669 + $0x61] sm:$0xff]
    %v774 = vld [vmem:[%s669 + $0x71] sm:$0xff]
    %v775 = vld [vmem:[%s669 + $0xc1] sm:$0xff]
    %v776 = vld [vmem:[%s669 + $0xd1] sm:$0xff]
    %v777 = vld [vmem:[%s669 + $0xe1] sm:$0xff]
    %v778 = vld [vmem:[%s669 + $0xf1] sm:$0xff]
    %v779 = vld [vmem:[%s669 + $0x101] sm:$0xff]
    %v780 = vld [vmem:[%s669 + $0x111] sm:$0xff]
    %v781 = vld [vmem:[%s669 + $0x121] sm:$0xff]
    %v782 = vld [vmem:[%s669 + $0x131] sm:$0xff]
    %799 = vrot.lane.b32.xlu0 %v767, 24
    %v800 = vpop.permute.xlu0 %799
    %801 = vrot.lane.b32.xlu0 %v768, 24
    %v802 = vpop.permute.xlu0 %801
    %803 = vrot.lane.b32.xlu0 %v769, 24
    %v804 = vpop.permute.xlu0 %803
    %805 = vrot.lane.b32.xlu0 %v770, 24
    %v806 = vpop.permute.xlu0 %805
    %807 = vrot.lane.b32.xlu0 %v771, 24
    %v808 = vpop.permute.xlu0 %807
    %809 = vrot.lane.b32.xlu0 %v772, 24
    %v810 = vpop.permute.xlu0 %809
    %811 = vrot.lane.b32.xlu0 %v773, 24
    %v812 = vpop.permute.xlu0 %811
    %813 = vrot.lane.b32.xlu0 %v774, 24
    %v814 = vpop.permute.xlu0 %813
    %815 = vrot.lane.b32.xlu0 %v775, 24
    %v816 = vpop.permute.xlu0 %815
    %817 = vrot.lane.b32.xlu0 %v776, 24
    %v818 = vpop.permute.xlu0 %817
    %819 = vrot.lane.b32.xlu0 %v777, 24
    %v820 = vpop.permute.xlu0 %819
    %821 = vrot.lane.b32.xlu0 %v778, 24
    %v822 = vpop.permute.xlu0 %821
    %823 = vrot.lane.b32.xlu0 %v779, 24
    %v824 = vpop.permute.xlu0 %823
    %825 = vrot.lane.b32.xlu0 %v780, 24
    %v826 = vpop.permute.xlu0 %825
    %827 = vrot.lane.b32.xlu0 %v781, 24
    %v828 = vpop.permute.xlu0 %827
    %829 = vrot.lane.b32.xlu0 %v782, 24
    %v830 = vpop.permute.xlu0 %829
    %vm847 = vcmask 228544
    %848 = vst.msk [vmem:[#allocation3] sm:$0xff] %vm847, %v800
    %849 = vst.msk [vmem:[#allocation3 + $0x8] sm:$0xff] %vm847, %v802
    %850 = vst.msk [vmem:[#allocation3 + $0x10] sm:$0xff] %vm847, %v804
    %851 = vst.msk [vmem:[#allocation3 + $0x18] sm:$0xff] %vm847, %v806
    %852 = vst.msk [vmem:[#allocation3 + $0x20] sm:$0xff] %vm847, %v808
    %853 = vst.msk [vmem:[#allocation3 + $0x28] sm:$0xff] %vm847, %v810
    %854 = vst.msk [vmem:[#allocation3 + $0x30] sm:$0xff] %vm847, %v812
    %855 = vst.msk [vmem:[#allocation3 + $0x38] sm:$0xff] %vm847, %v814
    %856 = vst.msk [vmem:[#allocation3 + $0x40] sm:$0xff] %vm847, %v816
    %857 = vst.msk [vmem:[#allocation3 + $0x48] sm:$0xff] %vm847, %v818
    %858 = vst.msk [vmem:[#allocation3 + $0x50] sm:$0xff] %vm847, %v820
    %859 = vst.msk [vmem:[#allocation3 + $0x58] sm:$0xff] %vm847, %v822
    %860 = vst.msk [vmem:[#allocation3 + $0x60] sm:$0xff] %vm847, %v824
    %861 = vst.msk [vmem:[#allocation3 + $0x68] sm:$0xff] %vm847, %v826
    %862 = vst.msk [vmem:[#allocation3 + $0x70] sm:$0xff] %vm847, %v828
    %863 = vst.msk [vmem:[#allocation3 + $0x78] sm:$0xff] %vm847, %v830
    %v864 = vld [vmem:[%s669 + $0x2] sm:$0xff]
    %v865 = vld [vmem:[%s669 + $0x12] sm:$0xff]
    %v866 = vld [vmem:[%s669 + $0x22] sm:$0xff]
    %v867 = vld [vmem:[%s669 + $0x32] sm:$0xff]
    %v868 = vld [vmem:[%s669 + $0x42] sm:$0xff]
    %v869 = vld [vmem:[%s669 + $0x52] sm:$0xff]
    %v870 = vld [vmem:[%s669 + $0x62] sm:$0xff]
    %v871 = vld [vmem:[%s669 + $0x72] sm:$0xff]
    %v872 = vld [vmem:[%s669 + $0xc2] sm:$0xff]
    %v873 = vld [vmem:[%s669 + $0xd2] sm:$0xff]
    %v874 = vld [vmem:[%s669 + $0xe2] sm:$0xff]
    %v875 = vld [vmem:[%s669 + $0xf2] sm:$0xff]
    %v876 = vld [vmem:[%s669 + $0x102] sm:$0xff]
    %v877 = vld [vmem:[%s669 + $0x112] sm:$0xff]
    %v878 = vld [vmem:[%s669 + $0x122] sm:$0xff]
    %v879 = vld [vmem:[%s669 + $0x132] sm:$0xff]
    %896 = vrot.lane.b32.xlu0 %v864, 28
    %v897 = vpop.permute.xlu0 %896
    %898 = vrot.lane.b32.xlu0 %v865, 28
    %v899 = vpop.permute.xlu0 %898
    %900 = vrot.lane.b32.xlu0 %v866, 28
    %v901 = vpop.permute.xlu0 %900
    %902 = vrot.lane.b32.xlu0 %v867, 28
    %v903 = vpop.permute.xlu0 %902
    %904 = vrot.lane.b32.xlu0 %v868, 28
    %v905 = vpop.permute.xlu0 %904
    %906 = vrot.lane.b32.xlu0 %v869, 28
    %v907 = vpop.permute.xlu0 %906
    %908 = vrot.lane.b32.xlu0 %v870, 28
    %v909 = vpop.permute.xlu0 %908
    %910 = vrot.lane.b32.xlu0 %v871, 28
    %v911 = vpop.permute.xlu0 %910
    %912 = vrot.lane.b32.xlu0 %v872, 28
    %v913 = vpop.permute.xlu0 %912
    %914 = vrot.lane.b32.xlu0 %v873, 28
    %v915 = vpop.permute.xlu0 %914
    %916 = vrot.lane.b32.xlu0 %v874, 28
    %v917 = vpop.permute.xlu0 %916
    %918 = vrot.lane.b32.xlu0 %v875, 28
    %v919 = vpop.permute.xlu0 %918
    %920 = vrot.lane.b32.xlu0 %v876, 28
    %v921 = vpop.permute.xlu0 %920
    %922 = vrot.lane.b32.xlu0 %v877, 28
    %v923 = vpop.permute.xlu0 %922
    %924 = vrot.lane.b32.xlu0 %v878, 28
    %v925 = vpop.permute.xlu0 %924
    %926 = vrot.lane.b32.xlu0 %v879, 28
    %v927 = vpop.permute.xlu0 %926
    %vm944 = vcmask 261344
    %945 = vst.msk [vmem:[#allocation3] sm:$0xff] %vm944, %v897
    %946 = vst.msk [vmem:[#allocation3 + $0x8] sm:$0xff] %vm944, %v899
    %947 = vst.msk [vmem:[#allocation3 + $0x10] sm:$0xff] %vm944, %v901
    %948 = vst.msk [vmem:[#allocation3 + $0x18] sm:$0xff] %vm944, %v903
    %949 = vst.msk [vmem:[#allocation3 + $0x20] sm:$0xff] %vm944, %v905
    %950 = vst.msk [vmem:[#allocation3 + $0x28] sm:$0xff] %vm944, %v907
    %951 = vst.msk [vmem:[#allocation3 + $0x30] sm:$0xff] %vm944, %v909
    %952 = vst.msk [vmem:[#allocation3 + $0x38] sm:$0xff] %vm944, %v911
    %953 = vst.msk [vmem:[#allocation3 + $0x40] sm:$0xff] %vm944, %v913
    %954 = vst.msk [vmem:[#allocation3 + $0x48] sm:$0xff] %vm944, %v915
    %955 = vst.msk [vmem:[#allocation3 + $0x50] sm:$0xff] %vm944, %v917
    %956 = vst.msk [vmem:[#allocation3 + $0x58] sm:$0xff] %vm944, %v919
    %957 = vst.msk [vmem:[#allocation3 + $0x60] sm:$0xff] %vm944, %v921
    %958 = vst.msk [vmem:[#allocation3 + $0x68] sm:$0xff] %vm944, %v923
    %959 = vst.msk [vmem:[#allocation3 + $0x70] sm:$0xff] %vm944, %v925
    %960 = vst.msk [vmem:[#allocation3 + $0x78] sm:$0xff] %vm944, %v927
    %v961 = vld [vmem:[%s669 + $0x3] sm:$0xff]
    %v962 = vld [vmem:[%s669 + $0x13] sm:$0xff]
    %v963 = vld [vmem:[%s669 + $0x23] sm:$0xff]
    %v964 = vld [vmem:[%s669 + $0x33] sm:$0xff]
    %v965 = vld [vmem:[%s669 + $0x43] sm:$0xff]
    %v966 = vld [vmem:[%s669 + $0x53] sm:$0xff]
    %v967 = vld [vmem:[%s669 + $0x63] sm:$0xff]
    %v968 = vld [vmem:[%s669 + $0x73] sm:$0xff]
    %v969 = vld [vmem:[%s669 + $0xc3] sm:$0xff]
    %v970 = vld [vmem:[%s669 + $0xd3] sm:$0xff]
    %v971 = vld [vmem:[%s669 + $0xe3] sm:$0xff]
    %v972 = vld [vmem:[%s669 + $0xf3] sm:$0xff]
    %v973 = vld [vmem:[%s669 + $0x103] sm:$0xff]
    %v974 = vld [vmem:[%s669 + $0x113] sm:$0xff]
    %v975 = vld [vmem:[%s669 + $0x123] sm:$0xff]
    %v976 = vld [vmem:[%s669 + $0x133] sm:$0xff]
    %993 = vrot.lane.b32.xlu0 %v961, 32
    %v994 = vpop.permute.xlu0 %993
    %995 = vrot.lane.b32.xlu0 %v962, 32
    %v996 = vpop.permute.xlu0 %995
    %997 = vrot.lane.b32.xlu0 %v963, 32
    %v998 = vpop.permute.xlu0 %997
    %999 = vrot.lane.b32.xlu0 %v964, 32
    %v1000 = vpop.permute.xlu0 %999
    %1001 = vrot.lane.b32.xlu0 %v965, 32
    %v1002 = vpop.permute.xlu0 %1001
    %1003 = vrot.lane.b32.xlu0 %v966, 32
    %v1004 = vpop.permute.xlu0 %1003
    %1005 = vrot.lane.b32.xlu0 %v967, 32
    %v1006 = vpop.permute.xlu0 %1005
    %1007 = vrot.lane.b32.xlu0 %v968, 32
    %v1008 = vpop.permute.xlu0 %1007
    %1009 = vrot.lane.b32.xlu0 %v969, 32
    %v1010 = vpop.permute.xlu0 %1009
    %1011 = vrot.lane.b32.xlu0 %v970, 32
    %v1012 = vpop.permute.xlu0 %1011
    %1013 = vrot.lane.b32.xlu0 %v971, 32
    %v1014 = vpop.permute.xlu0 %1013
    %1015 = vrot.lane.b32.xlu0 %v972, 32
    %v1016 = vpop.permute.xlu0 %1015
    %1017 = vrot.lane.b32.xlu0 %v973, 32
    %v1018 = vpop.permute.xlu0 %1017
    %1019 = vrot.lane.b32.xlu0 %v974, 32
    %v1020 = vpop.permute.xlu0 %1019
    %1021 = vrot.lane.b32.xlu0 %v975, 32
    %v1022 = vpop.permute.xlu0 %1021
    %1023 = vrot.lane.b32.xlu0 %v976, 32
    %v1024 = vpop.permute.xlu0 %1023
    %vm1041 = vcmask 294144
    %1042 = vst.msk [vmem:[#allocation3] sm:$0xff] %vm1041, %v994
    %1043 = vst.msk [vmem:[#allocation3 + $0x8] sm:$0xff] %vm1041, %v996
    %1044 = vst.msk [vmem:[#allocation3 + $0x10] sm:$0xff] %vm1041, %v998
    %1045 = vst.msk [vmem:[#allocation3 + $0x18] sm:$0xff] %vm1041, %v1000
    %1046 = vst.msk [vmem:[#allocation3 + $0x20] sm:$0xff] %vm1041, %v1002
    %1047 = vst.msk [vmem:[#allocation3 + $0x28] sm:$0xff] %vm1041, %v1004
    %1048 = vst.msk [vmem:[#allocation3 + $0x30] sm:$0xff] %vm1041, %v1006
    %1049 = vst.msk [vmem:[#allocation3 + $0x38] sm:$0xff] %vm1041, %v1008
    %1050 = vst.msk [vmem:[#allocation3 + $0x40] sm:$0xff] %vm1041, %v1010
    %1051 = vst.msk [vmem:[#allocation3 + $0x48] sm:$0xff] %vm1041, %v1012
    %1052 = vst.msk [vmem:[#allocation3 + $0x50] sm:$0xff] %vm1041, %v1014
    %1053 = vst.msk [vmem:[#allocation3 + $0x58] sm:$0xff] %vm1041, %v1016
    %1054 = vst.msk [vmem:[#allocation3 + $0x60] sm:$0xff] %vm1041, %v1018
    %1055 = vst.msk [vmem:[#allocation3 + $0x68] sm:$0xff] %vm1041, %v1020
    %1056 = vst.msk [vmem:[#allocation3 + $0x70] sm:$0xff] %vm1041, %v1022
    %1057 = vst.msk [vmem:[#allocation3 + $0x78] sm:$0xff] %vm1041, %v1024
    %v1058 = vld [vmem:[%s669 + $0x4] sm:$0xff]
    %v1059 = vld [vmem:[%s669 + $0x14] sm:$0xff]
    %v1060 = vld [vmem:[%s669 + $0x24] sm:$0xff]
    %v1061 = vld [vmem:[%s669 + $0x34] sm:$0xff]
    %v1062 = vld [vmem:[%s669 + $0x44] sm:$0xff]
    %v1063 = vld [vmem:[%s669 + $0x54] sm:$0xff]
    %v1064 = vld [vmem:[%s669 + $0x64] sm:$0xff]
    %v1065 = vld [vmem:[%s669 + $0x74] sm:$0xff]
    %v1066 = vld [vmem:[%s669 + $0xc4] sm:$0xff]
    %v1067 = vld [vmem:[%s669 + $0xd4] sm:$0xff]
    %v1068 = vld [vmem:[%s669 + $0xe4] sm:$0xff]
    %v1069 = vld [vmem:[%s669 + $0xf4] sm:$0xff]
    %v1070 = vld [vmem:[%s669 + $0x104] sm:$0xff]
    %v1071 = vld [vmem:[%s669 + $0x114] sm:$0xff]
    %v1072 = vld [vmem:[%s669 + $0x124] sm:$0xff]
    %v1073 = vld [vmem:[%s669 + $0x134] sm:$0xff]
    %1090 = vrot.lane.b32.xlu0 %v1058, 36
    %v1091 = vpop.permute.xlu0 %1090
    %1092 = vrot.lane.b32.xlu0 %v1059, 36
    %v1093 = vpop.permute.xlu0 %1092
    %1094 = vrot.lane.b32.xlu0 %v1060, 36
    %v1095 = vpop.permute.xlu0 %1094
    %1096 = vrot.lane.b32.xlu0 %v1061, 36
    %v1097 = vpop.permute.xlu0 %1096
    %1098 = vrot.lane.b32.xlu0 %v1062, 36
    %v1099 = vpop.permute.xlu0 %1098
    %1100 = vrot.lane.b32.xlu0 %v1063, 36
    %v1101 = vpop.permute.xlu0 %1100
    %1102 = vrot.lane.b32.xlu0 %v1064, 36
    %v1103 = vpop.permute.xlu0 %1102
    %1104 = vrot.lane.b32.xlu0 %v1065, 36
    %v1105 = vpop.permute.xlu0 %1104
    %1106 = vrot.lane.b32.xlu0 %v1066, 36
    %v1107 = vpop.permute.xlu0 %1106
    %1108 = vrot.lane.b32.xlu0 %v1067, 36
    %v1109 = vpop.permute.xlu0 %1108
    %1110 = vrot.lane.b32.xlu0 %v1068, 36
    %v1111 = vpop.permute.xlu0 %1110
    %1112 = vrot.lane.b32.xlu0 %v1069, 36
    %v1113 = vpop.permute.xlu0 %1112
    %1114 = vrot.lane.b32.xlu0 %v1070, 36
    %v1115 = vpop.permute.xlu0 %1114
    %1116 = vrot.lane.b32.xlu0 %v1071, 36
    %v1117 = vpop.permute.xlu0 %1116
    %1118 = vrot.lane.b32.xlu0 %v1072, 36
    %v1119 = vpop.permute.xlu0 %1118
    %1120 = vrot.lane.b32.xlu0 %v1073, 36
    %v1121 = vpop.permute.xlu0 %1120
    %vm1138 = vcmask 326944
    %1139 = vst.msk [vmem:[#allocation3] sm:$0xff] %vm1138, %v1091
    %1140 = vst.msk [vmem:[#allocation3 + $0x8] sm:$0xff] %vm1138, %v1093
    %1141 = vst.msk [vmem:[#allocation3 + $0x10] sm:$0xff] %vm1138, %v1095
    %1142 = vst.msk [vmem:[#allocation3 + $0x18] sm:$0xff] %vm1138, %v1097
    %1143 = vst.msk [vmem:[#allocation3 + $0x20] sm:$0xff] %vm1138, %v1099
    %1144 = vst.msk [vmem:[#allocation3 + $0x28] sm:$0xff] %vm1138, %v1101
    %1145 = vst.msk [vmem:[#allocation3 + $0x30] sm:$0xff] %vm1138, %v1103
    %1146 = vst.msk [vmem:[#allocation3 + $0x38] sm:$0xff] %vm1138, %v1105
    %1147 = vst.msk [vmem:[#allocation3 + $0x40] sm:$0xff] %vm1138, %v1107
    %1148 = vst.msk [vmem:[#allocation3 + $0x48] sm:$0xff] %vm1138, %v1109
    %1149 = vst.msk [vmem:[#allocation3 + $0x50] sm:$0xff] %vm1138, %v1111
    %1150 = vst.msk [vmem:[#allocation3 + $0x58] sm:$0xff] %vm1138, %v1113
    %1151 = vst.msk [vmem:[#allocation3 + $0x60] sm:$0xff] %vm1138, %v1115
    %1152 = vst.msk [vmem:[#allocation3 + $0x68] sm:$0xff] %vm1138, %v1117
    %1153 = vst.msk [vmem:[#allocation3 + $0x70] sm:$0xff] %vm1138, %v1119
    %1154 = vst.msk [vmem:[#allocation3 + $0x78] sm:$0xff] %vm1138, %v1121
    %v1155 = vld [vmem:[%s232] sm:$0xff]
    %v1156 = vld [vmem:[%s232 + $0x10] sm:$0xff]
    %v1157 = vld [vmem:[%s232 + $0x20] sm:$0xff]
    %v1158 = vld [vmem:[%s232 + $0x30] sm:$0xff]
    %v1159 = vld [vmem:[%s232 + $0x40] sm:$0xff]
    %v1160 = vld [vmem:[%s232 + $0x50] sm:$0xff]
    %v1161 = vld [vmem:[%s232 + $0x60] sm:$0xff]
    %v1162 = vld [vmem:[%s232 + $0x70] sm:$0xff]
    %v1163 = vld [vmem:[%s232 + $0xc0] sm:$0xff]
    %v1164 = vld [vmem:[%s232 + $0xd0] sm:$0xff]
    %v1165 = vld [vmem:[%s232 + $0xe0] sm:$0xff]
    %v1166 = vld [vmem:[%s232 + $0xf0] sm:$0xff]
    %v1167 = vld [vmem:[%s232 + $0x100] sm:$0xff]
    %v1168 = vld [vmem:[%s232 + $0x110] sm:$0xff]
    %v1169 = vld [vmem:[%s232 + $0x120] sm:$0xff]
    %v1170 = vld [vmem:[%s232 + $0x130] sm:$0xff]
    %1187 = vrot.lane.b32.xlu0 %v1155, 40
    %v1188 = vpop.permute.xlu0 %1187
    %1189 = vrot.lane.b32.xlu0 %v1156, 40
    %v1190 = vpop.permute.xlu0 %1189
    %1191 = vrot.lane.b32.xlu0 %v1157, 40
    %v1192 = vpop.permute.xlu0 %1191
    %1193 = vrot.lane.b32.xlu0 %v1158, 40
    %v1194 = vpop.permute.xlu0 %1193
    %1195 = vrot.lane.b32.xlu0 %v1159, 40
    %v1196 = vpop.permute.xlu0 %1195
    %1197 = vrot.lane.b32.xlu0 %v1160, 40
    %v1198 = vpop.permute.xlu0 %1197
    %1199 = vrot.lane.b32.xlu0 %v1161, 40
    %v1200 = vpop.permute.xlu0 %1199
    %1201 = vrot.lane.b32.xlu0 %v1162, 40
    %v1202 = vpop.permute.xlu0 %1201
    %1203 = vrot.lane.b32.xlu0 %v1163, 40
    %v1204 = vpop.permute.xlu0 %1203
    %1205 = vrot.lane.b32.xlu0 %v1164, 40
    %v1206 = vpop.permute.xlu0 %1205
    %1207 = vrot.lane.b32.xlu0 %v1165, 40
    %v1208 = vpop.permute.xlu0 %1207
    %1209 = vrot.lane.b32.xlu0 %v1166, 40
    %v1210 = vpop.permute.xlu0 %1209
    %1211 = vrot.lane.b32.xlu0 %v1167, 40
    %v1212 = vpop.permute.xlu0 %1211
    %1213 = vrot.lane.b32.xlu0 %v1168, 40
    %v1214 = vpop.permute.xlu0 %1213
    %1215 = vrot.lane.b32.xlu0 %v1169, 40
    %v1216 = vpop.permute.xlu0 %1215
    %1217 = vrot.lane.b32.xlu0 %v1170, 40
    %v1218 = vpop.permute.xlu0 %1217
    %vm1235 = vcmask 359744
    %1236 = vst.msk [vmem:[#allocation3] sm:$0xff] %vm1235, %v1188
    %1237 = vst.msk [vmem:[#allocation3 + $0x8] sm:$0xff] %vm1235, %v1190
    %1238 = vst.msk [vmem:[#allocation3 + $0x10] sm:$0xff] %vm1235, %v1192
    %1239 = vst.msk [vmem:[#allocation3 + $0x18] sm:$0xff] %vm1235, %v1194
    %1240 = vst.msk [vmem:[#allocation3 + $0x20] sm:$0xff] %vm1235, %v1196
    %1241 = vst.msk [vmem:[#allocation3 + $0x28] sm:$0xff] %vm1235, %v1198
    %1242 = vst.msk [vmem:[#allocation3 + $0x30] sm:$0xff] %vm1235, %v1200
    %1243 = vst.msk [vmem:[#allocation3 + $0x38] sm:$0xff] %vm1235, %v1202
    %1244 = vst.msk [vmem:[#allocation3 + $0x40] sm:$0xff] %vm1235, %v1204
    %1245 = vst.msk [vmem:[#allocation3 + $0x48] sm:$0xff] %vm1235, %v1206
    %1246 = vst.msk [vmem:[#allocation3 + $0x50] sm:$0xff] %vm1235, %v1208
    %1247 = vst.msk [vmem:[#allocation3 + $0x58] sm:$0xff] %vm1235, %v1210
    %1248 = vst.msk [vmem:[#allocation3 + $0x60] sm:$0xff] %vm1235, %v1212
    %1249 = vst.msk [vmem:[#allocation3 + $0x68] sm:$0xff] %vm1235, %v1214
    %1250 = vst.msk [vmem:[#allocation3 + $0x70] sm:$0xff] %vm1235, %v1216
    %1251 = vst.msk [vmem:[#allocation3 + $0x78] sm:$0xff] %vm1235, %v1218
    %v1252 = vld [vmem:[%s232 + $0x1] sm:$0xff]
    %v1253 = vld [vmem:[%s232 + $0x11] sm:$0xff]
    %v1254 = vld [vmem:[%s232 + $0x21] sm:$0xff]
    %v1255 = vld [vmem:[%s232 + $0x31] sm:$0xff]
    %v1256 = vld [vmem:[%s232 + $0x41] sm:$0xff]
    %v1257 = vld [vmem:[%s232 + $0x51] sm:$0xff]
    %v1258 = vld [vmem:[%s232 + $0x61] sm:$0xff]
    %v1259 = vld [vmem:[%s232 + $0x71] sm:$0xff]
    %v1260 = vld [vmem:[%s232 + $0xc1] sm:$0xff]
    %v1261 = vld [vmem:[%s232 + $0xd1] sm:$0xff]
    %v1262 = vld [vmem:[%s232 + $0xe1] sm:$0xff]
    %v1263 = vld [vmem:[%s232 + $0xf1] sm:$0xff]
    %v1264 = vld [vmem:[%s232 + $0x101] sm:$0xff]
    %v1265 = vld [vmem:[%s232 + $0x111] sm:$0xff]
    %v1266 = vld [vmem:[%s232 + $0x121] sm:$0xff]
    %v1267 = vld [vmem:[%s232 + $0x131] sm:$0xff]
    %1284 = vrot.lane.b32.xlu0 %v1252, 44
    %v1285 = vpop.permute.xlu0 %1284
    %1286 = vrot.lane.b32.xlu0 %v1253, 44
    %v1287 = vpop.permute.xlu0 %1286
    %1288 = vrot.lane.b32.xlu0 %v1254, 44
    %v1289 = vpop.permute.xlu0 %1288
    %1290 = vrot.lane.b32.xlu0 %v1255, 44
    %v1291 = vpop.permute.xlu0 %1290
    %1292 = vrot.lane.b32.xlu0 %v1256, 44
    %v1293 = vpop.permute.xlu0 %1292
    %1294 = vrot.lane.b32.xlu0 %v1257, 44
    %v1295 = vpop.permute.xlu0 %1294
    %1296 = vrot.lane.b32.xlu0 %v1258, 44
    %v1297 = vpop.permute.xlu0 %1296
    %1298 = vrot.lane.b32.xlu0 %v1259, 44
    %v1299 = vpop.permute.xlu0 %1298
    %1300 = vrot.lane.b32.xlu0 %v1260, 44
    %v1301 = vpop.permute.xlu0 %1300
    %1302 = vrot.lane.b32.xlu0 %v1261, 44
    %v1303 = vpop.permute.xlu0 %1302
    %1304 = vrot.lane.b32.xlu0 %v1262, 44
    %v1305 = vpop.permute.xlu0 %1304
    %1306 = vrot.lane.b32.xlu0 %v1263, 44
    %v1307 = vpop.permute.xlu0 %1306
    %1308 = vrot.lane.b32.xlu0 %v1264, 44
    %v1309 = vpop.permute.xlu0 %1308
    %1310 = vrot.lane.b32.xlu0 %v1265, 44
    %v1311 = vpop.permute.xlu0 %1310
    %1312 = vrot.lane.b32.xlu0 %v1266, 44
    %v1313 = vpop.permute.xlu0 %1312
    %1314 = vrot.lane.b32.xlu0 %v1267, 44
    %v1315 = vpop.permute.xlu0 %1314
    %vm1332 = vcmask 392544
    %1333 = vst.msk [vmem:[#allocation3] sm:$0xff] %vm1332, %v1285
    %1334 = vst.msk [vmem:[#allocation3 + $0x8] sm:$0xff] %vm1332, %v1287
    %1335 = vst.msk [vmem:[#allocation3 + $0x10] sm:$0xff] %vm1332, %v1289
    %1336 = vst.msk [vmem:[#allocation3 + $0x18] sm:$0xff] %vm1332, %v1291
    %1337 = vst.msk [vmem:[#allocation3 + $0x20] sm:$0xff] %vm1332, %v1293
    %1338 = vst.msk [vmem:[#allocation3 + $0x28] sm:$0xff] %vm1332, %v1295
    %1339 = vst.msk [vmem:[#allocation3 + $0x30] sm:$0xff] %vm1332, %v1297
    %1340 = vst.msk [vmem:[#allocation3 + $0x38] sm:$0xff] %vm1332, %v1299
    %1341 = vst.msk [vmem:[#allocation3 + $0x40] sm:$0xff] %vm1332, %v1301
    %1342 = vst.msk [vmem:[#allocation3 + $0x48] sm:$0xff] %vm1332, %v1303
    %1343 = vst.msk [vmem:[#allocation3 + $0x50] sm:$0xff] %vm1332, %v1305
    %1344 = vst.msk [vmem:[#allocation3 + $0x58] sm:$0xff] %vm1332, %v1307
    %1345 = vst.msk [vmem:[#allocation3 + $0x60] sm:$0xff] %vm1332, %v1309
    %1346 = vst.msk [vmem:[#allocation3 + $0x68] sm:$0xff] %vm1332, %v1311
    %1347 = vst.msk [vmem:[#allocation3 + $0x70] sm:$0xff] %vm1332, %v1313
    %1348 = vst.msk [vmem:[#allocation3 + $0x78] sm:$0xff] %vm1332, %v1315
    %v1349 = vld [vmem:[%s232 + $0x2] sm:$0xff]
    %v1350 = vld [vmem:[%s232 + $0x12] sm:$0xff]
    %v1351 = vld [vmem:[%s232 + $0x22] sm:$0xff]
    %v1352 = vld [vmem:[%s232 + $0x32] sm:$0xff]
    %v1353 = vld [vmem:[%s232 + $0x42] sm:$0xff]
    %v1354 = vld [vmem:[%s232 + $0x52] sm:$0xff]
    %v1355 = vld [vmem:[%s232 + $0x62] sm:$0xff]
    %v1356 = vld [vmem:[%s232 + $0x72] sm:$0xff]
    %v1357 = vld [vmem:[%s232 + $0xc2] sm:$0xff]
    %v1358 = vld [vmem:[%s232 + $0xd2] sm:$0xff]
    %v1359 = vld [vmem:[%s232 + $0xe2] sm:$0xff]
    %v1360 = vld [vmem:[%s232 + $0xf2] sm:$0xff]
    %v1361 = vld [vmem:[%s232 + $0x102] sm:$0xff]
    %v1362 = vld [vmem:[%s232 + $0x112] sm:$0xff]
    %v1363 = vld [vmem:[%s232 + $0x122] sm:$0xff]
    %v1364 = vld [vmem:[%s232 + $0x132] sm:$0xff]
    %1381 = vrot.lane.b32.xlu0 %v1349, 48
    %v1382 = vpop.permute.xlu0 %1381
    %1383 = vrot.lane.b32.xlu0 %v1350, 48
    %v1384 = vpop.permute.xlu0 %1383
    %1385 = vrot.lane.b32.xlu0 %v1351, 48
    %v1386 = vpop.permute.xlu0 %1385
    %1387 = vrot.lane.b32.xlu0 %v1352, 48
    %v1388 = vpop.permute.xlu0 %1387
    %1389 = vrot.lane.b32.xlu0 %v1353, 48
    %v1390 = vpop.permute.xlu0 %1389
    %1391 = vrot.lane.b32.xlu0 %v1354, 48
    %v1392 = vpop.permute.xlu0 %1391
    %1393 = vrot.lane.b32.xlu0 %v1355, 48
    %v1394 = vpop.permute.xlu0 %1393
    %1395 = vrot.lane.b32.xlu0 %v1356, 48
    %v1396 = vpop.permute.xlu0 %1395
    %1397 = vrot.lane.b32.xlu0 %v1357, 48
    %v1398 = vpop.permute.xlu0 %1397
    %1399 = vrot.lane.b32.xlu0 %v1358, 48
    %v1400 = vpop.permute.xlu0 %1399
    %1401 = vrot.lane.b32.xlu0 %v1359, 48
    %v1402 = vpop.permute.xlu0 %1401
    %1403 = vrot.lane.b32.xlu0 %v1360, 48
    %v1404 = vpop.permute.xlu0 %1403
    %1405 = vrot.lane.b32.xlu0 %v1361, 48
    %v1406 = vpop.permute.xlu0 %1405
    %1407 = vrot.lane.b32.xlu0 %v1362, 48
    %v1408 = vpop.permute.xlu0 %1407
    %1409 = vrot.lane.b32.xlu0 %v1363, 48
    %v1410 = vpop.permute.xlu0 %1409
    %1411 = vrot.lane.b32.xlu0 %v1364, 48
    %v1412 = vpop.permute.xlu0 %1411
    %vm1429 = vcmask 425344
    %1430 = vst.msk [vmem:[#allocation3] sm:$0xff] %vm1429, %v1382
    %1431 = vst.msk [vmem:[#allocation3 + $0x8] sm:$0xff] %vm1429, %v1384
    %1432 = vst.msk [vmem:[#allocation3 + $0x10] sm:$0xff] %vm1429, %v1386
    %1433 = vst.msk [vmem:[#allocation3 + $0x18] sm:$0xff] %vm1429, %v1388
    %1434 = vst.msk [vmem:[#allocation3 + $0x20] sm:$0xff] %vm1429, %v1390
    %1435 = vst.msk [vmem:[#allocation3 + $0x28] sm:$0xff] %vm1429, %v1392
    %1436 = vst.msk [vmem:[#allocation3 + $0x30] sm:$0xff] %vm1429, %v1394
    %1437 = vst.msk [vmem:[#allocation3 + $0x38] sm:$0xff] %vm1429, %v1396
    %1438 = vst.msk [vmem:[#allocation3 + $0x40] sm:$0xff] %vm1429, %v1398
    %1439 = vst.msk [vmem:[#allocation3 + $0x48] sm:$0xff] %vm1429, %v1400
    %1440 = vst.msk [vmem:[#allocation3 + $0x50] sm:$0xff] %vm1429, %v1402
    %1441 = vst.msk [vmem:[#allocation3 + $0x58] sm:$0xff] %vm1429, %v1404
    %1442 = vst.msk [vmem:[#allocation3 + $0x60] sm:$0xff] %vm1429, %v1406
    %1443 = vst.msk [vmem:[#allocation3 + $0x68] sm:$0xff] %vm1429, %v1408
    %1444 = vst.msk [vmem:[#allocation3 + $0x70] sm:$0xff] %vm1429, %v1410
    %1445 = vst.msk [vmem:[#allocation3 + $0x78] sm:$0xff] %vm1429, %v1412
    %v1446 = vld [vmem:[%s232 + $0x3] sm:$0xff]
    %v1447 = vld [vmem:[%s232 + $0x13] sm:$0xff]
    %v1448 = vld [vmem:[%s232 + $0x23] sm:$0xff]
    %v1449 = vld [vmem:[%s232 + $0x33] sm:$0xff]
    %v1450 = vld [vmem:[%s232 + $0x43] sm:$0xff]
    %v1451 = vld [vmem:[%s232 + $0x53] sm:$0xff]
    %v1452 = vld [vmem:[%s232 + $0x63] sm:$0xff]
    %v1453 = vld [vmem:[%s232 + $0x73] sm:$0xff]
    %v1454 = vld [vmem:[%s232 + $0xc3] sm:$0xff]
    %v1455 = vld [vmem:[%s232 + $0xd3] sm:$0xff]
    %v1456 = vld [vmem:[%s232 + $0xe3] sm:$0xff]
    %v1457 = vld [vmem:[%s232 + $0xf3] sm:$0xff]
    %v1458 = vld [vmem:[%s232 + $0x103] sm:$0xff]
    %v1459 = vld [vmem:[%s232 + $0x113] sm:$0xff]
    %v1460 = vld [vmem:[%s232 + $0x123] sm:$0xff]
    %v1461 = vld [vmem:[%s232 + $0x133] sm:$0xff]
    %1478 = vrot.lane.b32.xlu0 %v1446, 52
    %v1479 = vpop.permute.xlu0 %1478
    %1480 = vrot.lane.b32.xlu0 %v1447, 52
    %v1481 = vpop.permute.xlu0 %1480
    %1482 = vrot.lane.b32.xlu0 %v1448, 52
    %v1483 = vpop.permute.xlu0 %1482
    %1484 = vrot.lane.b32.xlu0 %v1449, 52
    %v1485 = vpop.permute.xlu0 %1484
    %1486 = vrot.lane.b32.xlu0 %v1450, 52
    %v1487 = vpop.permute.xlu0 %1486
    %1488 = vrot.lane.b32.xlu0 %v1451, 52
    %v1489 = vpop.permute.xlu0 %1488
    %1490 = vrot.lane.b32.xlu0 %v1452, 52
    %v1491 = vpop.permute.xlu0 %1490
    %1492 = vrot.lane.b32.xlu0 %v1453, 52
    %v1493 = vpop.permute.xlu0 %1492
    %1494 = vrot.lane.b32.xlu0 %v1454, 52
    %v1495 = vpop.permute.xlu0 %1494
    %1496 = vrot.lane.b32.xlu0 %v1455, 52
    %v1497 = vpop.permute.xlu0 %1496
    %1498 = vrot.lane.b32.xlu0 %v1456, 52
    %v1499 = vpop.permute.xlu0 %1498
    %1500 = vrot.lane.b32.xlu0 %v1457, 52
    %v1501 = vpop.permute.xlu0 %1500
    %1502 = vrot.lane.b32.xlu0 %v1458, 52
    %v1503 = vpop.permute.xlu0 %1502
    %1504 = vrot.lane.b32.xlu0 %v1459, 52
    %v1505 = vpop.permute.xlu0 %1504
    %1506 = vrot.lane.b32.xlu0 %v1460, 52
    %v1507 = vpop.permute.xlu0 %1506
    %1508 = vrot.lane.b32.xlu0 %v1461, 52
    %v1509 = vpop.permute.xlu0 %1508
    %vm1526 = vcmask 458144
    %1527 = vst.msk [vmem:[#allocation3] sm:$0xff] %vm1526, %v1479
    %1528 = vst.msk [vmem:[#allocation3 + $0x8] sm:$0xff] %vm1526, %v1481
    %1529 = vst.msk [vmem:[#allocation3 + $0x10] sm:$0xff] %vm1526, %v1483
    %1530 = vst.msk [vmem:[#allocation3 + $0x18] sm:$0xff] %vm1526, %v1485
    %1531 = vst.msk [vmem:[#allocation3 + $0x20] sm:$0xff] %vm1526, %v1487
    %1532 = vst.msk [vmem:[#allocation3 + $0x28] sm:$0xff] %vm1526, %v1489
    %1533 = vst.msk [vmem:[#allocation3 + $0x30] sm:$0xff] %vm1526, %v1491
    %1534 = vst.msk [vmem:[#allocation3 + $0x38] sm:$0xff] %vm1526, %v1493
    %1535 = vst.msk [vmem:[#allocation3 + $0x40] sm:$0xff] %vm1526, %v1495
    %1536 = vst.msk [vmem:[#allocation3 + $0x48] sm:$0xff] %vm1526, %v1497
    %1537 = vst.msk [vmem:[#allocation3 + $0x50] sm:$0xff] %vm1526, %v1499
    %1538 = vst.msk [vmem:[#allocation3 + $0x58] sm:$0xff] %vm1526, %v1501
    %1539 = vst.msk [vmem:[#allocation3 + $0x60] sm:$0xff] %vm1526, %v1503
    %1540 = vst.msk [vmem:[#allocation3 + $0x68] sm:$0xff] %vm1526, %v1505
    %1541 = vst.msk [vmem:[#allocation3 + $0x70] sm:$0xff] %vm1526, %v1507
    %1542 = vst.msk [vmem:[#allocation3 + $0x78] sm:$0xff] %vm1526, %v1509
    %v1543 = vld [vmem:[%s232 + $0x4] sm:$0xff]
    %v1544 = vld [vmem:[%s232 + $0x14] sm:$0xff]
    %v1545 = vld [vmem:[%s232 + $0x24] sm:$0xff]
    %v1546 = vld [vmem:[%s232 + $0x34] sm:$0xff]
    %v1547 = vld [vmem:[%s232 + $0x44] sm:$0xff]
    %v1548 = vld [vmem:[%s232 + $0x54] sm:$0xff]
    %v1549 = vld [vmem:[%s232 + $0x64] sm:$0xff]
    %v1550 = vld [vmem:[%s232 + $0x74] sm:$0xff]
    %v1551 = vld [vmem:[%s232 + $0xc4] sm:$0xff]
    %v1552 = vld [vmem:[%s232 + $0xd4] sm:$0xff]
    %v1553 = vld [vmem:[%s232 + $0xe4] sm:$0xff]
    %v1554 = vld [vmem:[%s232 + $0xf4] sm:$0xff]
    %v1555 = vld [vmem:[%s232 + $0x104] sm:$0xff]
    %v1556 = vld [vmem:[%s232 + $0x114] sm:$0xff]
    %v1557 = vld [vmem:[%s232 + $0x124] sm:$0xff]
    %v1558 = vld [vmem:[%s232 + $0x134] sm:$0xff]
    %1575 = vrot.lane.b32.xlu0 %v1543, 56
    %v1576 = vpop.permute.xlu0 %1575
    %1577 = vrot.lane.b32.xlu0 %v1544, 56
    %v1578 = vpop.permute.xlu0 %1577
    %1579 = vrot.lane.b32.xlu0 %v1545, 56
    %v1580 = vpop.permute.xlu0 %1579
    %1581 = vrot.lane.b32.xlu0 %v1546, 56
    %v1582 = vpop.permute.xlu0 %1581
    %1583 = vrot.lane.b32.xlu0 %v1547, 56
    %v1584 = vpop.permute.xlu0 %1583
    %1585 = vrot.lane.b32.xlu0 %v1548, 56
    %v1586 = vpop.permute.xlu0 %1585
    %1587 = vrot.lane.b32.xlu0 %v1549, 56
    %v1588 = vpop.permute.xlu0 %1587
    %1589 = vrot.lane.b32.xlu0 %v1550, 56
    %v1590 = vpop.permute.xlu0 %1589
    %1591 = vrot.lane.b32.xlu0 %v1551, 56
    %v1592 = vpop.permute.xlu0 %1591
    %1593 = vrot.lane.b32.xlu0 %v1552, 56
    %v1594 = vpop.permute.xlu0 %1593
    %1595 = vrot.lane.b32.xlu0 %v1553, 56
    %v1596 = vpop.permute.xlu0 %1595
    %1597 = vrot.lane.b32.xlu0 %v1554, 56
    %v1598 = vpop.permute.xlu0 %1597
    %1599 = vrot.lane.b32.xlu0 %v1555, 56
    %v1600 = vpop.permute.xlu0 %1599
    %1601 = vrot.lane.b32.xlu0 %v1556, 56
    %v1602 = vpop.permute.xlu0 %1601
    %1603 = vrot.lane.b32.xlu0 %v1557, 56
    %v1604 = vpop.permute.xlu0 %1603
    %1605 = vrot.lane.b32.xlu0 %v1558, 56
    %v1606 = vpop.permute.xlu0 %1605
    %vm1623 = vcmask 490944
    %1624 = vst.msk [vmem:[#allocation3] sm:$0xff] %vm1623, %v1576
    %1625 = vst.msk [vmem:[#allocation3 + $0x8] sm:$0xff] %vm1623, %v1578
    %1626 = vst.msk [vmem:[#allocation3 + $0x10] sm:$0xff] %vm1623, %v1580
    %1627 = vst.msk [vmem:[#allocation3 + $0x18] sm:$0xff] %vm1623, %v1582
    %1628 = vst.msk [vmem:[#allocation3 + $0x20] sm:$0xff] %vm1623, %v1584
    %1629 = vst.msk [vmem:[#allocation3 + $0x28] sm:$0xff] %vm1623, %v1586
    %1630 = vst.msk [vmem:[#allocation3 + $0x30] sm:$0xff] %vm1623, %v1588
    %1631 = vst.msk [vmem:[#allocation3 + $0x38] sm:$0xff] %vm1623, %v1590
    %1632 = vst.msk [vmem:[#allocation3 + $0x40] sm:$0xff] %vm1623, %v1592
    %1633 = vst.msk [vmem:[#allocation3 + $0x48] sm:$0xff] %vm1623, %v1594
    %1634 = vst.msk [vmem:[#allocation3 + $0x50] sm:$0xff] %vm1623, %v1596
    %1635 = vst.msk [vmem:[#allocation3 + $0x58] sm:$0xff] %vm1623, %v1598
    %1636 = vst.msk [vmem:[#allocation3 + $0x60] sm:$0xff] %vm1623, %v1600
    %1637 = vst.msk [vmem:[#allocation3 + $0x68] sm:$0xff] %vm1623, %v1602
    %1638 = vst.msk [vmem:[#allocation3 + $0x70] sm:$0xff] %vm1623, %v1604
    %1639 = vst.msk [vmem:[#allocation3 + $0x78] sm:$0xff] %vm1623, %v1606
    %s1640 = scalar_lea.vmem [#allocation2], 48
    %v1641 = vld [vmem:[%s1640] sm:$0xff]
    %v1642 = vld [vmem:[%s1640 + $0x10] sm:$0xff]
    %v1643 = vld [vmem:[%s1640 + $0x20] sm:$0xff]
    %v1644 = vld [vmem:[%s1640 + $0x30] sm:$0xff]
    %v1645 = vld [vmem:[%s1640 + $0x40] sm:$0xff]
    %v1646 = vld [vmem:[%s1640 + $0x50] sm:$0xff]
    %v1647 = vld [vmem:[%s1640 + $0x60] sm:$0xff]
    %v1648 = vld [vmem:[%s1640 + $0x70] sm:$0xff]
    %v1649 = vld [vmem:[%s1640 + $0xc0] sm:$0xff]
    %v1650 = vld [vmem:[%s1640 + $0xd0] sm:$0xff]
    %v1651 = vld [vmem:[%s1640 + $0xe0] sm:$0xff]
    %v1652 = vld [vmem:[%s1640 + $0xf0] sm:$0xff]
    %v1653 = vld [vmem:[%s1640 + $0x100] sm:$0xff]
    %v1654 = vld [vmem:[%s1640 + $0x110] sm:$0xff]
    %v1655 = vld [vmem:[%s1640 + $0x120] sm:$0xff]
    %v1656 = vld [vmem:[%s1640 + $0x130] sm:$0xff]
    %1673 = vrot.lane.b32.xlu0 %v1641, 60
    %v1674 = vpop.permute.xlu0 %1673
    %1675 = vrot.lane.b32.xlu0 %v1642, 60
    %v1676 = vpop.permute.xlu0 %1675
    %1677 = vrot.lane.b32.xlu0 %v1643, 60
    %v1678 = vpop.permute.xlu0 %1677
    %1679 = vrot.lane.b32.xlu0 %v1644, 60
    %v1680 = vpop.permute.xlu0 %1679
    %1681 = vrot.lane.b32.xlu0 %v1645, 60
    %v1682 = vpop.permute.xlu0 %1681
    %1683 = vrot.lane.b32.xlu0 %v1646, 60
    %v1684 = vpop.permute.xlu0 %1683
    %1685 = vrot.lane.b32.xlu0 %v1647, 60
    %v1686 = vpop.permute.xlu0 %1685
    %1687 = vrot.lane.b32.xlu0 %v1648, 60
    %v1688 = vpop.permute.xlu0 %1687
    %1689 = vrot.lane.b32.xlu0 %v1649, 60
    %v1690 = vpop.permute.xlu0 %1689
    %1691 = vrot.lane.b32.xlu0 %v1650, 60
    %v1692 = vpop.permute.xlu0 %1691
    %1693 = vrot.lane.b32.xlu0 %v1651, 60
    %v1694 = vpop.permute.xlu0 %1693
    %1695 = vrot.lane.b32.xlu0 %v1652, 60
    %v1696 = vpop.permute.xlu0 %1695
    %1697 = vrot.lane.b32.xlu0 %v1653, 60
    %v1698 = vpop.permute.xlu0 %1697
    %1699 = vrot.lane.b32.xlu0 %v1654, 60
    %v1700 = vpop.permute.xlu0 %1699
    %1701 = vrot.lane.b32.xlu0 %v1655, 60
    %v1702 = vpop.permute.xlu0 %1701
    %1703 = vrot.lane.b32.xlu0 %v1656, 60
    %v1704 = vpop.permute.xlu0 %1703
    %vm1721 = vcmask 523744
    %1722 = vst.msk [vmem:[#allocation3] sm:$0xff] %vm1721, %v1674
    %1723 = vst.msk [vmem:[#allocation3 + $0x8] sm:$0xff] %vm1721, %v1676
    %1724 = vst.msk [vmem:[#allocation3 + $0x10] sm:$0xff] %vm1721, %v1678
    %1725 = vst.msk [vmem:[#allocation3 + $0x18] sm:$0xff] %vm1721, %v1680
    %1726 = vst.msk [vmem:[#allocation3 + $0x20] sm:$0xff] %vm1721, %v1682
    %1727 = vst.msk [vmem:[#allocation3 + $0x28] sm:$0xff] %vm1721, %v1684
    %1728 = vst.msk [vmem:[#allocation3 + $0x30] sm:$0xff] %vm1721, %v1686
    %1729 = vst.msk [vmem:[#allocation3 + $0x38] sm:$0xff] %vm1721, %v1688
    %1730 = vst.msk [vmem:[#allocation3 + $0x40] sm:$0xff] %vm1721, %v1690
    %1731 = vst.msk [vmem:[#allocation3 + $0x48] sm:$0xff] %vm1721, %v1692
    %1732 = vst.msk [vmem:[#allocation3 + $0x50] sm:$0xff] %vm1721, %v1694
    %1733 = vst.msk [vmem:[#allocation3 + $0x58] sm:$0xff] %vm1721, %v1696
    %1734 = vst.msk [vmem:[#allocation3 + $0x60] sm:$0xff] %vm1721, %v1698
    %1735 = vst.msk [vmem:[#allocation3 + $0x68] sm:$0xff] %vm1721, %v1700
    %1736 = vst.msk [vmem:[#allocation3 + $0x70] sm:$0xff] %vm1721, %v1702
    %1737 = vst.msk [vmem:[#allocation3 + $0x78] sm:$0xff] %vm1721, %v1704
    %v1738 = vld [vmem:[%s1640 + $0x1] sm:$0xff]
    %v1739 = vld [vmem:[%s1640 + $0x11] sm:$0xff]
    %v1740 = vld [vmem:[%s1640 + $0x21] sm:$0xff]
    %v1741 = vld [vmem:[%s1640 + $0x31] sm:$0xff]
    %v1742 = vld [vmem:[%s1640 + $0x41] sm:$0xff]
    %v1743 = vld [vmem:[%s1640 + $0x51] sm:$0xff]
    %v1744 = vld [vmem:[%s1640 + $0x61] sm:$0xff]
    %v1745 = vld [vmem:[%s1640 + $0x71] sm:$0xff]
    %v1746 = vld [vmem:[%s1640 + $0xc1] sm:$0xff]
    %v1747 = vld [vmem:[%s1640 + $0xd1] sm:$0xff]
    %v1748 = vld [vmem:[%s1640 + $0xe1] sm:$0xff]
    %v1749 = vld [vmem:[%s1640 + $0xf1] sm:$0xff]
    %v1750 = vld [vmem:[%s1640 + $0x101] sm:$0xff]
    %v1751 = vld [vmem:[%s1640 + $0x111] sm:$0xff]
    %v1752 = vld [vmem:[%s1640 + $0x121] sm:$0xff]
    %v1753 = vld [vmem:[%s1640 + $0x131] sm:$0xff]
    %1770 = vrot.lane.b32.xlu0 %v1738, 64
    %v1771 = vpop.permute.xlu0 %1770
    %1772 = vrot.lane.b32.xlu0 %v1739, 64
    %v1773 = vpop.permute.xlu0 %1772
    %1774 = vrot.lane.b32.xlu0 %v1740, 64
    %v1775 = vpop.permute.xlu0 %1774
    %1776 = vrot.lane.b32.xlu0 %v1741, 64
    %v1777 = vpop.permute.xlu0 %1776
    %1778 = vrot.lane.b32.xlu0 %v1742, 64
    %v1779 = vpop.permute.xlu0 %1778
    %1780 = vrot.lane.b32.xlu0 %v1743, 64
    %v1781 = vpop.permute.xlu0 %1780
    %1782 = vrot.lane.b32.xlu0 %v1744, 64
    %v1783 = vpop.permute.xlu0 %1782
    %1784 = vrot.lane.b32.xlu0 %v1745, 64
    %v1785 = vpop.permute.xlu0 %1784
    %1786 = vrot.lane.b32.xlu0 %v1746, 64
    %v1787 = vpop.permute.xlu0 %1786
    %1788 = vrot.lane.b32.xlu0 %v1747, 64
    %v1789 = vpop.permute.xlu0 %1788
    %1790 = vrot.lane.b32.xlu0 %v1748, 64
    %v1791 = vpop.permute.xlu0 %1790
    %1792 = vrot.lane.b32.xlu0 %v1749, 64
    %v1793 = vpop.permute.xlu0 %1792
    %1794 = vrot.lane.b32.xlu0 %v1750, 64
    %v1795 = vpop.permute.xlu0 %1794
    %1796 = vrot.lane.b32.xlu0 %v1751, 64
    %v1797 = vpop.permute.xlu0 %1796
    %1798 = vrot.lane.b32.xlu0 %v1752, 64
    %v1799 = vpop.permute.xlu0 %1798
    %1800 = vrot.lane.b32.xlu0 %v1753, 64
    %v1801 = vpop.permute.xlu0 %1800
    %vm1818 = vcmask 556544
    %1819 = vst.msk [vmem:[#allocation3] sm:$0xff] %vm1818, %v1771
    %1820 = vst.msk [vmem:[#allocation3 + $0x8] sm:$0xff] %vm1818, %v1773
    %1821 = vst.msk [vmem:[#allocation3 + $0x10] sm:$0xff] %vm1818, %v1775
    %1822 = vst.msk [vmem:[#allocation3 + $0x18] sm:$0xff] %vm1818, %v1777
    %1823 = vst.msk [vmem:[#allocation3 + $0x20] sm:$0xff] %vm1818, %v1779
    %1824 = vst.msk [vmem:[#allocation3 + $0x28] sm:$0xff] %vm1818, %v1781
    %1825 = vst.msk [vmem:[#allocation3 + $0x30] sm:$0xff] %vm1818, %v1783
    %1826 = vst.msk [vmem:[#allocation3 + $0x38] sm:$0xff] %vm1818, %v1785
    %1827 = vst.msk [vmem:[#allocation3 + $0x40] sm:$0xff] %vm1818, %v1787
    %1828 = vst.msk [vmem:[#allocation3 + $0x48] sm:$0xff] %vm1818, %v1789
    %1829 = vst.msk [vmem:[#allocation3 + $0x50] sm:$0xff] %vm1818, %v1791
    %1830 = vst.msk [vmem:[#allocation3 + $0x58] sm:$0xff] %vm1818, %v1793
    %1831 = vst.msk [vmem:[#allocation3 + $0x60] sm:$0xff] %vm1818, %v1795
    %1832 = vst.msk [vmem:[#allocation3 + $0x68] sm:$0xff] %vm1818, %v1797
    %1833 = vst.msk [vmem:[#allocation3 + $0x70] sm:$0xff] %vm1818, %v1799
    %1834 = vst.msk [vmem:[#allocation3 + $0x78] sm:$0xff] %vm1818, %v1801
    %v1835 = vld [vmem:[%s1640 + $0x2] sm:$0xff]
    %v1836 = vld [vmem:[%s1640 + $0x12] sm:$0xff]
    %v1837 = vld [vmem:[%s1640 + $0x22] sm:$0xff]
    %v1838 = vld [vmem:[%s1640 + $0x32] sm:$0xff]
    %v1839 = vld [vmem:[%s1640 + $0x42] sm:$0xff]
    %v1840 = vld [vmem:[%s1640 + $0x52] sm:$0xff]
    %v1841 = vld [vmem:[%s1640 + $0x62] sm:$0xff]
    %v1842 = vld [vmem:[%s1640 + $0x72] sm:$0xff]
    %v1843 = vld [vmem:[%s1640 + $0xc2] sm:$0xff]
    %v1844 = vld [vmem:[%s1640 + $0xd2] sm:$0xff]
    %v1845 = vld [vmem:[%s1640 + $0xe2] sm:$0xff]
    %v1846 = vld [vmem:[%s1640 + $0xf2] sm:$0xff]
    %v1847 = vld [vmem:[%s1640 + $0x102] sm:$0xff]
    %v1848 = vld [vmem:[%s1640 + $0x112] sm:$0xff]
    %v1849 = vld [vmem:[%s1640 + $0x122] sm:$0xff]
    %v1850 = vld [vmem:[%s1640 + $0x132] sm:$0xff]
    %1867 = vrot.lane.b32.xlu0 %v1835, 68
    %v1868 = vpop.permute.xlu0 %1867
    %1869 = vrot.lane.b32.xlu0 %v1836, 68
    %v1870 = vpop.permute.xlu0 %1869
    %1871 = vrot.lane.b32.xlu0 %v1837, 68
    %v1872 = vpop.permute.xlu0 %1871
    %1873 = vrot.lane.b32.xlu0 %v1838, 68
    %v1874 = vpop.permute.xlu0 %1873
    %1875 = vrot.lane.b32.xlu0 %v1839, 68
    %v1876 = vpop.permute.xlu0 %1875
    %1877 = vrot.lane.b32.xlu0 %v1840, 68
    %v1878 = vpop.permute.xlu0 %1877
    %1879 = vrot.lane.b32.xlu0 %v1841, 68
    %v1880 = vpop.permute.xlu0 %1879
    %1881 = vrot.lane.b32.xlu0 %v1842, 68
    %v1882 = vpop.permute.xlu0 %1881
    %1883 = vrot.lane.b32.xlu0 %v1843, 68
    %v1884 = vpop.permute.xlu0 %1883
    %1885 = vrot.lane.b32.xlu0 %v1844, 68
    %v1886 = vpop.permute.xlu0 %1885
    %1887 = vrot.lane.b32.xlu0 %v1845, 68
    %v1888 = vpop.permute.xlu0 %1887
    %1889 = vrot.lane.b32.xlu0 %v1846, 68
    %v1890 = vpop.permute.xlu0 %1889
    %1891 = vrot.lane.b32.xlu0 %v1847, 68
    %v1892 = vpop.permute.xlu0 %1891
    %1893 = vrot.lane.b32.xlu0 %v1848, 68
    %v1894 = vpop.permute.xlu0 %1893
    %1895 = vrot.lane.b32.xlu0 %v1849, 68
    %v1896 = vpop.permute.xlu0 %1895
    %1897 = vrot.lane.b32.xlu0 %v1850, 68
    %v1898 = vpop.permute.xlu0 %1897
    %vm1915 = vcmask 589344
    %1916 = vst.msk [vmem:[#allocation3] sm:$0xff] %vm1915, %v1868
    %1917 = vst.msk [vmem:[#allocation3 + $0x8] sm:$0xff] %vm1915, %v1870
    %1918 = vst.msk [vmem:[#allocation3 + $0x10] sm:$0xff] %vm1915, %v1872
    %1919 = vst.msk [vmem:[#allocation3 + $0x18] sm:$0xff] %vm1915, %v1874
    %1920 = vst.msk [vmem:[#allocation3 + $0x20] sm:$0xff] %vm1915, %v1876
    %1921 = vst.msk [vmem:[#allocation3 + $0x28] sm:$0xff] %vm1915, %v1878
    %1922 = vst.msk [vmem:[#allocation3 + $0x30] sm:$0xff] %vm1915, %v1880
    %1923 = vst.msk [vmem:[#allocation3 + $0x38] sm:$0xff] %vm1915, %v1882
    %1924 = vst.msk [vmem:[#allocation3 + $0x40] sm:$0xff] %vm1915, %v1884
    %1925 = vst.msk [vmem:[#allocation3 + $0x48] sm:$0xff] %vm1915, %v1886
    %1926 = vst.msk [vmem:[#allocation3 + $0x50] sm:$0xff] %vm1915, %v1888
    %1927 = vst.msk [vmem:[#allocation3 + $0x58] sm:$0xff] %vm1915, %v1890
    %1928 = vst.msk [vmem:[#allocation3 + $0x60] sm:$0xff] %vm1915, %v1892
    %1929 = vst.msk [vmem:[#allocation3 + $0x68] sm:$0xff] %vm1915, %v1894
    %1930 = vst.msk [vmem:[#allocation3 + $0x70] sm:$0xff] %vm1915, %v1896
    %1931 = vst.msk [vmem:[#allocation3 + $0x78] sm:$0xff] %vm1915, %v1898
    %v1932 = vld [vmem:[%s1640 + $0x3] sm:$0xff]
    %v1933 = vld [vmem:[%s1640 + $0x13] sm:$0xff]
    %v1934 = vld [vmem:[%s1640 + $0x23] sm:$0xff]
    %v1935 = vld [vmem:[%s1640 + $0x33] sm:$0xff]
    %v1936 = vld [vmem:[%s1640 + $0x43] sm:$0xff]
    %v1937 = vld [vmem:[%s1640 + $0x53] sm:$0xff]
    %v1938 = vld [vmem:[%s1640 + $0x63] sm:$0xff]
    %v1939 = vld [vmem:[%s1640 + $0x73] sm:$0xff]
    %v1940 = vld [vmem:[%s1640 + $0xc3] sm:$0xff]
    %v1941 = vld [vmem:[%s1640 + $0xd3] sm:$0xff]
    %v1942 = vld [vmem:[%s1640 + $0xe3] sm:$0xff]
    %v1943 = vld [vmem:[%s1640 + $0xf3] sm:$0xff]
    %v1944 = vld [vmem:[%s1640 + $0x103] sm:$0xff]
    %v1945 = vld [vmem:[%s1640 + $0x113] sm:$0xff]
    %v1946 = vld [vmem:[%s1640 + $0x123] sm:$0xff]
    %v1947 = vld [vmem:[%s1640 + $0x133] sm:$0xff]
    %1964 = vrot.lane.b32.xlu0 %v1932, 72
    %v1965 = vpop.permute.xlu0 %1964
    %1966 = vrot.lane.b32.xlu0 %v1933, 72
    %v1967 = vpop.permute.xlu0 %1966
    %1968 = vrot.lane.b32.xlu0 %v1934, 72
    %v1969 = vpop.permute.xlu0 %1968
    %1970 = vrot.lane.b32.xlu0 %v1935, 72
    %v1971 = vpop.permute.xlu0 %1970
    %1972 = vrot.lane.b32.xlu0 %v1936, 72
    %v1973 = vpop.permute.xlu0 %1972
    %1974 = vrot.lane.b32.xlu0 %v1937, 72
    %v1975 = vpop.permute.xlu0 %1974
    %1976 = vrot.lane.b32.xlu0 %v1938, 72
    %v1977 = vpop.permute.xlu0 %1976
    %1978 = vrot.lane.b32.xlu0 %v1939, 72
    %v1979 = vpop.permute.xlu0 %1978
    %1980 = vrot.lane.b32.xlu0 %v1940, 72
    %v1981 = vpop.permute.xlu0 %1980
    %1982 = vrot.lane.b32.xlu0 %v1941, 72
    %v1983 = vpop.permute.xlu0 %1982
    %1984 = vrot.lane.b32.xlu0 %v1942, 72
    %v1985 = vpop.permute.xlu0 %1984
    %1986 = vrot.lane.b32.xlu0 %v1943, 72
    %v1987 = vpop.permute.xlu0 %1986
    %1988 = vrot.lane.b32.xlu0 %v1944, 72
    %v1989 = vpop.permute.xlu0 %1988
    %1990 = vrot.lane.b32.xlu0 %v1945, 72
    %v1991 = vpop.permute.xlu0 %1990
    %1992 = vrot.lane.b32.xlu0 %v1946, 72
    %v1993 = vpop.permute.xlu0 %1992
    %1994 = vrot.lane.b32.xlu0 %v1947, 72
    %v1995 = vpop.permute.xlu0 %1994
    %vm2012 = vcmask 622144
    %2013 = vst.msk [vmem:[#allocation3] sm:$0xff] %vm2012, %v1965
    %2014 = vst.msk [vmem:[#allocation3 + $0x8] sm:$0xff] %vm2012, %v1967
    %2015 = vst.msk [vmem:[#allocation3 + $0x10] sm:$0xff] %vm2012, %v1969
    %2016 = vst.msk [vmem:[#allocation3 + $0x18] sm:$0xff] %vm2012, %v1971
    %2017 = vst.msk [vmem:[#allocation3 + $0x20] sm:$0xff] %vm2012, %v1973
    %2018 = vst.msk [vmem:[#allocation3 + $0x28] sm:$0xff] %vm2012, %v1975
    %2019 = vst.msk [vmem:[#allocation3 + $0x30] sm:$0xff] %vm2012, %v1977
    %2020 = vst.msk [vmem:[#allocation3 + $0x38] sm:$0xff] %vm2012, %v1979
    %2021 = vst.msk [vmem:[#allocation3 + $0x40] sm:$0xff] %vm2012, %v1981
    %2022 = vst.msk [vmem:[#allocation3 + $0x48] sm:$0xff] %vm2012, %v1983
    %2023 = vst.msk [vmem:[#allocation3 + $0x50] sm:$0xff] %vm2012, %v1985
    %2024 = vst.msk [vmem:[#allocation3 + $0x58] sm:$0xff] %vm2012, %v1987
    %2025 = vst.msk [vmem:[#allocation3 + $0x60] sm:$0xff] %vm2012, %v1989
    %2026 = vst.msk [vmem:[#allocation3 + $0x68] sm:$0xff] %vm2012, %v1991
    %2027 = vst.msk [vmem:[#allocation3 + $0x70] sm:$0xff] %vm2012, %v1993
    %2028 = vst.msk [vmem:[#allocation3 + $0x78] sm:$0xff] %vm2012, %v1995
    %v2029 = vld [vmem:[%s1640 + $0x4] sm:$0xff]
    %v2030 = vld [vmem:[%s1640 + $0x14] sm:$0xff]
    %v2031 = vld [vmem:[%s1640 + $0x24] sm:$0xff]
    %v2032 = vld [vmem:[%s1640 + $0x34] sm:$0xff]
    %v2033 = vld [vmem:[%s1640 + $0x44] sm:$0xff]
    %v2034 = vld [vmem:[%s1640 + $0x54] sm:$0xff]
    %v2035 = vld [vmem:[%s1640 + $0x64] sm:$0xff]
    %v2036 = vld [vmem:[%s1640 + $0x74] sm:$0xff]
    %v2037 = vld [vmem:[%s1640 + $0xc4] sm:$0xff]
    %v2038 = vld [vmem:[%s1640 + $0xd4] sm:$0xff]
    %v2039 = vld [vmem:[%s1640 + $0xe4] sm:$0xff]
    %v2040 = vld [vmem:[%s1640 + $0xf4] sm:$0xff]
    %v2041 = vld [vmem:[%s1640 + $0x104] sm:$0xff]
    %v2042 = vld [vmem:[%s1640 + $0x114] sm:$0xff]
    %v2043 = vld [vmem:[%s1640 + $0x124] sm:$0xff]
    %v2044 = vld [vmem:[%s1640 + $0x134] sm:$0xff]
    %2061 = vrot.lane.b32.xlu0 %v2029, 76
    %v2062 = vpop.permute.xlu0 %2061
    %2063 = vrot.lane.b32.xlu0 %v2030, 76
    %v2064 = vpop.permute.xlu0 %2063
    %2065 = vrot.lane.b32.xlu0 %v2031, 76
    %v2066 = vpop.permute.xlu0 %2065
    %2067 = vrot.lane.b32.xlu0 %v2032, 76
    %v2068 = vpop.permute.xlu0 %2067
    %2069 = vrot.lane.b32.xlu0 %v2033, 76
    %v2070 = vpop.permute.xlu0 %2069
    %2071 = vrot.lane.b32.xlu0 %v2034, 76
    %v2072 = vpop.permute.xlu0 %2071
    %2073 = vrot.lane.b32.xlu0 %v2035, 76
    %v2074 = vpop.permute.xlu0 %2073
    %2075 = vrot.lane.b32.xlu0 %v2036, 76
    %v2076 = vpop.permute.xlu0 %2075
    %2077 = vrot.lane.b32.xlu0 %v2037, 76
    %v2078 = vpop.permute.xlu0 %2077
    %2079 = vrot.lane.b32.xlu0 %v2038, 76
    %v2080 = vpop.permute.xlu0 %2079
    %2081 = vrot.lane.b32.xlu0 %v2039, 76
    %v2082 = vpop.permute.xlu0 %2081
    %2083 = vrot.lane.b32.xlu0 %v2040, 76
    %v2084 = vpop.permute.xlu0 %2083
    %2085 = vrot.lane.b32.xlu0 %v2041, 76
    %v2086 = vpop.permute.xlu0 %2085
    %2087 = vrot.lane.b32.xlu0 %v2042, 76
    %v2088 = vpop.permute.xlu0 %2087
    %2089 = vrot.lane.b32.xlu0 %v2043, 76
    %v2090 = vpop.permute.xlu0 %2089
    %2091 = vrot.lane.b32.xlu0 %v2044, 76
    %v2092 = vpop.permute.xlu0 %2091
    %vm2109 = vcmask 654944
    %2110 = vst.msk [vmem:[#allocation3] sm:$0xff] %vm2109, %v2062
    %2111 = vst.msk [vmem:[#allocation3 + $0x8] sm:$0xff] %vm2109, %v2064
    %2112 = vst.msk [vmem:[#allocation3 + $0x10] sm:$0xff] %vm2109, %v2066
    %2113 = vst.msk [vmem:[#allocation3 + $0x18] sm:$0xff] %vm2109, %v2068
    %2114 = vst.msk [vmem:[#allocation3 + $0x20] sm:$0xff] %vm2109, %v2070
    %2115 = vst.msk [vmem:[#allocation3 + $0x28] sm:$0xff] %vm2109, %v2072
    %2116 = vst.msk [vmem:[#allocation3 + $0x30] sm:$0xff] %vm2109, %v2074
    %2117 = vst.msk [vmem:[#allocation3 + $0x38] sm:$0xff] %vm2109, %v2076
    %2118 = vst.msk [vmem:[#allocation3 + $0x40] sm:$0xff] %vm2109, %v2078
    %2119 = vst.msk [vmem:[#allocation3 + $0x48] sm:$0xff] %vm2109, %v2080
    %2120 = vst.msk [vmem:[#allocation3 + $0x50] sm:$0xff] %vm2109, %v2082
    %2121 = vst.msk [vmem:[#allocation3 + $0x58] sm:$0xff] %vm2109, %v2084
    %2122 = vst.msk [vmem:[#allocation3 + $0x60] sm:$0xff] %vm2109, %v2086
    %2123 = vst.msk [vmem:[#allocation3 + $0x68] sm:$0xff] %vm2109, %v2088
    %2124 = vst.msk [vmem:[#allocation3 + $0x70] sm:$0xff] %vm2109, %v2090
    %2125 = vst.msk [vmem:[#allocation3 + $0x78] sm:$0xff] %vm2109, %v2092
    %s2126 = scalar_lea.vmem [#allocation2], 64
    %v2127 = vld [vmem:[%s2126] sm:$0xff]
    %v2128 = vld [vmem:[%s2126 + $0x10] sm:$0xff]
    %v2129 = vld [vmem:[%s2126 + $0x20] sm:$0xff]
    %v2130 = vld [vmem:[%s2126 + $0x30] sm:$0xff]
    %v2131 = vld [vmem:[%s2126 + $0x40] sm:$0xff]
    %v2132 = vld [vmem:[%s2126 + $0x50] sm:$0xff]
    %v2133 = vld [vmem:[%s2126 + $0x60] sm:$0xff]
    %v2134 = vld [vmem:[%s2126 + $0x70] sm:$0xff]
    %v2135 = vld [vmem:[%s2126 + $0xc0] sm:$0xff]
    %v2136 = vld [vmem:[%s2126 + $0xd0] sm:$0xff]
    %v2137 = vld [vmem:[%s2126 + $0xe0] sm:$0xff]
    %v2138 = vld [vmem:[%s2126 + $0xf0] sm:$0xff]
    %v2139 = vld [vmem:[%s2126 + $0x100] sm:$0xff]
    %v2140 = vld [vmem:[%s2126 + $0x110] sm:$0xff]
    %v2141 = vld [vmem:[%s2126 + $0x120] sm:$0xff]
    %v2142 = vld [vmem:[%s2126 + $0x130] sm:$0xff]
    %2159 = vrot.lane.b32.xlu0 %v2127, 80
    %v2160 = vpop.permute.xlu0 %2159
    %2161 = vrot.lane.b32.xlu0 %v2128, 80
    %v2162 = vpop.permute.xlu0 %2161
    %2163 = vrot.lane.b32.xlu0 %v2129, 80
    %v2164 = vpop.permute.xlu0 %2163
    %2165 = vrot.lane.b32.xlu0 %v2130, 80
    %v2166 = vpop.permute.xlu0 %2165
    %2167 = vrot.lane.b32.xlu0 %v2131, 80
    %v2168 = vpop.permute.xlu0 %2167
    %2169 = vrot.lane.b32.xlu0 %v2132, 80
    %v2170 = vpop.permute.xlu0 %2169
    %2171 = vrot.lane.b32.xlu0 %v2133, 80
    %v2172 = vpop.permute.xlu0 %2171
    %2173 = vrot.lane.b32.xlu0 %v2134, 80
    %v2174 = vpop.permute.xlu0 %2173
    %2175 = vrot.lane.b32.xlu0 %v2135, 80
    %v2176 = vpop.permute.xlu0 %2175
    %2177 = vrot.lane.b32.xlu0 %v2136, 80
    %v2178 = vpop.permute.xlu0 %2177
    %2179 = vrot.lane.b32.xlu0 %v2137, 80
    %v2180 = vpop.permute.xlu0 %2179
    %2181 = vrot.lane.b32.xlu0 %v2138, 80
    %v2182 = vpop.permute.xlu0 %2181
    %2183 = vrot.lane.b32.xlu0 %v2139, 80
    %v2184 = vpop.permute.xlu0 %2183
    %2185 = vrot.lane.b32.xlu0 %v2140, 80
    %v2186 = vpop.permute.xlu0 %2185
    %2187 = vrot.lane.b32.xlu0 %v2141, 80
    %v2188 = vpop.permute.xlu0 %2187
    %2189 = vrot.lane.b32.xlu0 %v2142, 80
    %v2190 = vpop.permute.xlu0 %2189
    %vm2207 = vcmask 687744
    %2208 = vst.msk [vmem:[#allocation3] sm:$0xff] %vm2207, %v2160
    %2209 = vst.msk [vmem:[#allocation3 + $0x8] sm:$0xff] %vm2207, %v2162
    %2210 = vst.msk [vmem:[#allocation3 + $0x10] sm:$0xff] %vm2207, %v2164
    %2211 = vst.msk [vmem:[#allocation3 + $0x18] sm:$0xff] %vm2207, %v2166
    %2212 = vst.msk [vmem:[#allocation3 + $0x20] sm:$0xff] %vm2207, %v2168
    %2213 = vst.msk [vmem:[#allocation3 + $0x28] sm:$0xff] %vm2207, %v2170
    %2214 = vst.msk [vmem:[#allocation3 + $0x30] sm:$0xff] %vm2207, %v2172
    %2215 = vst.msk [vmem:[#allocation3 + $0x38] sm:$0xff] %vm2207, %v2174
    %2216 = vst.msk [vmem:[#allocation3 + $0x40] sm:$0xff] %vm2207, %v2176
    %2217 = vst.msk [vmem:[#allocation3 + $0x48] sm:$0xff] %vm2207, %v2178
    %2218 = vst.msk [vmem:[#allocation3 + $0x50] sm:$0xff] %vm2207, %v2180
    %2219 = vst.msk [vmem:[#allocation3 + $0x58] sm:$0xff] %vm2207, %v2182
    %2220 = vst.msk [vmem:[#allocation3 + $0x60] sm:$0xff] %vm2207, %v2184
    %2221 = vst.msk [vmem:[#allocation3 + $0x68] sm:$0xff] %vm2207, %v2186
    %2222 = vst.msk [vmem:[#allocation3 + $0x70] sm:$0xff] %vm2207, %v2188
    %2223 = vst.msk [vmem:[#allocation3 + $0x78] sm:$0xff] %vm2207, %v2190
    %v2224 = vld [vmem:[%s2126 + $0x1] sm:$0xff]
    %v2225 = vld [vmem:[%s2126 + $0x11] sm:$0xff]
    %v2226 = vld [vmem:[%s2126 + $0x21] sm:$0xff]
    %v2227 = vld [vmem:[%s2126 + $0x31] sm:$0xff]
    %v2228 = vld [vmem:[%s2126 + $0x41] sm:$0xff]
    %v2229 = vld [vmem:[%s2126 + $0x51] sm:$0xff]
    %v2230 = vld [vmem:[%s2126 + $0x61] sm:$0xff]
    %v2231 = vld [vmem:[%s2126 + $0x71] sm:$0xff]
    %v2232 = vld [vmem:[%s2126 + $0xc1] sm:$0xff]
    %v2233 = vld [vmem:[%s2126 + $0xd1] sm:$0xff]
    %v2234 = vld [vmem:[%s2126 + $0xe1] sm:$0xff]
    %v2235 = vld [vmem:[%s2126 + $0xf1] sm:$0xff]
    %v2236 = vld [vmem:[%s2126 + $0x101] sm:$0xff]
    %v2237 = vld [vmem:[%s2126 + $0x111] sm:$0xff]
    %v2238 = vld [vmem:[%s2126 + $0x121] sm:$0xff]
    %v2239 = vld [vmem:[%s2126 + $0x131] sm:$0xff]
    %2256 = vrot.lane.b32.xlu0 %v2224, 84
    %v2257 = vpop.permute.xlu0 %2256
    %2258 = vrot.lane.b32.xlu0 %v2225, 84
    %v2259 = vpop.permute.xlu0 %2258
    %2260 = vrot.lane.b32.xlu0 %v2226, 84
    %v2261 = vpop.permute.xlu0 %2260
    %2262 = vrot.lane.b32.xlu0 %v2227, 84
    %v2263 = vpop.permute.xlu0 %2262
    %2264 = vrot.lane.b32.xlu0 %v2228, 84
    %v2265 = vpop.permute.xlu0 %2264
    %2266 = vrot.lane.b32.xlu0 %v2229, 84
    %v2267 = vpop.permute.xlu0 %2266
    %2268 = vrot.lane.b32.xlu0 %v2230, 84
    %v2269 = vpop.permute.xlu0 %2268
    %2270 = vrot.lane.b32.xlu0 %v2231, 84
    %v2271 = vpop.permute.xlu0 %2270
    %2272 = vrot.lane.b32.xlu0 %v2232, 84
    %v2273 = vpop.permute.xlu0 %2272
    %2274 = vrot.lane.b32.xlu0 %v2233, 84
    %v2275 = vpop.permute.xlu0 %2274
    %2276 = vrot.lane.b32.xlu0 %v2234, 84
    %v2277 = vpop.permute.xlu0 %2276
    %2278 = vrot.lane.b32.xlu0 %v2235, 84
    %v2279 = vpop.permute.xlu0 %2278
    %2280 = vrot.lane.b32.xlu0 %v2236, 84
    %v2281 = vpop.permute.xlu0 %2280
    %2282 = vrot.lane.b32.xlu0 %v2237, 84
    %v2283 = vpop.permute.xlu0 %2282
    %2284 = vrot.lane.b32.xlu0 %v2238, 84
    %v2285 = vpop.permute.xlu0 %2284
    %2286 = vrot.lane.b32.xlu0 %v2239, 84
    %v2287 = vpop.permute.xlu0 %2286
    %vm2304 = vcmask 720544
    %2305 = vst.msk [vmem:[#allocation3] sm:$0xff] %vm2304, %v2257
    %2306 = vst.msk [vmem:[#allocation3 + $0x8] sm:$0xff] %vm2304, %v2259
    %2307 = vst.msk [vmem:[#allocation3 + $0x10] sm:$0xff] %vm2304, %v2261
    %2308 = vst.msk [vmem:[#allocation3 + $0x18] sm:$0xff] %vm2304, %v2263
    %2309 = vst.msk [vmem:[#allocation3 + $0x20] sm:$0xff] %vm2304, %v2265
    %2310 = vst.msk [vmem:[#allocation3 + $0x28] sm:$0xff] %vm2304, %v2267
    %2311 = vst.msk [vmem:[#allocation3 + $0x30] sm:$0xff] %vm2304, %v2269
    %2312 = vst.msk [vmem:[#allocation3 + $0x38] sm:$0xff] %vm2304, %v2271
    %2313 = vst.msk [vmem:[#allocation3 + $0x40] sm:$0xff] %vm2304, %v2273
    %2314 = vst.msk [vmem:[#allocation3 + $0x48] sm:$0xff] %vm2304, %v2275
    %2315 = vst.msk [vmem:[#allocation3 + $0x50] sm:$0xff] %vm2304, %v2277
    %2316 = vst.msk [vmem:[#allocation3 + $0x58] sm:$0xff] %vm2304, %v2279
    %2317 = vst.msk [vmem:[#allocation3 + $0x60] sm:$0xff] %vm2304, %v2281
    %2318 = vst.msk [vmem:[#allocation3 + $0x68] sm:$0xff] %vm2304, %v2283
    %2319 = vst.msk [vmem:[#allocation3 + $0x70] sm:$0xff] %vm2304, %v2285
    %2320 = vst.msk [vmem:[#allocation3 + $0x78] sm:$0xff] %vm2304, %v2287
    %v2321 = vld [vmem:[%s2126 + $0x2] sm:$0xff]
    %v2322 = vld [vmem:[%s2126 + $0x12] sm:$0xff]
    %v2323 = vld [vmem:[%s2126 + $0x22] sm:$0xff]
    %v2324 = vld [vmem:[%s2126 + $0x32] sm:$0xff]
    %v2325 = vld [vmem:[%s2126 + $0x42] sm:$0xff]
    %v2326 = vld [vmem:[%s2126 + $0x52] sm:$0xff]
    %v2327 = vld [vmem:[%s2126 + $0x62] sm:$0xff]
    %v2328 = vld [vmem:[%s2126 + $0x72] sm:$0xff]
    %v2329 = vld [vmem:[%s2126 + $0xc2] sm:$0xff]
    %v2330 = vld [vmem:[%s2126 + $0xd2] sm:$0xff]
    %v2331 = vld [vmem:[%s2126 + $0xe2] sm:$0xff]
    %v2332 = vld [vmem:[%s2126 + $0xf2] sm:$0xff]
    %v2333 = vld [vmem:[%s2126 + $0x102] sm:$0xff]
    %v2334 = vld [vmem:[%s2126 + $0x112] sm:$0xff]
    %v2335 = vld [vmem:[%s2126 + $0x122] sm:$0xff]
    %v2336 = vld [vmem:[%s2126 + $0x132] sm:$0xff]
    %2353 = vrot.lane.b32.xlu0 %v2321, 88
    %v2354 = vpop.permute.xlu0 %2353
    %2355 = vrot.lane.b32.xlu0 %v2322, 88
    %v2356 = vpop.permute.xlu0 %2355
    %2357 = vrot.lane.b32.xlu0 %v2323, 88
    %v2358 = vpop.permute.xlu0 %2357
    %2359 = vrot.lane.b32.xlu0 %v2324, 88
    %v2360 = vpop.permute.xlu0 %2359
    %2361 = vrot.lane.b32.xlu0 %v2325, 88
    %v2362 = vpop.permute.xlu0 %2361
    %2363 = vrot.lane.b32.xlu0 %v2326, 88
    %v2364 = vpop.permute.xlu0 %2363
    %2365 = vrot.lane.b32.xlu0 %v2327, 88
    %v2366 = vpop.permute.xlu0 %2365
    %2367 = vrot.lane.b32.xlu0 %v2328, 88
    %v2368 = vpop.permute.xlu0 %2367
    %2369 = vrot.lane.b32.xlu0 %v2329, 88
    %v2370 = vpop.permute.xlu0 %2369
    %2371 = vrot.lane.b32.xlu0 %v2330, 88
    %v2372 = vpop.permute.xlu0 %2371
    %2373 = vrot.lane.b32.xlu0 %v2331, 88
    %v2374 = vpop.permute.xlu0 %2373
    %2375 = vrot.lane.b32.xlu0 %v2332, 88
    %v2376 = vpop.permute.xlu0 %2375
    %2377 = vrot.lane.b32.xlu0 %v2333, 88
    %v2378 = vpop.permute.xlu0 %2377
    %2379 = vrot.lane.b32.xlu0 %v2334, 88
    %v2380 = vpop.permute.xlu0 %2379
    %2381 = vrot.lane.b32.xlu0 %v2335, 88
    %v2382 = vpop.permute.xlu0 %2381
    %2383 = vrot.lane.b32.xlu0 %v2336, 88
    %v2384 = vpop.permute.xlu0 %2383
    %vm2401 = vcmask 753344
    %2402 = vst.msk [vmem:[#allocation3] sm:$0xff] %vm2401, %v2354
    %2403 = vst.msk [vmem:[#allocation3 + $0x8] sm:$0xff] %vm2401, %v2356
    %2404 = vst.msk [vmem:[#allocation3 + $0x10] sm:$0xff] %vm2401, %v2358
    %2405 = vst.msk [vmem:[#allocation3 + $0x18] sm:$0xff] %vm2401, %v2360
    %2406 = vst.msk [vmem:[#allocation3 + $0x20] sm:$0xff] %vm2401, %v2362
    %2407 = vst.msk [vmem:[#allocation3 + $0x28] sm:$0xff] %vm2401, %v2364
    %2408 = vst.msk [vmem:[#allocation3 + $0x30] sm:$0xff] %vm2401, %v2366
    %2409 = vst.msk [vmem:[#allocation3 + $0x38] sm:$0xff] %vm2401, %v2368
    %2410 = vst.msk [vmem:[#allocation3 + $0x40] sm:$0xff] %vm2401, %v2370
    %2411 = vst.msk [vmem:[#allocation3 + $0x48] sm:$0xff] %vm2401, %v2372
    %2412 = vst.msk [vmem:[#allocation3 + $0x50] sm:$0xff] %vm2401, %v2374
    %2413 = vst.msk [vmem:[#allocation3 + $0x58] sm:$0xff] %vm2401, %v2376
    %2414 = vst.msk [vmem:[#allocation3 + $0x60] sm:$0xff] %vm2401, %v2378
    %2415 = vst.msk [vmem:[#allocation3 + $0x68] sm:$0xff] %vm2401, %v2380
    %2416 = vst.msk [vmem:[#allocation3 + $0x70] sm:$0xff] %vm2401, %v2382
    %2417 = vst.msk [vmem:[#allocation3 + $0x78] sm:$0xff] %vm2401, %v2384
    %v2418 = vld [vmem:[%s2126 + $0x3] sm:$0xff]
    %v2419 = vld [vmem:[%s2126 + $0x13] sm:$0xff]
    %v2420 = vld [vmem:[%s2126 + $0x23] sm:$0xff]
    %v2421 = vld [vmem:[%s2126 + $0x33] sm:$0xff]
    %v2422 = vld [vmem:[%s2126 + $0x43] sm:$0xff]
    %v2423 = vld [vmem:[%s2126 + $0x53] sm:$0xff]
    %v2424 = vld [vmem:[%s2126 + $0x63] sm:$0xff]
    %v2425 = vld [vmem:[%s2126 + $0x73] sm:$0xff]
    %v2426 = vld [vmem:[%s2126 + $0xc3] sm:$0xff]
    %v2427 = vld [vmem:[%s2126 + $0xd3] sm:$0xff]
    %v2428 = vld [vmem:[%s2126 + $0xe3] sm:$0xff]
    %v2429 = vld [vmem:[%s2126 + $0xf3] sm:$0xff]
    %v2430 = vld [vmem:[%s2126 + $0x103] sm:$0xff]
    %v2431 = vld [vmem:[%s2126 + $0x113] sm:$0xff]
    %v2432 = vld [vmem:[%s2126 + $0x123] sm:$0xff]
    %v2433 = vld [vmem:[%s2126 + $0x133] sm:$0xff]
    %2450 = vrot.lane.b32.xlu0 %v2418, 92
    %v2451 = vpop.permute.xlu0 %2450
    %2452 = vrot.lane.b32.xlu0 %v2419, 92
    %v2453 = vpop.permute.xlu0 %2452
    %2454 = vrot.lane.b32.xlu0 %v2420, 92
    %v2455 = vpop.permute.xlu0 %2454
    %2456 = vrot.lane.b32.xlu0 %v2421, 92
    %v2457 = vpop.permute.xlu0 %2456
    %2458 = vrot.lane.b32.xlu0 %v2422, 92
    %v2459 = vpop.permute.xlu0 %2458
    %2460 = vrot.lane.b32.xlu0 %v2423, 92
    %v2461 = vpop.permute.xlu0 %2460
    %2462 = vrot.lane.b32.xlu0 %v2424, 92
    %v2463 = vpop.permute.xlu0 %2462
    %2464 = vrot.lane.b32.xlu0 %v2425, 92
    %v2465 = vpop.permute.xlu0 %2464
    %2466 = vrot.lane.b32.xlu0 %v2426, 92
    %v2467 = vpop.permute.xlu0 %2466
    %2468 = vrot.lane.b32.xlu0 %v2427, 92
    %v2469 = vpop.permute.xlu0 %2468
    %2470 = vrot.lane.b32.xlu0 %v2428, 92
    %v2471 = vpop.permute.xlu0 %2470
    %2472 = vrot.lane.b32.xlu0 %v2429, 92
    %v2473 = vpop.permute.xlu0 %2472
    %2474 = vrot.lane.b32.xlu0 %v2430, 92
    %v2475 = vpop.permute.xlu0 %2474
    %2476 = vrot.lane.b32.xlu0 %v2431, 92
    %v2477 = vpop.permute.xlu0 %2476
    %2478 = vrot.lane.b32.xlu0 %v2432, 92
    %v2479 = vpop.permute.xlu0 %2478
    %2480 = vrot.lane.b32.xlu0 %v2433, 92
    %v2481 = vpop.permute.xlu0 %2480
    %vm2498 = vcmask 786144
    %2499 = vst.msk [vmem:[#allocation3] sm:$0xff] %vm2498, %v2451
    %2500 = vst.msk [vmem:[#allocation3 + $0x8] sm:$0xff] %vm2498, %v2453
    %2501 = vst.msk [vmem:[#allocation3 + $0x10] sm:$0xff] %vm2498, %v2455
    %2502 = vst.msk [vmem:[#allocation3 + $0x18] sm:$0xff] %vm2498, %v2457
    %2503 = vst.msk [vmem:[#allocation3 + $0x20] sm:$0xff] %vm2498, %v2459
    %2504 = vst.msk [vmem:[#allocation3 + $0x28] sm:$0xff] %vm2498, %v2461
    %2505 = vst.msk [vmem:[#allocation3 + $0x30] sm:$0xff] %vm2498, %v2463
    %2506 = vst.msk [vmem:[#allocation3 + $0x38] sm:$0xff] %vm2498, %v2465
    %2507 = vst.msk [vmem:[#allocation3 + $0x40] sm:$0xff] %vm2498, %v2467
    %2508 = vst.msk [vmem:[#allocation3 + $0x48] sm:$0xff] %vm2498, %v2469
    %2509 = vst.msk [vmem:[#allocation3 + $0x50] sm:$0xff] %vm2498, %v2471
    %2510 = vst.msk [vmem:[#allocation3 + $0x58] sm:$0xff] %vm2498, %v2473
    %2511 = vst.msk [vmem:[#allocation3 + $0x60] sm:$0xff] %vm2498, %v2475
    %2512 = vst.msk [vmem:[#allocation3 + $0x68] sm:$0xff] %vm2498, %v2477
    %2513 = vst.msk [vmem:[#allocation3 + $0x70] sm:$0xff] %vm2498, %v2479
    %2514 = vst.msk [vmem:[#allocation3 + $0x78] sm:$0xff] %vm2498, %v2481
    %v2515 = vld [vmem:[%s2126 + $0x4] sm:$0xff]
    %v2516 = vld [vmem:[%s2126 + $0x14] sm:$0xff]
    %v2517 = vld [vmem:[%s2126 + $0x24] sm:$0xff]
    %v2518 = vld [vmem:[%s2126 + $0x34] sm:$0xff]
    %v2519 = vld [vmem:[%s2126 + $0x44] sm:$0xff]
    %v2520 = vld [vmem:[%s2126 + $0x54] sm:$0xff]
    %v2521 = vld [vmem:[%s2126 + $0x64] sm:$0xff]
    %v2522 = vld [vmem:[%s2126 + $0x74] sm:$0xff]
    %v2523 = vld [vmem:[%s2126 + $0xc4] sm:$0xff]
    %v2524 = vld [vmem:[%s2126 + $0xd4] sm:$0xff]
    %v2525 = vld [vmem:[%s2126 + $0xe4] sm:$0xff]
    %v2526 = vld [vmem:[%s2126 + $0xf4] sm:$0xff]
    %v2527 = vld [vmem:[%s2126 + $0x104] sm:$0xff]
    %v2528 = vld [vmem:[%s2126 + $0x114] sm:$0xff]
    %v2529 = vld [vmem:[%s2126 + $0x124] sm:$0xff]
    %v2530 = vld [vmem:[%s2126 + $0x134] sm:$0xff]
    %2547 = vrot.lane.b32.xlu0 %v2515, 96
    %v2548 = vpop.permute.xlu0 %2547
    %2549 = vrot.lane.b32.xlu0 %v2516, 96
    %v2550 = vpop.permute.xlu0 %2549
    %2551 = vrot.lane.b32.xlu0 %v2517, 96
    %v2552 = vpop.permute.xlu0 %2551
    %2553 = vrot.lane.b32.xlu0 %v2518, 96
    %v2554 = vpop.permute.xlu0 %2553
    %2555 = vrot.lane.b32.xlu0 %v2519, 96
    %v2556 = vpop.permute.xlu0 %2555
    %2557 = vrot.lane.b32.xlu0 %v2520, 96
    %v2558 = vpop.permute.xlu0 %2557
    %2559 = vrot.lane.b32.xlu0 %v2521, 96
    %v2560 = vpop.permute.xlu0 %2559
    %2561 = vrot.lane.b32.xlu0 %v2522, 96
    %v2562 = vpop.permute.xlu0 %2561
    %2563 = vrot.lane.b32.xlu0 %v2523, 96
    %v2564 = vpop.permute.xlu0 %2563
    %2565 = vrot.lane.b32.xlu0 %v2524, 96
    %v2566 = vpop.permute.xlu0 %2565
    %2567 = vrot.lane.b32.xlu0 %v2525, 96
    %v2568 = vpop.permute.xlu0 %2567
    %2569 = vrot.lane.b32.xlu0 %v2526, 96
    %v2570 = vpop.permute.xlu0 %2569
    %2571 = vrot.lane.b32.xlu0 %v2527, 96
    %v2572 = vpop.permute.xlu0 %2571
    %2573 = vrot.lane.b32.xlu0 %v2528, 96
    %v2574 = vpop.permute.xlu0 %2573
    %2575 = vrot.lane.b32.xlu0 %v2529, 96
    %v2576 = vpop.permute.xlu0 %2575
    %2577 = vrot.lane.b32.xlu0 %v2530, 96
    %v2578 = vpop.permute.xlu0 %2577
    %vm2595 = vcmask 818944
    %2596 = vst.msk [vmem:[#allocation3] sm:$0xff] %vm2595, %v2548
    %2597 = vst.msk [vmem:[#allocation3 + $0x8] sm:$0xff] %vm2595, %v2550
    %2598 = vst.msk [vmem:[#allocation3 + $0x10] sm:$0xff] %vm2595, %v2552
    %2599 = vst.msk [vmem:[#allocation3 + $0x18] sm:$0xff] %vm2595, %v2554
    %2600 = vst.msk [vmem:[#allocation3 + $0x20] sm:$0xff] %vm2595, %v2556
    %2601 = vst.msk [vmem:[#allocation3 + $0x28] sm:$0xff] %vm2595, %v2558
    %2602 = vst.msk [vmem:[#allocation3 + $0x30] sm:$0xff] %vm2595, %v2560
    %2603 = vst.msk [vmem:[#allocation3 + $0x38] sm:$0xff] %vm2595, %v2562
    %2604 = vst.msk [vmem:[#allocation3 + $0x40] sm:$0xff] %vm2595, %v2564
    %2605 = vst.msk [vmem:[#allocation3 + $0x48] sm:$0xff] %vm2595, %v2566
    %2606 = vst.msk [vmem:[#allocation3 + $0x50] sm:$0xff] %vm2595, %v2568
    %2607 = vst.msk [vmem:[#allocation3 + $0x58] sm:$0xff] %vm2595, %v2570
    %2608 = vst.msk [vmem:[#allocation3 + $0x60] sm:$0xff] %vm2595, %v2572
    %2609 = vst.msk [vmem:[#allocation3 + $0x68] sm:$0xff] %vm2595, %v2574
    %2610 = vst.msk [vmem:[#allocation3 + $0x70] sm:$0xff] %vm2595, %v2576
    %2611 = vst.msk [vmem:[#allocation3 + $0x78] sm:$0xff] %vm2595, %v2578
    %v2612 = vld [vmem:[#allocation3] sm:$0xff]
    %v2613 = vld [vmem:[#allocation3 + $0x8] sm:$0xff]
    %v2614 = vld [vmem:[#allocation3 + $0x10] sm:$0xff]
    %v2615 = vld [vmem:[#allocation3 + $0x18] sm:$0xff]
    %v2616 = vld [vmem:[#allocation3 + $0x20] sm:$0xff]
    %v2617 = vld [vmem:[#allocation3 + $0x28] sm:$0xff]
    %v2618 = vld [vmem:[#allocation3 + $0x30] sm:$0xff]
    %v2619 = vld [vmem:[#allocation3 + $0x38] sm:$0xff]
    %v2620 = vld [vmem:[#allocation3 + $0x40] sm:$0xff]
    %v2621 = vld [vmem:[#allocation3 + $0x48] sm:$0xff]
    %v2622 = vld [vmem:[#allocation3 + $0x50] sm:$0xff]
    %v2623 = vld [vmem:[#allocation3 + $0x58] sm:$0xff]
    %v2624 = vld [vmem:[#allocation3 + $0x60] sm:$0xff]
    %v2625 = vld [vmem:[#allocation3 + $0x68] sm:$0xff]
    %v2626 = vld [vmem:[#allocation3 + $0x70] sm:$0xff]
    %v2627 = vld [vmem:[#allocation3 + $0x78] sm:$0xff]
    %v2628 = vld [vmem:[%s1] sm:$0xff]
    %v2629 = vld [vmem:[%s1 + $0x8] sm:$0xff]
    %v2630 = vld [vmem:[%s1 + $0x10] sm:$0xff]
    %v2631 = vld [vmem:[%s1 + $0x18] sm:$0xff]
    %v2632 = vld [vmem:[%s1 + $0x20] sm:$0xff]
    %v2633 = vld [vmem:[%s1 + $0x28] sm:$0xff]
    %v2634 = vld [vmem:[%s1 + $0x30] sm:$0xff]
    %v2635 = vld [vmem:[%s1 + $0x38] sm:$0xff]
    %v2636 = vld [vmem:[%s1 + $0x40] sm:$0xff]
    %v2637 = vld [vmem:[%s1 + $0x48] sm:$0xff]
    %v2638 = vld [vmem:[%s1 + $0x50] sm:$0xff]
    %v2639 = vld [vmem:[%s1 + $0x58] sm:$0xff]
    %v2640 = vld [vmem:[%s1 + $0x60] sm:$0xf]
    %vm2641 = vcmask 818176
    %v2643 = vsel %vm2641, %v2612, 0
    %v2646 = vsel %vm2641, %v2613, 0
    %v2649 = vsel %vm2641, %v2614, 0
    %v2652 = vsel %vm2641, %v2615, 0
    %v2655 = vsel %vm2641, %v2616, 0
    %v2658 = vsel %vm2641, %v2617, 0
    %v2661 = vsel %vm2641, %v2618, 0
    %v2664 = vsel %vm2641, %v2619, 0
    %v2667 = vsel %vm2641, %v2620, 0
    %v2670 = vsel %vm2641, %v2621, 0
    %v2673 = vsel %vm2641, %v2622, 0
    %v2676 = vsel %vm2641, %v2623, 0
    %v2679 = vsel %vm2641, %v2624, 0
    %v2682 = vsel %vm2641, %v2625, 0
    %v2685 = vsel %vm2641, %v2626, 0
    %v2688 = vsel %vm2641, %v2627, 0
    %vm2690 = vcmask 1043456
    %v2692 = vsel %vm2690, %v2640, 0
    %2694 = vmatprep.subr.mxu0 0.0
    %2695 = vmatpush1.msra.mxu0 %v2628
    %2696 = vmatprep.subr.mxu0 0.0
    %2697 = vmatpush1.msra.mxu0 %v2629
    %2698 = vmatprep.subr.mxu0 0.0
    %2699 = vmatpush1.msra.mxu0 %v2630
    %2700 = vmatprep.subr.mxu0 0.0
    %2701 = vmatpush1.msra.mxu0 %v2631
    %2702 = vmatprep.subr.mxu0 0.0
    %2703 = vmatpush1.msra.mxu0 %v2632
    %2704 = vmatprep.subr.mxu0 0.0
    %2705 = vmatpush1.msra.mxu0 %v2633
    %2706 = vmatprep.subr.mxu0 0.0
    %2707 = vmatpush1.msra.mxu0 %v2634
    %2708 = vmatprep.subr.mxu0 0.0
    %2709 = vmatpush1.msra.mxu0 %v2635
    %2710 = vmatprep.subr.mxu0 0.0
    %2711 = vmatpush1.msra.mxu0 %v2636
    %2712 = vmatprep.subr.mxu0 0.0
    %2713 = vmatpush1.msra.mxu0 %v2637
    %2714 = vmatprep.subr.mxu0 0.0
    %2715 = vmatpush1.msra.mxu0 %v2638
    %2716 = vmatprep.subr.mxu0 0.0
    %2717 = vmatpush1.msra.mxu0 %v2639
    %2718 = vmatprep.subr.mxu0 0.0
    %2719 = vmatpush1.msra.mxu0 %v2692
    %2720 = vmatprep.subr.mxu0 0.0
    %2721 = vmatpush1.msra.mxu0 0.0
    %2722 = vmatprep.subr.mxu0 0.0
    %2723 = vmatpush1.msra.mxu0 0.0
    %2724 = vmatprep.subr.mxu0 0.0
    %2725 = vmatpush1.msra.mxu0 0.0
    %2726 = vmatprep.subr.mxu0 0.0
    %2727 = vmatpush1.msra.mxu0 0.0
    %2728 = vmatprep.subr.mxu0 0.0
    %2729 = vmatpush1.msra.mxu0 0.0
    %2730 = vmatprep.subr.mxu0 0.0
    %2731 = vmatpush1.msra.mxu0 0.0
    %2732 = vmatprep.subr.mxu0 0.0
    %2733 = vmatpush1.msra.mxu0 0.0
    %2734 = vmatprep.subr.mxu0 0.0
    %2735 = vmatpush1.msra.mxu0 0.0
    %2736 = vmatprep.subr.mxu0 0.0
    %2737 = vmatpush1.msra.mxu0 0.0
    %2738 = vmatprep.subr.mxu0 0.0
    %2739 = vmatpush1.msra.mxu0 0.0
    %2740 = vmatprep.subr.mxu0 0.0
    %2741 = vmatpush1.msra.mxu0 0.0
    %2742 = vmatprep.subr.mxu0 0.0
    %2743 = vmatpush1.msra.mxu0 0.0
    %2744 = vmatprep.subr.mxu0 0.0
    %2745 = vmatpush1.msra.mxu0 0.0
    %2746 = vmatprep.subr.mxu0 0.0
    %2747 = vmatpush1.msra.mxu0 0.0
    %2748 = vmatprep.subr.mxu0 0.0
    %2749 = vmatpush1.msra.mxu0 0.0
    %2750 = vmatprep.subr.mxu0 0.0
    %2751 = vmatpush1.msra.mxu0 0.0
    %2752 = vmatprep.subr.mxu0 0.0
    %2753 = vmatpush1.msra.mxu0 0.0
    %2754 = vmatprep.subr.mxu0 0.0
    %2755 = vmatpush1.msra.mxu0 0.0
    %2756 = vmatprep.subr.mxu0 0.0
    %2757 = vmatpush1.msra.mxu0 0.0
    %2758 = vmatprep.mubr.f32.mxu0 0.0
    %2759 = vmatmul.mubr.f32.gmra.mrb[0].mxu0 %v2643
    %v2760 = vpop.f32.mrb[0].mxu0
    %v2761 = vadd.f32 0.0, %v2760
    %v2762 = vpop.f32.mrb[0].mxu0
    %2763 = vmatprep.mubr.f32.mxu0 0.0
    %2764 = vmatmul.mubr.f32.gmra.mrb[0].mxu0 %v2646
    %v2765 = vpop.f32.mrb[0].mxu0
    %v2766 = vadd.f32 0.0, %v2765
    %v2767 = vpop.f32.mrb[0].mxu0
    %2768 = vmatprep.mubr.f32.mxu0 0.0
    %2769 = vmatmul.mubr.f32.gmra.mrb[0].mxu0 %v2649
    %v2770 = vpop.f32.mrb[0].mxu0
    %v2771 = vadd.f32 0.0, %v2770
    %v2772 = vpop.f32.mrb[0].mxu0
    %2773 = vmatprep.mubr.f32.mxu0 0.0
    %2774 = vmatmul.mubr.f32.gmra.mrb[0].mxu0 %v2652
    %v2775 = vpop.f32.mrb[0].mxu0
    %v2776 = vadd.f32 0.0, %v2775
    %v2777 = vpop.f32.mrb[0].mxu0
    %2778 = vmatprep.mubr.f32.mxu0 0.0
    %2779 = vmatmul.mubr.f32.gmra.mrb[0].mxu0 %v2655
    %v2780 = vpop.f32.mrb[0].mxu0
    %v2781 = vadd.f32 0.0, %v2780
    %v2782 = vpop.f32.mrb[0].mxu0
    %2783 = vmatprep.mubr.f32.mxu0 0.0
    %2784 = vmatmul.mubr.f32.gmra.mrb[0].mxu0 %v2658
    %v2785 = vpop.f32.mrb[0].mxu0
    %v2786 = vadd.f32 0.0, %v2785
    %v2787 = vpop.f32.mrb[0].mxu0
    %2788 = vmatprep.mubr.f32.mxu0 0.0
    %2789 = vmatmul.mubr.f32.gmra.mrb[0].mxu0 %v2661
    %v2790 = vpop.f32.mrb[0].mxu0
    %v2791 = vadd.f32 0.0, %v2790
    %v2792 = vpop.f32.mrb[0].mxu0
    %2793 = vmatprep.mubr.f32.mxu0 0.0
    %2794 = vmatmul.mubr.f32.gmra.mrb[0].mxu0 %v2664
    %v2795 = vpop.f32.mrb[0].mxu0
    %v2796 = vadd.f32 0.0, %v2795
    %v2797 = vpop.f32.mrb[0].mxu0
    %2798 = vmatprep.mubr.f32.mxu0 0.0
    %2799 = vmatmul.mubr.f32.gmra.mrb[0].mxu0 %v2667
    %v2800 = vpop.f32.mrb[0].mxu0
    %v2801 = vadd.f32 0.0, %v2800
    %v2802 = vpop.f32.mrb[0].mxu0
    %2803 = vmatprep.mubr.f32.mxu0 0.0
    %2804 = vmatmul.mubr.f32.gmra.mrb[0].mxu0 %v2670
    %v2805 = vpop.f32.mrb[0].mxu0
    %v2806 = vadd.f32 0.0, %v2805
    %v2807 = vpop.f32.mrb[0].mxu0
    %2808 = vmatprep.mubr.f32.mxu0 0.0
    %2809 = vmatmul.mubr.f32.gmra.mrb[0].mxu0 %v2673
    %v2810 = vpop.f32.mrb[0].mxu0
    %v2811 = vadd.f32 0.0, %v2810
    %v2812 = vpop.f32.mrb[0].mxu0
    %2813 = vmatprep.mubr.f32.mxu0 0.0
    %2814 = vmatmul.mubr.f32.gmra.mrb[0].mxu0 %v2676
    %v2815 = vpop.f32.mrb[0].mxu0
    %v2816 = vadd.f32 0.0, %v2815
    %v2817 = vpop.f32.mrb[0].mxu0
    %2818 = vmatprep.mubr.f32.mxu0 0.0
    %2819 = vmatmul.mubr.f32.gmra.mrb[0].mxu0 %v2679
    %v2820 = vpop.f32.mrb[0].mxu0
    %v2821 = vadd.f32 0.0, %v2820
    %v2822 = vpop.f32.mrb[0].mxu0
    %2823 = vmatprep.mubr.f32.mxu0 0.0
    %2824 = vmatmul.mubr.f32.gmra.mrb[0].mxu0 %v2682
    %v2825 = vpop.f32.mrb[0].mxu0
    %v2826 = vadd.f32 0.0, %v2825
    %v2827 = vpop.f32.mrb[0].mxu0
    %2828 = vmatprep.mubr.f32.mxu0 0.0
    %2829 = vmatmul.mubr.f32.gmra.mrb[0].mxu0 %v2685
    %v2830 = vpop.f32.mrb[0].mxu0
    %v2831 = vadd.f32 0.0, %v2830
    %v2832 = vpop.f32.mrb[0].mxu0
    %2833 = vmatprep.mubr.f32.mxu0 0.0
    %2834 = vmatmul.mubr.f32.gmra.mrb[0].mxu0 %v2688
    %v2835 = vpop.f32.mrb[0].mxu0
    %v2836 = vadd.f32 0.0, %v2835
    %v2837 = vpop.f32.mrb[0].mxu0
    %2838 = vdwg.mxu0
    %2839 = vxpose.xlu0.b32.start [1/16] %v2761, 128
    %2840 = vxpose.xlu0.b32.cont [2/16] %v2766, 128
    %2841 = vxpose.xlu0.b32.cont [3/16] %v2771, 128
    %2842 = vxpose.xlu0.b32.cont [4/16] %v2776, 128
    %2843 = vxpose.xlu0.b32.cont [5/16] %v2781, 128
    %2844 = vxpose.xlu0.b32.cont [6/16] %v2786, 128
    %2845 = vxpose.xlu0.b32.cont [7/16] %v2791, 128
    %2846 = vxpose.xlu0.b32.cont [8/16] %v2796, 128
    %2847 = vxpose.xlu0.b32.cont [9/16] %v2801, 128
    %2848 = vxpose.xlu0.b32.cont [10/16] %v2806, 128
    %2849 = vxpose.xlu0.b32.cont [11/16] %v2811, 128
    %2850 = vxpose.xlu0.b32.cont [12/16] %v2816, 128
    %2851 = vxpose.xlu0.b32.cont [13/16] %v2821, 128
    %2852 = vxpose.xlu0.b32.cont [14/16] %v2826, 128
    %2853 = vxpose.xlu0.b32.cont [15/16] %v2831, 128
    %2854 = vxpose.xlu0.b32.end [16/16] %v2836, 128
    %v2855 = vpop.trf.xlu0
    %v2856 = vpop.trf.xlu0
    %v2857 = vpop.trf.xlu0
    %v2858 = vpop.trf.xlu0
    %v2859 = vpop.trf.xlu0
    %v2860 = vpop.trf.xlu0
    %v2861 = vpop.trf.xlu0
    %v2862 = vpop.trf.xlu0
    %v2863 = vpop.trf.xlu0
    %v2864 = vpop.trf.xlu0
    %v2865 = vpop.trf.xlu0
    %v2866 = vpop.trf.xlu0
    %v2867 = vpop.trf.xlu0
    %v2868 = vpop.trf.xlu0
    %v2869 = vpop.trf.xlu0
    %v2870 = vpop.trf.xlu0
    %v2871 = vld [vmem:[%s2] sm:$0xff]
    %2873 = vset.pattern.permute.xlu0 0
    %2874 = vperm.xlu0 %2873, %v2871
    %v2875 = vpop.permute.xlu0 %2874
    %v2877 = vadd.f32 %v2855, %v2875
    %2878 = vadd.xlane.f32.xlu0 %v2877
    %v2879 = vpop.xlane.xlu0 %2878
    %v2880 = vmul.f32 %v2879, 0.0078125
    %v2881 = vmul.f32 %v2877, %v2877
    %2882 = vadd.xlane.f32.xlu0 %v2881
    %v2883 = vpop.xlane.xlu0 %2882
    %v2884 = vmul.f32 %v2883, 0.0078125
    %v2885 = vmul.f32 %v2880, %v2880
    %v2886 = vsub.f32 %v2884, %v2885
    %v2887 = vld [vmem:[%s3] sm:$0xff]
    %v2888 = vadd.f32 %v2886, 1e-05
    %v2889 = vrsqrt.pop %v2888
    %v2890 = vmul.f32 %v2887, %v2889
    %v2891 = vld [vmem:[%s4] sm:$0xff]
    %v2892 = vmul.f32 %v2880, %v2890
    %v2893 = vsub.f32 %v2891, %v2892
    %2895 = vset.pattern.permute.xlu0 0
    %2896 = vperm.xlu0 %2895, %v2890
    %v2897 = vpop.permute.xlu0 %2896
    %v2899 = vmul.f32 %v2877, %v2897
    %2901 = vset.pattern.permute.xlu0 0
    %2902 = vperm.xlu0 %2901, %v2893
    %v2903 = vpop.permute.xlu0 %2902
    %v2905 = vadd.f32 %v2899, %v2903
    %v2906 = vmax.f32 %v2905, 0.0
    %2907 = vst [vmem:[#allocation7] sm:$0xff] %v2906
    // Predicated region
    $region26: #{tpu_custom_call.1} parent=1 // pred_check
      _
    $region27: #{tpu_custom_call.1} parent=1 // pred_check_branch
      %2909 = sbr.rel (0) target = $region29
    $region28: #{tpu_custom_call.1} parent=1 // pred_region
      %s2911 = ssub.s32 128, 128
      %2912 = vsyncadd [#allocation6], %s2911
      %s2914 = sshll.u32 [#allocation7], 4
      %s2915 = int_to_ptr.vmem [resolvable:$true] %s2914
      %2917 = dma.vmem_to_hbm [thread:$0]  %s2915, 128, %s5, [#allocation6]
    $region29: #{tpu_custom_call.1} parent=1 // pred_fallthru
      _
    // Predicated region
    $region30: #{tpu_custom_call.1} parent=1 // pred_check
      _
    $region31: #{tpu_custom_call.1} parent=1 // pred_check_branch
      %2919 = sbr.rel (0) target = $region33
    $region32: #{tpu_custom_call.1} parent=1 // pred_region
      %2920 = dma.done [#allocation6], 128
    $region33: #{tpu_custom_call.1} parent=1 // pred_fallthru
      _
    %2921 = vsyncpa [#allocation5], 1
    %2922 = vsyncpa [#allocation6], 1

</llo_original>
